<compile_context>
chip_gen: v5e
topology: v5e:2x2
jax: 0.10.0
libtpu: 0.0.40
codegen_flags: <defaults>
</compile_context>

<pallas_src>
import functools
import math

import jax
import jax.numpy as jnp
from jax.experimental import pallas as pl
from jax.experimental.pallas import tpu as pltpu

CFG = dict(
    vocab_size=128,          # BERT vocab (small synthetic stand-in)
    hidden_size=32,          # config['hidden_size'] (scaled down from 768)
    num_heads=4,
    num_layers=2,
    intermediate_size=128,   # 4 * hidden
    max_position=64,
    type_vocab_size=2,
    NSP_num_labels=2,        # config['NSP_num_labels']
    layer_norm_eps=1e-12,    # config['layer_norm_eps']
)


# ----------------------------- fused Pallas kernel -------------------------

def _bert_fused_kernel(
    x_ref, mask_ref, ln_g_ref, ln_b_ref,
    w1_ref, b1_ref, w2_ref, b2_ref,
    hw_ref, hb_ref, lab_ref,
    loss_ref, ctx_ref,
    *, B, S, H, nH, dh, L, I, V, nC, eps,
):
    f32 = jnp.float32

    def ln(x, idx):
        g = ln_g_ref[idx:idx + 1, :]
        b = ln_b_ref[idx:idx + 1, :]
        mu = jnp.mean(x, axis=-1, keepdims=True)
        d = x - mu
        var = jnp.mean(d * d, axis=-1, keepdims=True)
        return d * jax.lax.rsqrt(var + eps) * g + b

    def gelu(x):  # exact erf-gelu == torch.nn.functional.gelu (default)
        return 0.5 * x * (1.0 + jax.lax.erf(x * (1.0 / math.sqrt(2.0))))

    x = ln(x_ref[...].astype(f32), 0)                 # (B*S, H)
    mask3 = mask_ref[...][:, None, :]                 # (B, 1, S) additive mask
    scale = 1.0 / math.sqrt(dh)

    # ------------------------------ encoder -------------------------------
    for l in range(L):
        # packed per-layer weights: [ qkv(3H) | attn_out(H) | intermediate(I) ]
        qkv_w = w1_ref[l, :, 0:3 * H]
        ao_w = w1_ref[l, :, 3 * H:4 * H]
        i_w = w1_ref[l, :, 4 * H:4 * H + I]
        qkv_b = b1_ref[l, :, 0:3 * H]
        ao_b = b1_ref[l, :, 3 * H:4 * H]
        i_b = b1_ref[l, :, 4 * H:4 * H + I]
        o_w = w2_ref[l]
        o_b = b2_ref[l]

        qkv = jnp.dot(x, qkv_w, preferred_element_type=f32) + qkv_b   # (B*S, 3H)
        qkv3 = qkv.reshape(B, S, 3 * H)

        # Per-head attention, batched over B (single-batch-dim dot_general).
        for h in range(nH):
            c0 = h * dh
            q_h = qkv3[:, :, c0:c0 + dh]                              # (B, S, dh)
            k_h = qkv3[:, :, H + c0:H + c0 + dh]
            v_h = qkv3[:, :, 2 * H + c0:2 * H + c0 + dh]
            s = jnp.einsum('bqd,bkd->bqk', q_h, k_h,
                           preferred_element_type=f32) * scale + mask3
            s = s - jnp.max(s, axis=-1, keepdims=True)
            p = jnp.exp(s)
            p = p * pl.reciprocal(jnp.sum(p, axis=-1, keepdims=True), approx=True)
            ctx_h = jnp.einsum('bqk,bkd->bqd', p, v_h,
                               preferred_element_type=f32)            # (B, S, dh)
            ctx_ref[:, c0:c0 + dh] = ctx_h.reshape(B * S, dh)

        # one full-K output projection (head-sum accumulates inside the MXU)
        attn_out = jnp.dot(ctx_ref[...], ao_w, preferred_element_type=f32) + ao_b
        x = ln(attn_out + x, 1 + 2 * l)                               # residual in LN
        inter = gelu(jnp.dot(x, i_w, preferred_element_type=f32) + i_b)
        out = jnp.dot(inter, o_w, preferred_element_type=f32) + o_b
        x = ln(out + x, 2 + 2 * l)

    # packed head weights: [ mlm(V) | pooler(H) | decoder(H) | nsp(nC) ]
    mlm_w = hw_ref[:, 0:V]
    pool_w = hw_ref[:, V:V + H]
    dec_w = hw_ref[:, V + H:V + 2 * H]
    nsp_w = hw_ref[:, V + 2 * H:V + 2 * H + nC]
    mlm_b = hb_ref[:, 0:V]
    pool_b = hb_ref[:, V:V + H]
    dec_b = hb_ref[:, V + H:V + 2 * H]
    nsp_b = hb_ref[:, V + 2 * H:V + 2 * H + nC]

    # -------------------- pooler + NSP head + NSP loss ---------------------
    cls = jnp.concatenate([x[b * S:b * S + 1, :] for b in range(B)], axis=0)  # (B, H)
    pooled = jnp.tanh(jnp.dot(cls, pool_w, preferred_element_type=f32) + pool_b)
    nsp_logit = jnp.dot(pooled, nsp_w, preferred_element_type=f32) + nsp_b    # (B, nC)
    nsp_lab = lab_ref[:, V:V + 1]                                             # (B, 1)
    m = jnp.max(nsp_logit, axis=-1, keepdims=True)
    lse = jnp.log(jnp.sum(jnp.exp(nsp_logit - m), axis=-1, keepdims=True)) + m
    onehot = (jax.lax.broadcasted_iota(jnp.int32, (B, nC), 1) == nsp_lab).astype(f32)
    picked = jnp.sum(nsp_logit * onehot, axis=-1, keepdims=True)
    nsp_11 = jnp.sum(lse - picked, axis=0, keepdims=True) * (1.0 / B)         # (1, 1)

    # --------------------------- MLM head + loss ---------------------------
    hm = gelu(jnp.dot(x, dec_w, preferred_element_type=f32) + dec_b)
    hm = ln(hm, 2 * L + 1)
    pred = jnp.dot(hm, mlm_w, preferred_element_type=f32) + mlm_b             # (B*S, V)

    # Faithful to the PyTorch call CrossEntropyLoss(pred_MLM (B,S,V), MLMlabel
    # (B,V)): class dimension is S, labels in [0, S).  Computed batched: one
    # (B,S,V) block, reductions over axis=1 (sublanes), V stays lane-dense.
    pm3 = pred.reshape(B, S, V)
    mlm_lab = lab_ref[:, 0:V]                                                 # (B, V)
    mx = jnp.max(pm3, axis=1, keepdims=True)                                  # (B, 1, V)
    lse_m = jnp.log(jnp.sum(jnp.exp(pm3 - mx), axis=1, keepdims=True)) + mx
    oh = (jax.lax.broadcasted_iota(jnp.int32, (B, S, V), 1)
          == mlm_lab[:, None, :]).astype(f32)                                 # (B, S, V)
    picked_m = jnp.sum(pm3 * oh, axis=1, keepdims=True)                       # (B, 1, V)
    diff = lse_m - picked_m
    mlm_11 = jnp.sum(jnp.sum(diff, axis=2, keepdims=True), axis=0,
                     keepdims=True).reshape(1, 1) * (1.0 / (B * V))           # (1, 1)

    # single merged (1, 2) output: [nsp_loss, mlm_loss]
    loss_ref[...] = jnp.concatenate([nsp_11, mlm_11], axis=1)


# ------------------------------ model glue ---------------------------------

def init_params(key, cfg):
    H = cfg["hidden_size"]
    V = cfg["vocab_size"]
    I = cfg["intermediate_size"]
    L = cfg["num_layers"]
    nC = cfg["NSP_num_labels"]

    def nxt():
        nonlocal key
        key, sub = jax.random.split(key)
        return sub

    def w(shape):
        return 0.02 * jax.random.normal(nxt(), shape, jnp.float32)

    zeros = lambda *s: jnp.zeros(s, jnp.float32)
    ones = lambda *s: jnp.ones(s, jnp.float32)

    qkv_w = w((L, H, 3 * H))
    ao_w = w((L, H, H))
    i_w = w((L, H, I))
    o_w = w((L, I, H))
    pool_w = w((H, H))
    nsp_w = w((H, nC))
    dec_w = w((H, H))
    mlm_w = w((H, V))

    return dict(
        word_emb=w((V, H)),
        pos_emb=w((cfg["max_position"], H)),
        tok_emb=w((cfg["type_vocab_size"], H)),
        # LN rows: 0=embeddings, 1+2l / 2+2l = layer-l attn / output, 2L+1=MLM head
        ln_g=ones(2 * L + 2, H), ln_b=zeros(2 * L + 2, H),
        # per-layer "from-H" weights packed along out axis: [qkv | attn_out | inter]
        w1=jnp.concatenate([qkv_w, ao_w, i_w], axis=2),      # (L, H, 4H+I)
        b1=zeros(L, 1, 4 * H + I),
        w2=o_w, b2=zeros(L, 1, H),                           # MLP output proj
        # head weights packed: [ mlm(V) | pooler(H) | decoder(H) | nsp(nC) ]
        hw=jnp.concatenate([mlm_w, pool_w, dec_w, nsp_w], axis=1),
        hb=zeros(1, V + 2 * H + nC),
    )


def forward(params, input_ids, token_type_ids, attention_mask, nsp_label, mlm_label):
    cfg = CFG
    B, S = input_ids.shape
    H = cfg["hidden_size"]
    nH = cfg["num_heads"]
    dh = H // nH
    L = cfg["num_layers"]
    I = cfg["intermediate_size"]
    V = cfg["vocab_size"]
    nC = cfg["NSP_num_labels"]
    eps = cfg["layer_norm_eps"]

    # ---- BertModel embeddings: gathers stay in XLA glue; everything after
    #      runs inside one fused Pallas kernel. ----
    we = params["word_emb"][input_ids]
    pe = params["pos_emb"][jnp.arange(S)][None, :, :]
    te = params["tok_emb"][token_type_ids]
    x_emb = (we + pe + te).reshape(B * S, H)
    mask_add = (1.0 - attention_mask.astype(jnp.float32)) * -10000.0   # (B, S)

    # labels packed into one int32 operand: [ mlm (B,V) | nsp (B,1) ]
    # TODO(synk): could live in SMEM; kept in VMEM since it feeds vectorized
    #             iota-compare one-hots.
    labels = jnp.concatenate(
        [mlm_label.astype(jnp.int32), nsp_label.astype(jnp.int32).reshape(B, 1)],
        axis=1)

    kernel = functools.partial(_bert_fused_kernel, B=B, S=S, H=H, nH=nH, dh=dh,
                               L=L, I=I, V=V, nC=nC, eps=eps)
    vmem = pltpu.MemorySpace.VMEM
    losses = pl.pallas_call(
        kernel,
        out_shape=jax.ShapeDtypeStruct((1, 2), jnp.float32),
        in_specs=[pl.BlockSpec(memory_space=vmem)] * 11,
        out_specs=pl.BlockSpec(memory_space=vmem),
        scratch_shapes=[pltpu.VMEM((B * S, H), jnp.float32)],   # attention ctx
    )(x_emb, mask_add, params["ln_g"], params["ln_b"],
      params["w1"], params["b1"], params["w2"], params["b2"],
      params["hw"], params["hb"], labels)

    loss_nsp = losses[0, 0]
    loss_mlm = losses[0, 1]
    return loss_nsp + loss_mlm, loss_nsp, loss_mlm


if __name__ == "__main__":
    key = jax.random.PRNGKey(0)
    k_par, k_ids, k_tok, k_nsp, k_mlm = jax.random.split(key, 5)
    params = init_params(k_par, CFG)

    B, S = 2, 8
    V = CFG["vocab_size"]
    input_ids = jax.random.randint(k_ids, (B, S), 0, V, dtype=jnp.int32)
    token_type_ids = jax.random.randint(k_tok, (B, S), 0, CFG["type_vocab_size"],
                                        dtype=jnp.int32)
    attention_mask = jnp.ones((B, S), dtype=jnp.int32)
    nsp_label = jax.random.randint(k_nsp, (B,), 0, CFG["NSP_num_labels"], dtype=jnp.int32)
    # Faithful to the original module's CE call: labels shaped (B, V), values in [0, S).
    mlm_label = jax.random.randint(k_mlm, (B, V), 0, S, dtype=jnp.int32)

    fwd = jax.jit(forward)
    total, loss_nsp, loss_mlm = fwd(params, input_ids, token_type_ids,
                                    attention_mask, nsp_label, mlm_label)
    jax.block_until_ready((total, loss_nsp, loss_mlm))
    assert total.shape == () and bool(jnp.isfinite(total))
    print("KERNEL_OK")
</pallas_src>

<mosaic_0001>
module attributes {stable_mosaic.version = 11 : i64} {
  func.func @_bert_fused_kernel(%arg0: memref<16x32xf32, #tpu.memory_space<vmem>>, %arg1: memref<2x8xf32, #tpu.memory_space<vmem>>, %arg2: memref<6x32xf32, #tpu.memory_space<vmem>>, %arg3: memref<6x32xf32, #tpu.memory_space<vmem>>, %arg4: memref<2x32x256xf32, #tpu.memory_space<vmem>>, %arg5: memref<2x1x256xf32, #tpu.memory_space<vmem>>, %arg6: memref<2x128x32xf32, #tpu.memory_space<vmem>>, %arg7: memref<2x1x32xf32, #tpu.memory_space<vmem>>, %arg8: memref<32x194xf32, #tpu.memory_space<vmem>>, %arg9: memref<1x194xf32, #tpu.memory_space<vmem>>, %arg10: memref<2x129xi32, #tpu.memory_space<vmem>>, %arg11: memref<1x2xf32, #tpu.memory_space<vmem>>, %arg12: memref<16x32xf32, #tpu.memory_space<vmem>>) attributes {dimension_semantics = [], scalar_prefetch = 0 : i64, scratch_operands = 1 : i64, tpu.core_type = #tpu.core_type<tc>} {
    %c0 = arith.constant 0 : index
    %c0_0 = arith.constant 0 : index
    %0 = vector.load %arg0[%c0, %c0_0] : memref<16x32xf32, #tpu.memory_space<vmem>>, vector<16x32xf32>
    %c0_1 = arith.constant 0 : index
    %c0_2 = arith.constant 0 : index
    %1 = vector.load %arg2[%c0_1, %c0_2] : memref<6x32xf32, #tpu.memory_space<vmem>>, vector<1x32xf32>
    %c0_3 = arith.constant 0 : index
    %c0_4 = arith.constant 0 : index
    %2 = vector.load %arg3[%c0_3, %c0_4] : memref<6x32xf32, #tpu.memory_space<vmem>>, vector<1x32xf32>
    %cst = arith.constant dense<0.000000e+00> : vector<16xf32>
    %3 = vector.multi_reduction <add>, %0, %cst [1] : vector<16x32xf32> to vector<16xf32>
    %4 = vector.shape_cast %3 : vector<16xf32> to vector<16x1xf32>
    %cst_5 = arith.constant 3.200000e+01 : f32
    %5 = vector.broadcast %cst_5 : f32 to vector<16x1xf32>
    %6 = arith.divf %4, %5 : vector<16x1xf32>
    %7 = vector.broadcast %6 : vector<16x1xf32> to vector<16x32xf32>
    %8 = arith.subf %0, %7 : vector<16x32xf32>
    %9 = arith.mulf %8, %8 : vector<16x32xf32>
    %cst_6 = arith.constant dense<0.000000e+00> : vector<16xf32>
    %10 = vector.multi_reduction <add>, %9, %cst_6 [1] : vector<16x32xf32> to vector<16xf32>
    %11 = vector.shape_cast %10 : vector<16xf32> to vector<16x1xf32>
    %cst_7 = arith.constant 3.200000e+01 : f32
    %12 = vector.broadcast %cst_7 : f32 to vector<16x1xf32>
    %13 = arith.divf %11, %12 : vector<16x1xf32>
    %cst_8 = arith.constant 9.99999996E-13 : f32
    %14 = vector.broadcast %cst_8 : f32 to vector<16x1xf32>
    %15 = arith.addf %13, %14 : vector<16x1xf32>
    %16 = math.rsqrt %15 : vector<16x1xf32>
    %17 = vector.broadcast %16 : vector<16x1xf32> to vector<16x32xf32>
    %18 = arith.mulf %8, %17 : vector<16x32xf32>
    %19 = vector.broadcast %1 : vector<1x32xf32> to vector<16x32xf32>
    %20 = arith.mulf %18, %19 : vector<16x32xf32>
    %21 = vector.broadcast %2 : vector<1x32xf32> to vector<16x32xf32>
    %22 = arith.addf %20, %21 : vector<16x32xf32>
    %c0_9 = arith.constant 0 : index
    %c0_10 = arith.constant 0 : index
    %23 = vector.load %arg1[%c0_9, %c0_10] : memref<2x8xf32, #tpu.memory_space<vmem>>, vector<2x8xf32>
    %24 = vector.shape_cast %23 : vector<2x8xf32> to vector<2x1x8xf32>
    %c0_11 = arith.constant 0 : index
    %c0_12 = arith.constant 0 : index
    %c0_13 = arith.constant 0 : index
    %25 = vector.load %arg4[%c0_11, %c0_12, %c0_13] : memref<2x32x256xf32, #tpu.memory_space<vmem>>, vector<1x32x96xf32>
    %26 = vector.shape_cast %25 : vector<1x32x96xf32> to vector<32x96xf32>
    %c0_14 = arith.constant 0 : index
    %c0_15 = arith.constant 0 : index
    %c96 = arith.constant 96 : index
    %27 = vector.load %arg4[%c0_14, %c0_15, %c96] : memref<2x32x256xf32, #tpu.memory_space<vmem>>, vector<1x32x32xf32>
    %28 = vector.shape_cast %27 : vector<1x32x32xf32> to vector<32x32xf32>
    %c0_16 = arith.constant 0 : index
    %c0_17 = arith.constant 0 : index
    %c128 = arith.constant 128 : index
    %29 = vector.load %arg4[%c0_16, %c0_17, %c128] : memref<2x32x256xf32, #tpu.memory_space<vmem>>, vector<1x32x128xf32>
    %30 = vector.shape_cast %29 : vector<1x32x128xf32> to vector<32x128xf32>
    %c0_18 = arith.constant 0 : index
    %c0_19 = arith.constant 0 : index
    %c0_20 = arith.constant 0 : index
    %31 = vector.load %arg5[%c0_18, %c0_19, %c0_20] : memref<2x1x256xf32, #tpu.memory_space<vmem>>, vector<1x1x96xf32>
    %32 = vector.shape_cast %31 : vector<1x1x96xf32> to vector<1x96xf32>
    %c0_21 = arith.constant 0 : index
    %c0_22 = arith.constant 0 : index
    %c96_23 = arith.constant 96 : index
    %33 = vector.load %arg5[%c0_21, %c0_22, %c96_23] : memref<2x1x256xf32, #tpu.memory_space<vmem>>, vector<1x1x32xf32>
    %34 = vector.shape_cast %33 : vector<1x1x32xf32> to vector<1x32xf32>
    %c0_24 = arith.constant 0 : index
    %c0_25 = arith.constant 0 : index
    %c128_26 = arith.constant 128 : index
    %35 = vector.load %arg5[%c0_24, %c0_25, %c128_26] : memref<2x1x256xf32, #tpu.memory_space<vmem>>, vector<1x1x128xf32>
    %36 = vector.shape_cast %35 : vector<1x1x128xf32> to vector<1x128xf32>
    %c0_27 = arith.constant 0 : index
    %c0_28 = arith.constant 0 : index
    %c0_29 = arith.constant 0 : index
    %37 = vector.load %arg6[%c0_27, %c0_28, %c0_29] : memref<2x128x32xf32, #tpu.memory_space<vmem>>, vector<1x128x32xf32>
    %38 = vector.shape_cast %37 : vector<1x128x32xf32> to vector<128x32xf32>
    %c0_30 = arith.constant 0 : index
    %c0_31 = arith.constant 0 : index
    %c0_32 = arith.constant 0 : index
    %39 = vector.load %arg7[%c0_30, %c0_31, %c0_32] : memref<2x1x32xf32, #tpu.memory_space<vmem>>, vector<1x1x32xf32>
    %40 = vector.shape_cast %39 : vector<1x1x32xf32> to vector<1x32xf32>
    %cst_33 = arith.constant dense<0.000000e+00> : vector<16x96xf32>
    %41 = tpu.matmul %22, %26, %cst_33 {dimension_numbers = #tpu.dot_dimension_numbers<[1], [0], [0], [1], [0, 0, 1, 1], [], []>} : vector<16x32xf32>, vector<32x96xf32>, vector<16x96xf32> -> vector<16x96xf32>
    %42 = vector.broadcast %32 : vector<1x96xf32> to vector<16x96xf32>
    %43 = arith.addf %41, %42 : vector<16x96xf32>
    %44 = vector.shape_cast %43 : vector<16x96xf32> to vector<2x8x96xf32>
    %45 = vector.extract_strided_slice %44 {offsets = [0, 0, 0], sizes = [2, 8, 8], strides = [1, 1, 1]} : vector<2x8x96xf32> to vector<2x8x8xf32>
    %46 = vector.extract_strided_slice %44 {offsets = [0, 0, 32], sizes = [2, 8, 8], strides = [1, 1, 1]} : vector<2x8x96xf32> to vector<2x8x8xf32>
    %47 = vector.extract_strided_slice %44 {offsets = [0, 0, 64], sizes = [2, 8, 8], strides = [1, 1, 1]} : vector<2x8x96xf32> to vector<2x8x8xf32>
    "tpu.trace_start"() <{level = 10 : i32, message = "bqd,bkd->bqk"}> : () -> ()
    %cst_34 = arith.constant dense<0.000000e+00> : vector<2x8x8xf32>
    %48 = tpu.matmul %45, %46, %cst_34 {dimension_numbers = #tpu.dot_dimension_numbers<[2], [2], [1], [1], [0, 0, 0, 1, 1, 1], [0], [0]>} : vector<2x8x8xf32>, vector<2x8x8xf32>, vector<2x8x8xf32> -> vector<2x8x8xf32>
    "tpu.trace_stop"() : () -> ()
    %cst_35 = arith.constant 0.353553385 : f32
    %49 = vector.broadcast %cst_35 : f32 to vector<2x8x8xf32>
    %50 = arith.mulf %48, %49 : vector<2x8x8xf32>
    %51 = vector.broadcast %24 : vector<2x1x8xf32> to vector<2x8x8xf32>
    %52 = arith.addf %50, %51 : vector<2x8x8xf32>
    %cst_36 = arith.constant dense<0xFF800000> : vector<2x8xf32>
    %53 = vector.multi_reduction <maximumf>, %52, %cst_36 [2] : vector<2x8x8xf32> to vector<2x8xf32>
    %54 = vector.shape_cast %53 : vector<2x8xf32> to vector<2x8x1xf32>
    %55 = vector.broadcast %54 : vector<2x8x1xf32> to vector<2x8x8xf32>
    %56 = arith.subf %52, %55 : vector<2x8x8xf32>
    %57 = math.exp %56 : vector<2x8x8xf32>
    %cst_37 = arith.constant dense<0.000000e+00> : vector<2x8xf32>
    %58 = vector.multi_reduction <add>, %57, %cst_37 [2] : vector<2x8x8xf32> to vector<2x8xf32>
    %59 = vector.shape_cast %58 : vector<2x8xf32> to vector<2x8x1xf32>
    %60 = tpu.reciprocal %59 {approx = true} : vector<2x8x1xf32> -> vector<2x8x1xf32>
    %61 = vector.broadcast %60 : vector<2x8x1xf32> to vector<2x8x8xf32>
    %62 = arith.mulf %57, %61 : vector<2x8x8xf32>
    "tpu.trace_start"() <{level = 10 : i32, message = "bqk,bkd->bqd"}> : () -> ()
    %cst_38 = arith.constant dense<0.000000e+00> : vector<2x8x8xf32>
    %63 = tpu.matmul %62, %47, %cst_38 {dimension_numbers = #tpu.dot_dimension_numbers<[2], [1], [1], [2], [0, 0, 0, 1, 1, 2], [0], [0]>} : vector<2x8x8xf32>, vector<2x8x8xf32>, vector<2x8x8xf32> -> vector<2x8x8xf32>
    "tpu.trace_stop"() : () -> ()
    %64 = vector.shape_cast %63 : vector<2x8x8xf32> to vector<16x8xf32>
    %c0_39 = arith.constant 0 : index
    %c0_40 = arith.constant 0 : index
    %65 = vector.load %arg12[%c0_39, %c0_40] : memref<16x32xf32, #tpu.memory_space<vmem>>, vector<16x8xf32>
    tpu.vector_store %arg12[%c0_39, %c0_40], %64 {strides = array<i32>} : memref<16x32xf32, #tpu.memory_space<vmem>>, vector<16x8xf32>,
    %66 = vector.extract_strided_slice %44 {offsets = [0, 0, 8], sizes = [2, 8, 8], strides = [1, 1, 1]} : vector<2x8x96xf32> to vector<2x8x8xf32>
    %67 = vector.extract_strided_slice %44 {offsets = [0, 0, 40], sizes = [2, 8, 8], strides = [1, 1, 1]} : vector<2x8x96xf32> to vector<2x8x8xf32>
    %68 = vector.extract_strided_slice %44 {offsets = [0, 0, 72], sizes = [2, 8, 8], strides = [1, 1, 1]} : vector<2x8x96xf32> to vector<2x8x8xf32>
    "tpu.trace_start"() <{level = 10 : i32, message = "bqd,bkd->bqk"}> : () -> ()
    %cst_41 = arith.constant dense<0.000000e+00> : vector<2x8x8xf32>
    %69 = tpu.matmul %66, %67, %cst_41 {dimension_numbers = #tpu.dot_dimension_numbers<[2], [2], [1], [1], [0, 0, 0, 1, 1, 1], [0], [0]>} : vector<2x8x8xf32>, vector<2x8x8xf32>, vector<2x8x8xf32> -> vector<2x8x8xf32>
    "tpu.trace_stop"() : () -> ()
    %cst_42 = arith.constant 0.353553385 : f32
    %70 = vector.broadcast %cst_42 : f32 to vector<2x8x8xf32>
    %71 = arith.mulf %69, %70 : vector<2x8x8xf32>
    %72 = vector.broadcast %24 : vector<2x1x8xf32> to vector<2x8x8xf32>
    %73 = arith.addf %71, %72 : vector<2x8x8xf32>
    %cst_43 = arith.constant dense<0xFF800000> : vector<2x8xf32>
    %74 = vector.multi_reduction <maximumf>, %73, %cst_43 [2] : vector<2x8x8xf32> to vector<2x8xf32>
    %75 = vector.shape_cast %74 : vector<2x8xf32> to vector<2x8x1xf32>
    %76 = vector.broadcast %75 : vector<2x8x1xf32> to vector<2x8x8xf32>
    %77 = arith.subf %73, %76 : vector<2x8x8xf32>
    %78 = math.exp %77 : vector<2x8x8xf32>
    %cst_44 = arith.constant dense<0.000000e+00> : vector<2x8xf32>
    %79 = vector.multi_reduction <add>, %78, %cst_44 [2] : vector<2x8x8xf32> to vector<2x8xf32>
    %80 = vector.shape_cast %79 : vector<2x8xf32> to vector<2x8x1xf32>
    %81 = tpu.reciprocal %80 {approx = true} : vector<2x8x1xf32> -> vector<2x8x1xf32>
    %82 = vector.broadcast %81 : vector<2x8x1xf32> to vector<2x8x8xf32>
    %83 = arith.mulf %78, %82 : vector<2x8x8xf32>
    "tpu.trace_start"() <{level = 10 : i32, message = "bqk,bkd->bqd"}> : () -> ()
    %cst_45 = arith.constant dense<0.000000e+00> : vector<2x8x8xf32>
    %84 = tpu.matmul %83, %68, %cst_45 {dimension_numbers = #tpu.dot_dimension_numbers<[2], [1], [1], [2], [0, 0, 0, 1, 1, 2], [0], [0]>} : vector<2x8x8xf32>, vector<2x8x8xf32>, vector<2x8x8xf32> -> vector<2x8x8xf32>
    "tpu.trace_stop"() : () -> ()
    %85 = vector.shape_cast %84 : vector<2x8x8xf32> to vector<16x8xf32>
    %c0_46 = arith.constant 0 : index
    %c8 = arith.constant 8 : index
    %86 = vector.load %arg12[%c0_46, %c8] : memref<16x32xf32, #tpu.memory_space<vmem>>, vector<16x8xf32>
    tpu.vector_store %arg12[%c0_46, %c8], %85 {strides = array<i32>} : memref<16x32xf32, #tpu.memory_space<vmem>>, vector<16x8xf32>,
    %87 = vector.extract_strided_slice %44 {offsets = [0, 0, 16], sizes = [2, 8, 8], strides = [1, 1, 1]} : vector<2x8x96xf32> to vector<2x8x8xf32>
    %88 = vector.extract_strided_slice %44 {offsets = [0, 0, 48], sizes = [2, 8, 8], strides = [1, 1, 1]} : vector<2x8x96xf32> to vector<2x8x8xf32>
    %89 = vector.extract_strided_slice %44 {offsets = [0, 0, 80], sizes = [2, 8, 8], strides = [1, 1, 1]} : vector<2x8x96xf32> to vector<2x8x8xf32>
    "tpu.trace_start"() <{level = 10 : i32, message = "bqd,bkd->bqk"}> : () -> ()
    %cst_47 = arith.constant dense<0.000000e+00> : vector<2x8x8xf32>
    %90 = tpu.matmul %87, %88, %cst_47 {dimension_numbers = #tpu.dot_dimension_numbers<[2], [2], [1], [1], [0, 0, 0, 1, 1, 1], [0], [0]>} : vector<2x8x8xf32>, vector<2x8x8xf32>, vector<2x8x8xf32> -> vector<2x8x8xf32>
    "tpu.trace_stop"() : () -> ()
    %cst_48 = arith.constant 0.353553385 : f32
    %91 = vector.broadcast %cst_48 : f32 to vector<2x8x8xf32>
    %92 = arith.mulf %90, %91 : vector<2x8x8xf32>
    %93 = vector.broadcast %24 : vector<2x1x8xf32> to vector<2x8x8xf32>
    %94 = arith.addf %92, %93 : vector<2x8x8xf32>
    %cst_49 = arith.constant dense<0xFF800000> : vector<2x8xf32>
    %95 = vector.multi_reduction <maximumf>, %94, %cst_49 [2] : vector<2x8x8xf32> to vector<2x8xf32>
    %96 = vector.shape_cast %95 : vector<2x8xf32> to vector<2x8x1xf32>
    %97 = vector.broadcast %96 : vector<2x8x1xf32> to vector<2x8x8xf32>
    %98 = arith.subf %94, %97 : vector<2x8x8xf32>
    %99 = math.exp %98 : vector<2x8x8xf32>
    %cst_50 = arith.constant dense<0.000000e+00> : vector<2x8xf32>
    %100 = vector.multi_reduction <add>, %99, %cst_50 [2] : vector<2x8x8xf32> to vector<2x8xf32>
    %101 = vector.shape_cast %100 : vector<2x8xf32> to vector<2x8x1xf32>
    %102 = tpu.reciprocal %101 {approx = true} : vector<2x8x1xf32> -> vector<2x8x1xf32>
    %103 = vector.broadcast %102 : vector<2x8x1xf32> to vector<2x8x8xf32>
    %104 = arith.mulf %99, %103 : vector<2x8x8xf32>
    "tpu.trace_start"() <{level = 10 : i32, message = "bqk,bkd->bqd"}> : () -> ()
    %cst_51 = arith.constant dense<0.000000e+00> : vector<2x8x8xf32>
    %105 = tpu.matmul %104, %89, %cst_51 {dimension_numbers = #tpu.dot_dimension_numbers<[2], [1], [1], [2], [0, 0, 0, 1, 1, 2], [0], [0]>} : vector<2x8x8xf32>, vector<2x8x8xf32>, vector<2x8x8xf32> -> vector<2x8x8xf32>
    "tpu.trace_stop"() : () -> ()
    %106 = vector.shape_cast %105 : vector<2x8x8xf32> to vector<16x8xf32>
    %c0_52 = arith.constant 0 : index
    %c16 = arith.constant 16 : index
    %107 = vector.load %arg12[%c0_52, %c16] : memref<16x32xf32, #tpu.memory_space<vmem>>, vector<16x8xf32>
    tpu.vector_store %arg12[%c0_52, %c16], %106 {strides = array<i32>} : memref<16x32xf32, #tpu.memory_space<vmem>>, vector<16x8xf32>,
    %108 = vector.extract_strided_slice %44 {offsets = [0, 0, 24], sizes = [2, 8, 8], strides = [1, 1, 1]} : vector<2x8x96xf32> to vector<2x8x8xf32>
    %109 = vector.extract_strided_slice %44 {offsets = [0, 0, 56], sizes = [2, 8, 8], strides = [1, 1, 1]} : vector<2x8x96xf32> to vector<2x8x8xf32>
    %110 = vector.extract_strided_slice %44 {offsets = [0, 0, 88], sizes = [2, 8, 8], strides = [1, 1, 1]} : vector<2x8x96xf32> to vector<2x8x8xf32>
    "tpu.trace_start"() <{level = 10 : i32, message = "bqd,bkd->bqk"}> : () -> ()
    %cst_53 = arith.constant dense<0.000000e+00> : vector<2x8x8xf32>
    %111 = tpu.matmul %108, %109, %cst_53 {dimension_numbers = #tpu.dot_dimension_numbers<[2], [2], [1], [1], [0, 0, 0, 1, 1, 1], [0], [0]>} : vector<2x8x8xf32>, vector<2x8x8xf32>, vector<2x8x8xf32> -> vector<2x8x8xf32>
    "tpu.trace_stop"() : () -> ()
    %cst_54 = arith.constant 0.353553385 : f32
    %112 = vector.broadcast %cst_54 : f32 to vector<2x8x8xf32>
    %113 = arith.mulf %111, %112 : vector<2x8x8xf32>
    %114 = vector.broadcast %24 : vector<2x1x8xf32> to vector<2x8x8xf32>
    %115 = arith.addf %113, %114 : vector<2x8x8xf32>
    %cst_55 = arith.constant dense<0xFF800000> : vector<2x8xf32>
    %116 = vector.multi_reduction <maximumf>, %115, %cst_55 [2] : vector<2x8x8xf32> to vector<2x8xf32>
    %117 = vector.shape_cast %116 : vector<2x8xf32> to vector<2x8x1xf32>
    %118 = vector.broadcast %117 : vector<2x8x1xf32> to vector<2x8x8xf32>
    %119 = arith.subf %115, %118 : vector<2x8x8xf32>
    %120 = math.exp %119 : vector<2x8x8xf32>
    %cst_56 = arith.constant dense<0.000000e+00> : vector<2x8xf32>
    %121 = vector.multi_reduction <add>, %120, %cst_56 [2] : vector<2x8x8xf32> to vector<2x8xf32>
    %122 = vector.shape_cast %121 : vector<2x8xf32> to vector<2x8x1xf32>
    %123 = tpu.reciprocal %122 {approx = true} : vector<2x8x1xf32> -> vector<2x8x1xf32>
    %124 = vector.broadcast %123 : vector<2x8x1xf32> to vector<2x8x8xf32>
    %125 = arith.mulf %120, %124 : vector<2x8x8xf32>
    "tpu.trace_start"() <{level = 10 : i32, message = "bqk,bkd->bqd"}> : () -> ()
    %cst_57 = arith.constant dense<0.000000e+00> : vector<2x8x8xf32>
    %126 = tpu.matmul %125, %110, %cst_57 {dimension_numbers = #tpu.dot_dimension_numbers<[2], [1], [1], [2], [0, 0, 0, 1, 1, 2], [0], [0]>} : vector<2x8x8xf32>, vector<2x8x8xf32>, vector<2x8x8xf32> -> vector<2x8x8xf32>
    "tpu.trace_stop"() : () -> ()
    %127 = vector.shape_cast %126 : vector<2x8x8xf32> to vector<16x8xf32>
    %c0_58 = arith.constant 0 : index
    %c24 = arith.constant 24 : index
    %128 = vector.load %arg12[%c0_58, %c24] : memref<16x32xf32, #tpu.memory_space<vmem>>, vector<16x8xf32>
    tpu.vector_store %arg12[%c0_58, %c24], %127 {strides = array<i32>} : memref<16x32xf32, #tpu.memory_space<vmem>>, vector<16x8xf32>,
    %c0_59 = arith.constant 0 : index
    %c0_60 = arith.constant 0 : index
    %129 = vector.load %arg12[%c0_59, %c0_60] : memref<16x32xf32, #tpu.memory_space<vmem>>, vector<16x32xf32>
    %cst_61 = arith.constant dense<0.000000e+00> : vector<16x32xf32>
    %130 = tpu.matmul %129, %28, %cst_61 {dimension_numbers = #tpu.dot_dimension_numbers<[1], [0], [0], [1], [0, 0, 1, 1], [], []>} : vector<16x32xf32>, vector<32x32xf32>, vector<16x32xf32> -> vector<16x32xf32>
    %131 = vector.broadcast %34 : vector<1x32xf32> to vector<16x32xf32>
    %132 = arith.addf %130, %131 : vector<16x32xf32>
    %133 = arith.addf %132, %22 : vector<16x32xf32>
    %c1 = arith.constant 1 : index
    %c0_62 = arith.constant 0 : index
    %134 = vector.load %arg2[%c1, %c0_62] : memref<6x32xf32, #tpu.memory_space<vmem>>, vector<1x32xf32>
    %c1_63 = arith.constant 1 : index
    %c0_64 = arith.constant 0 : index
    %135 = vector.load %arg3[%c1_63, %c0_64] : memref<6x32xf32, #tpu.memory_space<vmem>>, vector<1x32xf32>
    %cst_65 = arith.constant dense<0.000000e+00> : vector<16xf32>
    %136 = vector.multi_reduction <add>, %133, %cst_65 [1] : vector<16x32xf32> to vector<16xf32>
    %137 = vector.shape_cast %136 : vector<16xf32> to vector<16x1xf32>
    %cst_66 = arith.constant 3.200000e+01 : f32
    %138 = vector.broadcast %cst_66 : f32 to vector<16x1xf32>
    %139 = arith.divf %137, %138 : vector<16x1xf32>
    %140 = vector.broadcast %139 : vector<16x1xf32> to vector<16x32xf32>
    %141 = arith.subf %133, %140 : vector<16x32xf32>
    %142 = arith.mulf %141, %141 : vector<16x32xf32>
    %cst_67 = arith.constant dense<0.000000e+00> : vector<16xf32>
    %143 = vector.multi_reduction <add>, %142, %cst_67 [1] : vector<16x32xf32> to vector<16xf32>
    %144 = vector.shape_cast %143 : vector<16xf32> to vector<16x1xf32>
    %cst_68 = arith.constant 3.200000e+01 : f32
    %145 = vector.broadcast %cst_68 : f32 to vector<16x1xf32>
    %146 = arith.divf %144, %145 : vector<16x1xf32>
    %cst_69 = arith.constant 9.99999996E-13 : f32
    %147 = vector.broadcast %cst_69 : f32 to vector<16x1xf32>
    %148 = arith.addf %146, %147 : vector<16x1xf32>
    %149 = math.rsqrt %148 : vector<16x1xf32>
    %150 = vector.broadcast %149 : vector<16x1xf32> to vector<16x32xf32>
    %151 = arith.mulf %141, %150 : vector<16x32xf32>
    %152 = vector.broadcast %134 : vector<1x32xf32> to vector<16x32xf32>
    %153 = arith.mulf %151, %152 : vector<16x32xf32>
    %154 = vector.broadcast %135 : vector<1x32xf32> to vector<16x32xf32>
    %155 = arith.addf %153, %154 : vector<16x32xf32>
    %cst_70 = arith.constant dense<0.000000e+00> : vector<16x128xf32>
    %156 = tpu.matmul %155, %30, %cst_70 {dimension_numbers = #tpu.dot_dimension_numbers<[1], [0], [0], [1], [0, 0, 1, 1], [], []>} : vector<16x32xf32>, vector<32x128xf32>, vector<16x128xf32> -> vector<16x128xf32>
    %157 = vector.broadcast %36 : vector<1x128xf32> to vector<16x128xf32>
    %158 = arith.addf %156, %157 : vector<16x128xf32>
    %cst_71 = arith.constant 5.000000e-01 : f32
    %159 = vector.broadcast %cst_71 : f32 to vector<16x128xf32>
    %160 = arith.mulf %159, %158 : vector<16x128xf32>
    %cst_72 = arith.constant 0.707106769 : f32
    %161 = vector.broadcast %cst_72 : f32 to vector<16x128xf32>
    %162 = arith.mulf %158, %161 : vector<16x128xf32>
    %163 = math.erf %162 : vector<16x128xf32>
    %cst_73 = arith.constant 1.000000e+00 : f32
    %164 = vector.broadcast %cst_73 : f32 to vector<16x128xf32>
    %165 = arith.addf %164, %163 : vector<16x128xf32>
    %166 = arith.mulf %160, %165 : vector<16x128xf32>
    %cst_74 = arith.constant dense<0.000000e+00> : vector<16x32xf32>
    %167 = tpu.matmul %166, %38, %cst_74 {dimension_numbers = #tpu.dot_dimension_numbers<[1], [0], [0], [1], [0, 0, 1, 1], [], []>} : vector<16x128xf32>, vector<128x32xf32>, vector<16x32xf32> -> vector<16x32xf32>
    %168 = vector.broadcast %40 : vector<1x32xf32> to vector<16x32xf32>
    %169 = arith.addf %167, %168 : vector<16x32xf32>
    %170 = arith.addf %169, %155 : vector<16x32xf32>
    %c2 = arith.constant 2 : index
    %c0_75 = arith.constant 0 : index
    %171 = vector.load %arg2[%c2, %c0_75] : memref<6x32xf32, #tpu.memory_space<vmem>>, vector<1x32xf32>
    %c2_76 = arith.constant 2 : index
    %c0_77 = arith.constant 0 : index
    %172 = vector.load %arg3[%c2_76, %c0_77] : memref<6x32xf32, #tpu.memory_space<vmem>>, vector<1x32xf32>
    %cst_78 = arith.constant dense<0.000000e+00> : vector<16xf32>
    %173 = vector.multi_reduction <add>, %170, %cst_78 [1] : vector<16x32xf32> to vector<16xf32>
    %174 = vector.shape_cast %173 : vector<16xf32> to vector<16x1xf32>
    %cst_79 = arith.constant 3.200000e+01 : f32
    %175 = vector.broadcast %cst_79 : f32 to vector<16x1xf32>
    %176 = arith.divf %174, %175 : vector<16x1xf32>
    %177 = vector.broadcast %176 : vector<16x1xf32> to vector<16x32xf32>
    %178 = arith.subf %170, %177 : vector<16x32xf32>
    %179 = arith.mulf %178, %178 : vector<16x32xf32>
    %cst_80 = arith.constant dense<0.000000e+00> : vector<16xf32>
    %180 = vector.multi_reduction <add>, %179, %cst_80 [1] : vector<16x32xf32> to vector<16xf32>
    %181 = vector.shape_cast %180 : vector<16xf32> to vector<16x1xf32>
    %cst_81 = arith.constant 3.200000e+01 : f32
    %182 = vector.broadcast %cst_81 : f32 to vector<16x1xf32>
    %183 = arith.divf %181, %182 : vector<16x1xf32>
    %cst_82 = arith.constant 9.99999996E-13 : f32
    %184 = vector.broadcast %cst_82 : f32 to vector<16x1xf32>
    %185 = arith.addf %183, %184 : vector<16x1xf32>
    %186 = math.rsqrt %185 : vector<16x1xf32>
    %187 = vector.broadcast %186 : vector<16x1xf32> to vector<16x32xf32>
    %188 = arith.mulf %178, %187 : vector<16x32xf32>
    %189 = vector.broadcast %171 : vector<1x32xf32> to vector<16x32xf32>
    %190 = arith.mulf %188, %189 : vector<16x32xf32>
    %191 = vector.broadcast %172 : vector<1x32xf32> to vector<16x32xf32>
    %192 = arith.addf %190, %191 : vector<16x32xf32>
    %c1_83 = arith.constant 1 : index
    %c0_84 = arith.constant 0 : index
    %c0_85 = arith.constant 0 : index
    %193 = vector.load %arg4[%c1_83, %c0_84, %c0_85] : memref<2x32x256xf32, #tpu.memory_space<vmem>>, vector<1x32x96xf32>
    %194 = vector.shape_cast %193 : vector<1x32x96xf32> to vector<32x96xf32>
    %c1_86 = arith.constant 1 : index
    %c0_87 = arith.constant 0 : index
    %c96_88 = arith.constant 96 : index
    %195 = vector.load %arg4[%c1_86, %c0_87, %c96_88] : memref<2x32x256xf32, #tpu.memory_space<vmem>>, vector<1x32x32xf32>
    %196 = vector.shape_cast %195 : vector<1x32x32xf32> to vector<32x32xf32>
    %c1_89 = arith.constant 1 : index
    %c0_90 = arith.constant 0 : index
    %c128_91 = arith.constant 128 : index
    %197 = vector.load %arg4[%c1_89, %c0_90, %c128_91] : memref<2x32x256xf32, #tpu.memory_space<vmem>>, vector<1x32x128xf32>
    %198 = vector.shape_cast %197 : vector<1x32x128xf32> to vector<32x128xf32>
    %c1_92 = arith.constant 1 : index
    %c0_93 = arith.constant 0 : index
    %c0_94 = arith.constant 0 : index
    %199 = vector.load %arg5[%c1_92, %c0_93, %c0_94] : memref<2x1x256xf32, #tpu.memory_space<vmem>>, vector<1x1x96xf32>
    %200 = vector.shape_cast %199 : vector<1x1x96xf32> to vector<1x96xf32>
    %c1_95 = arith.constant 1 : index
    %c0_96 = arith.constant 0 : index
    %c96_97 = arith.constant 96 : index
    %201 = vector.load %arg5[%c1_95, %c0_96, %c96_97] : memref<2x1x256xf32, #tpu.memory_space<vmem>>, vector<1x1x32xf32>
    %202 = vector.shape_cast %201 : vector<1x1x32xf32> to vector<1x32xf32>
    %c1_98 = arith.constant 1 : index
    %c0_99 = arith.constant 0 : index
    %c128_100 = arith.constant 128 : index
    %203 = vector.load %arg5[%c1_98, %c0_99, %c128_100] : memref<2x1x256xf32, #tpu.memory_space<vmem>>, vector<1x1x128xf32>
    %204 = vector.shape_cast %203 : vector<1x1x128xf32> to vector<1x128xf32>
    %c1_101 = arith.constant 1 : index
    %c0_102 = arith.constant 0 : index
    %c0_103 = arith.constant 0 : index
    %205 = vector.load %arg6[%c1_101, %c0_102, %c0_103] : memref<2x128x32xf32, #tpu.memory_space<vmem>>, vector<1x128x32xf32>
    %206 = vector.shape_cast %205 : vector<1x128x32xf32> to vector<128x32xf32>
    %c1_104 = arith.constant 1 : index
    %c0_105 = arith.constant 0 : index
    %c0_106 = arith.constant 0 : index
    %207 = vector.load %arg7[%c1_104, %c0_105, %c0_106] : memref<2x1x32xf32, #tpu.memory_space<vmem>>, vector<1x1x32xf32>
    %208 = vector.shape_cast %207 : vector<1x1x32xf32> to vector<1x32xf32>
    %cst_107 = arith.constant dense<0.000000e+00> : vector<16x96xf32>
    %209 = tpu.matmul %192, %194, %cst_107 {dimension_numbers = #tpu.dot_dimension_numbers<[1], [0], [0], [1], [0, 0, 1, 1], [], []>} : vector<16x32xf32>, vector<32x96xf32>, vector<16x96xf32> -> vector<16x96xf32>
    %210 = vector.broadcast %200 : vector<1x96xf32> to vector<16x96xf32>
    %211 = arith.addf %209, %210 : vector<16x96xf32>
    %212 = vector.shape_cast %211 : vector<16x96xf32> to vector<2x8x96xf32>
    %213 = vector.extract_strided_slice %212 {offsets = [0, 0, 0], sizes = [2, 8, 8], strides = [1, 1, 1]} : vector<2x8x96xf32> to vector<2x8x8xf32>
    %214 = vector.extract_strided_slice %212 {offsets = [0, 0, 32], sizes = [2, 8, 8], strides = [1, 1, 1]} : vector<2x8x96xf32> to vector<2x8x8xf32>
    %215 = vector.extract_strided_slice %212 {offsets = [0, 0, 64], sizes = [2, 8, 8], strides = [1, 1, 1]} : vector<2x8x96xf32> to vector<2x8x8xf32>
    "tpu.trace_start"() <{level = 10 : i32, message = "bqd,bkd->bqk"}> : () -> ()
    %cst_108 = arith.constant dense<0.000000e+00> : vector<2x8x8xf32>
    %216 = tpu.matmul %213, %214, %cst_108 {dimension_numbers = #tpu.dot_dimension_numbers<[2], [2], [1], [1], [0, 0, 0, 1, 1, 1], [0], [0]>} : vector<2x8x8xf32>, vector<2x8x8xf32>, vector<2x8x8xf32> -> vector<2x8x8xf32>
    "tpu.trace_stop"() : () -> ()
    %cst_109 = arith.constant 0.353553385 : f32
    %217 = vector.broadcast %cst_109 : f32 to vector<2x8x8xf32>
    %218 = arith.mulf %216, %217 : vector<2x8x8xf32>
    %219 = vector.broadcast %24 : vector<2x1x8xf32> to vector<2x8x8xf32>
    %220 = arith.addf %218, %219 : vector<2x8x8xf32>
    %cst_110 = arith.constant dense<0xFF800000> : vector<2x8xf32>
    %221 = vector.multi_reduction <maximumf>, %220, %cst_110 [2] : vector<2x8x8xf32> to vector<2x8xf32>
    %222 = vector.shape_cast %221 : vector<2x8xf32> to vector<2x8x1xf32>
    %223 = vector.broadcast %222 : vector<2x8x1xf32> to vector<2x8x8xf32>
    %224 = arith.subf %220, %223 : vector<2x8x8xf32>
    %225 = math.exp %224 : vector<2x8x8xf32>
    %cst_111 = arith.constant dense<0.000000e+00> : vector<2x8xf32>
    %226 = vector.multi_reduction <add>, %225, %cst_111 [2] : vector<2x8x8xf32> to vector<2x8xf32>
    %227 = vector.shape_cast %226 : vector<2x8xf32> to vector<2x8x1xf32>
    %228 = tpu.reciprocal %227 {approx = true} : vector<2x8x1xf32> -> vector<2x8x1xf32>
    %229 = vector.broadcast %228 : vector<2x8x1xf32> to vector<2x8x8xf32>
    %230 = arith.mulf %225, %229 : vector<2x8x8xf32>
    "tpu.trace_start"() <{level = 10 : i32, message = "bqk,bkd->bqd"}> : () -> ()
    %cst_112 = arith.constant dense<0.000000e+00> : vector<2x8x8xf32>
    %231 = tpu.matmul %230, %215, %cst_112 {dimension_numbers = #tpu.dot_dimension_numbers<[2], [1], [1], [2], [0, 0, 0, 1, 1, 2], [0], [0]>} : vector<2x8x8xf32>, vector<2x8x8xf32>, vector<2x8x8xf32> -> vector<2x8x8xf32>
    "tpu.trace_stop"() : () -> ()
    %232 = vector.shape_cast %231 : vector<2x8x8xf32> to vector<16x8xf32>
    %c0_113 = arith.constant 0 : index
    %c0_114 = arith.constant 0 : index
    %233 = vector.load %arg12[%c0_113, %c0_114] : memref<16x32xf32, #tpu.memory_space<vmem>>, vector<16x8xf32>
    tpu.vector_store %arg12[%c0_113, %c0_114], %232 {strides = array<i32>} : memref<16x32xf32, #tpu.memory_space<vmem>>, vector<16x8xf32>,
    %234 = vector.extract_strided_slice %212 {offsets = [0, 0, 8], sizes = [2, 8, 8], strides = [1, 1, 1]} : vector<2x8x96xf32> to vector<2x8x8xf32>
    %235 = vector.extract_strided_slice %212 {offsets = [0, 0, 40], sizes = [2, 8, 8], strides = [1, 1, 1]} : vector<2x8x96xf32> to vector<2x8x8xf32>
    %236 = vector.extract_strided_slice %212 {offsets = [0, 0, 72], sizes = [2, 8, 8], strides = [1, 1, 1]} : vector<2x8x96xf32> to vector<2x8x8xf32>
    "tpu.trace_start"() <{level = 10 : i32, message = "bqd,bkd->bqk"}> : () -> ()
    %cst_115 = arith.constant dense<0.000000e+00> : vector<2x8x8xf32>
    %237 = tpu.matmul %234, %235, %cst_115 {dimension_numbers = #tpu.dot_dimension_numbers<[2], [2], [1], [1], [0, 0, 0, 1, 1, 1], [0], [0]>} : vector<2x8x8xf32>, vector<2x8x8xf32>, vector<2x8x8xf32> -> vector<2x8x8xf32>
    "tpu.trace_stop"() : () -> ()
    %cst_116 = arith.constant 0.353553385 : f32
    %238 = vector.broadcast %cst_116 : f32 to vector<2x8x8xf32>
    %239 = arith.mulf %237, %238 : vector<2x8x8xf32>
    %240 = vector.broadcast %24 : vector<2x1x8xf32> to vector<2x8x8xf32>
    %241 = arith.addf %239, %240 : vector<2x8x8xf32>
    %cst_117 = arith.constant dense<0xFF800000> : vector<2x8xf32>
    %242 = vector.multi_reduction <maximumf>, %241, %cst_117 [2] : vector<2x8x8xf32> to vector<2x8xf32>
    %243 = vector.shape_cast %242 : vector<2x8xf32> to vector<2x8x1xf32>
    %244 = vector.broadcast %243 : vector<2x8x1xf32> to vector<2x8x8xf32>
    %245 = arith.subf %241, %244 : vector<2x8x8xf32>
    %246 = math.exp %245 : vector<2x8x8xf32>
    %cst_118 = arith.constant dense<0.000000e+00> : vector<2x8xf32>
    %247 = vector.multi_reduction <add>, %246, %cst_118 [2] : vector<2x8x8xf32> to vector<2x8xf32>
    %248 = vector.shape_cast %247 : vector<2x8xf32> to vector<2x8x1xf32>
    %249 = tpu.reciprocal %248 {approx = true} : vector<2x8x1xf32> -> vector<2x8x1xf32>
    %250 = vector.broadcast %249 : vector<2x8x1xf32> to vector<2x8x8xf32>
    %251 = arith.mulf %246, %250 : vector<2x8x8xf32>
    "tpu.trace_start"() <{level = 10 : i32, message = "bqk,bkd->bqd"}> : () -> ()
    %cst_119 = arith.constant dense<0.000000e+00> : vector<2x8x8xf32>
    %252 = tpu.matmul %251, %236, %cst_119 {dimension_numbers = #tpu.dot_dimension_numbers<[2], [1], [1], [2], [0, 0, 0, 1, 1, 2], [0], [0]>} : vector<2x8x8xf32>, vector<2x8x8xf32>, vector<2x8x8xf32> -> vector<2x8x8xf32>
    "tpu.trace_stop"() : () -> ()
    %253 = vector.shape_cast %252 : vector<2x8x8xf32> to vector<16x8xf32>
    %c0_120 = arith.constant 0 : index
    %c8_121 = arith.constant 8 : index
    %254 = vector.load %arg12[%c0_120, %c8_121] : memref<16x32xf32, #tpu.memory_space<vmem>>, vector<16x8xf32>
    tpu.vector_store %arg12[%c0_120, %c8_121], %253 {strides = array<i32>} : memref<16x32xf32, #tpu.memory_space<vmem>>, vector<16x8xf32>,
    %255 = vector.extract_strided_slice %212 {offsets = [0, 0, 16], sizes = [2, 8, 8], strides = [1, 1, 1]} : vector<2x8x96xf32> to vector<2x8x8xf32>
    %256 = vector.extract_strided_slice %212 {offsets = [0, 0, 48], sizes = [2, 8, 8], strides = [1, 1, 1]} : vector<2x8x96xf32> to vector<2x8x8xf32>
    %257 = vector.extract_strided_slice %212 {offsets = [0, 0, 80], sizes = [2, 8, 8], strides = [1, 1, 1]} : vector<2x8x96xf32> to vector<2x8x8xf32>
    "tpu.trace_start"() <{level = 10 : i32, message = "bqd,bkd->bqk"}> : () -> ()
    %cst_122 = arith.constant dense<0.000000e+00> : vector<2x8x8xf32>
    %258 = tpu.matmul %255, %256, %cst_122 {dimension_numbers = #tpu.dot_dimension_numbers<[2], [2], [1], [1], [0, 0, 0, 1, 1, 1], [0], [0]>} : vector<2x8x8xf32>, vector<2x8x8xf32>, vector<2x8x8xf32> -> vector<2x8x8xf32>
    "tpu.trace_stop"() : () -> ()
    %cst_123 = arith.constant 0.353553385 : f32
    %259 = vector.broadcast %cst_123 : f32 to vector<2x8x8xf32>
    %260 = arith.mulf %258, %259 : vector<2x8x8xf32>
    %261 = vector.broadcast %24 : vector<2x1x8xf32> to vector<2x8x8xf32>
    %262 = arith.addf %260, %261 : vector<2x8x8xf32>
    %cst_124 = arith.constant dense<0xFF800000> : vector<2x8xf32>
    %263 = vector.multi_reduction <maximumf>, %262, %cst_124 [2] : vector<2x8x8xf32> to vector<2x8xf32>
    %264 = vector.shape_cast %263 : vector<2x8xf32> to vector<2x8x1xf32>
    %265 = vector.broadcast %264 : vector<2x8x1xf32> to vector<2x8x8xf32>
    %266 = arith.subf %262, %265 : vector<2x8x8xf32>
    %267 = math.exp %266 : vector<2x8x8xf32>
    %cst_125 = arith.constant dense<0.000000e+00> : vector<2x8xf32>
    %268 = vector.multi_reduction <add>, %267, %cst_125 [2] : vector<2x8x8xf32> to vector<2x8xf32>
    %269 = vector.shape_cast %268 : vector<2x8xf32> to vector<2x8x1xf32>
    %270 = tpu.reciprocal %269 {approx = true} : vector<2x8x1xf32> -> vector<2x8x1xf32>
    %271 = vector.broadcast %270 : vector<2x8x1xf32> to vector<2x8x8xf32>
    %272 = arith.mulf %267, %271 : vector<2x8x8xf32>
    "tpu.trace_start"() <{level = 10 : i32, message = "bqk,bkd->bqd"}> : () -> ()
    %cst_126 = arith.constant dense<0.000000e+00> : vector<2x8x8xf32>
    %273 = tpu.matmul %272, %257, %cst_126 {dimension_numbers = #tpu.dot_dimension_numbers<[2], [1], [1], [2], [0, 0, 0, 1, 1, 2], [0], [0]>} : vector<2x8x8xf32>, vector<2x8x8xf32>, vector<2x8x8xf32> -> vector<2x8x8xf32>
    "tpu.trace_stop"() : () -> ()
    %274 = vector.shape_cast %273 : vector<2x8x8xf32> to vector<16x8xf32>
    %c0_127 = arith.constant 0 : index
    %c16_128 = arith.constant 16 : index
    %275 = vector.load %arg12[%c0_127, %c16_128] : memref<16x32xf32, #tpu.memory_space<vmem>>, vector<16x8xf32>
    tpu.vector_store %arg12[%c0_127, %c16_128], %274 {strides = array<i32>} : memref<16x32xf32, #tpu.memory_space<vmem>>, vector<16x8xf32>,
    %276 = vector.extract_strided_slice %212 {offsets = [0, 0, 24], sizes = [2, 8, 8], strides = [1, 1, 1]} : vector<2x8x96xf32> to vector<2x8x8xf32>
    %277 = vector.extract_strided_slice %212 {offsets = [0, 0, 56], sizes = [2, 8, 8], strides = [1, 1, 1]} : vector<2x8x96xf32> to vector<2x8x8xf32>
    %278 = vector.extract_strided_slice %212 {offsets = [0, 0, 88], sizes = [2, 8, 8], strides = [1, 1, 1]} : vector<2x8x96xf32> to vector<2x8x8xf32>
    "tpu.trace_start"() <{level = 10 : i32, message = "bqd,bkd->bqk"}> : () -> ()
    %cst_129 = arith.constant dense<0.000000e+00> : vector<2x8x8xf32>
    %279 = tpu.matmul %276, %277, %cst_129 {dimension_numbers = #tpu.dot_dimension_numbers<[2], [2], [1], [1], [0, 0, 0, 1, 1, 1], [0], [0]>} : vector<2x8x8xf32>, vector<2x8x8xf32>, vector<2x8x8xf32> -> vector<2x8x8xf32>
    "tpu.trace_stop"() : () -> ()
    %cst_130 = arith.constant 0.353553385 : f32
    %280 = vector.broadcast %cst_130 : f32 to vector<2x8x8xf32>
    %281 = arith.mulf %279, %280 : vector<2x8x8xf32>
    %282 = vector.broadcast %24 : vector<2x1x8xf32> to vector<2x8x8xf32>
    %283 = arith.addf %281, %282 : vector<2x8x8xf32>
    %cst_131 = arith.constant dense<0xFF800000> : vector<2x8xf32>
    %284 = vector.multi_reduction <maximumf>, %283, %cst_131 [2] : vector<2x8x8xf32> to vector<2x8xf32>
    %285 = vector.shape_cast %284 : vector<2x8xf32> to vector<2x8x1xf32>
    %286 = vector.broadcast %285 : vector<2x8x1xf32> to vector<2x8x8xf32>
    %287 = arith.subf %283, %286 : vector<2x8x8xf32>
    %288 = math.exp %287 : vector<2x8x8xf32>
    %cst_132 = arith.constant dense<0.000000e+00> : vector<2x8xf32>
    %289 = vector.multi_reduction <add>, %288, %cst_132 [2] : vector<2x8x8xf32> to vector<2x8xf32>
    %290 = vector.shape_cast %289 : vector<2x8xf32> to vector<2x8x1xf32>
    %291 = tpu.reciprocal %290 {approx = true} : vector<2x8x1xf32> -> vector<2x8x1xf32>
    %292 = vector.broadcast %291 : vector<2x8x1xf32> to vector<2x8x8xf32>
    %293 = arith.mulf %288, %292 : vector<2x8x8xf32>
    "tpu.trace_start"() <{level = 10 : i32, message = "bqk,bkd->bqd"}> : () -> ()
    %cst_133 = arith.constant dense<0.000000e+00> : vector<2x8x8xf32>
    %294 = tpu.matmul %293, %278, %cst_133 {dimension_numbers = #tpu.dot_dimension_numbers<[2], [1], [1], [2], [0, 0, 0, 1, 1, 2], [0], [0]>} : vector<2x8x8xf32>, vector<2x8x8xf32>, vector<2x8x8xf32> -> vector<2x8x8xf32>
    "tpu.trace_stop"() : () -> ()
    %295 = vector.shape_cast %294 : vector<2x8x8xf32> to vector<16x8xf32>
    %c0_134 = arith.constant 0 : index
    %c24_135 = arith.constant 24 : index
    %296 = vector.load %arg12[%c0_134, %c24_135] : memref<16x32xf32, #tpu.memory_space<vmem>>, vector<16x8xf32>
    tpu.vector_store %arg12[%c0_134, %c24_135], %295 {strides = array<i32>} : memref<16x32xf32, #tpu.memory_space<vmem>>, vector<16x8xf32>,
    %c0_136 = arith.constant 0 : index
    %c0_137 = arith.constant 0 : index
    %297 = vector.load %arg12[%c0_136, %c0_137] : memref<16x32xf32, #tpu.memory_space<vmem>>, vector<16x32xf32>
    %cst_138 = arith.constant dense<0.000000e+00> : vector<16x32xf32>
    %298 = tpu.matmul %297, %196, %cst_138 {dimension_numbers = #tpu.dot_dimension_numbers<[1], [0], [0], [1], [0, 0, 1, 1], [], []>} : vector<16x32xf32>, vector<32x32xf32>, vector<16x32xf32> -> vector<16x32xf32>
    %299 = vector.broadcast %202 : vector<1x32xf32> to vector<16x32xf32>
    %300 = arith.addf %298, %299 : vector<16x32xf32>
    %301 = arith.addf %300, %192 : vector<16x32xf32>
    %c3 = arith.constant 3 : index
    %c0_139 = arith.constant 0 : index
    %302 = vector.load %arg2[%c3, %c0_139] : memref<6x32xf32, #tpu.memory_space<vmem>>, vector<1x32xf32>
    %c3_140 = arith.constant 3 : index
    %c0_141 = arith.constant 0 : index
    %303 = vector.load %arg3[%c3_140, %c0_141] : memref<6x32xf32, #tpu.memory_space<vmem>>, vector<1x32xf32>
    %cst_142 = arith.constant dense<0.000000e+00> : vector<16xf32>
    %304 = vector.multi_reduction <add>, %301, %cst_142 [1] : vector<16x32xf32> to vector<16xf32>
    %305 = vector.shape_cast %304 : vector<16xf32> to vector<16x1xf32>
    %cst_143 = arith.constant 3.200000e+01 : f32
    %306 = vector.broadcast %cst_143 : f32 to vector<16x1xf32>
    %307 = arith.divf %305, %306 : vector<16x1xf32>
    %308 = vector.broadcast %307 : vector<16x1xf32> to vector<16x32xf32>
    %309 = arith.subf %301, %308 : vector<16x32xf32>
    %310 = arith.mulf %309, %309 : vector<16x32xf32>
    %cst_144 = arith.constant dense<0.000000e+00> : vector<16xf32>
    %311 = vector.multi_reduction <add>, %310, %cst_144 [1] : vector<16x32xf32> to vector<16xf32>
    %312 = vector.shape_cast %311 : vector<16xf32> to vector<16x1xf32>
    %cst_145 = arith.constant 3.200000e+01 : f32
    %313 = vector.broadcast %cst_145 : f32 to vector<16x1xf32>
    %314 = arith.divf %312, %313 : vector<16x1xf32>
    %cst_146 = arith.constant 9.99999996E-13 : f32
    %315 = vector.broadcast %cst_146 : f32 to vector<16x1xf32>
    %316 = arith.addf %314, %315 : vector<16x1xf32>
    %317 = math.rsqrt %316 : vector<16x1xf32>
    %318 = vector.broadcast %317 : vector<16x1xf32> to vector<16x32xf32>
    %319 = arith.mulf %309, %318 : vector<16x32xf32>
    %320 = vector.broadcast %302 : vector<1x32xf32> to vector<16x32xf32>
    %321 = arith.mulf %319, %320 : vector<16x32xf32>
    %322 = vector.broadcast %303 : vector<1x32xf32> to vector<16x32xf32>
    %323 = arith.addf %321, %322 : vector<16x32xf32>
    %cst_147 = arith.constant dense<0.000000e+00> : vector<16x128xf32>
    %324 = tpu.matmul %323, %198, %cst_147 {dimension_numbers = #tpu.dot_dimension_numbers<[1], [0], [0], [1], [0, 0, 1, 1], [], []>} : vector<16x32xf32>, vector<32x128xf32>, vector<16x128xf32> -> vector<16x128xf32>
    %325 = vector.broadcast %204 : vector<1x128xf32> to vector<16x128xf32>
    %326 = arith.addf %324, %325 : vector<16x128xf32>
    %cst_148 = arith.constant 5.000000e-01 : f32
    %327 = vector.broadcast %cst_148 : f32 to vector<16x128xf32>
    %328 = arith.mulf %327, %326 : vector<16x128xf32>
    %cst_149 = arith.constant 0.707106769 : f32
    %329 = vector.broadcast %cst_149 : f32 to vector<16x128xf32>
    %330 = arith.mulf %326, %329 : vector<16x128xf32>
    %331 = math.erf %330 : vector<16x128xf32>
    %cst_150 = arith.constant 1.000000e+00 : f32
    %332 = vector.broadcast %cst_150 : f32 to vector<16x128xf32>
    %333 = arith.addf %332, %331 : vector<16x128xf32>
    %334 = arith.mulf %328, %333 : vector<16x128xf32>
    %cst_151 = arith.constant dense<0.000000e+00> : vector<16x32xf32>
    %335 = tpu.matmul %334, %206, %cst_151 {dimension_numbers = #tpu.dot_dimension_numbers<[1], [0], [0], [1], [0, 0, 1, 1], [], []>} : vector<16x128xf32>, vector<128x32xf32>, vector<16x32xf32> -> vector<16x32xf32>
    %336 = vector.broadcast %208 : vector<1x32xf32> to vector<16x32xf32>
    %337 = arith.addf %335, %336 : vector<16x32xf32>
    %338 = arith.addf %337, %323 : vector<16x32xf32>
    %c4 = arith.constant 4 : index
    %c0_152 = arith.constant 0 : index
    %339 = vector.load %arg2[%c4, %c0_152] : memref<6x32xf32, #tpu.memory_space<vmem>>, vector<1x32xf32>
    %c4_153 = arith.constant 4 : index
    %c0_154 = arith.constant 0 : index
    %340 = vector.load %arg3[%c4_153, %c0_154] : memref<6x32xf32, #tpu.memory_space<vmem>>, vector<1x32xf32>
    %cst_155 = arith.constant dense<0.000000e+00> : vector<16xf32>
    %341 = vector.multi_reduction <add>, %338, %cst_155 [1] : vector<16x32xf32> to vector<16xf32>
    %342 = vector.shape_cast %341 : vector<16xf32> to vector<16x1xf32>
    %cst_156 = arith.constant 3.200000e+01 : f32
    %343 = vector.broadcast %cst_156 : f32 to vector<16x1xf32>
    %344 = arith.divf %342, %343 : vector<16x1xf32>
    %345 = vector.broadcast %344 : vector<16x1xf32> to vector<16x32xf32>
    %346 = arith.subf %338, %345 : vector<16x32xf32>
    %347 = arith.mulf %346, %346 : vector<16x32xf32>
    %cst_157 = arith.constant dense<0.000000e+00> : vector<16xf32>
    %348 = vector.multi_reduction <add>, %347, %cst_157 [1] : vector<16x32xf32> to vector<16xf32>
    %349 = vector.shape_cast %348 : vector<16xf32> to vector<16x1xf32>
    %cst_158 = arith.constant 3.200000e+01 : f32
    %350 = vector.broadcast %cst_158 : f32 to vector<16x1xf32>
    %351 = arith.divf %349, %350 : vector<16x1xf32>
    %cst_159 = arith.constant 9.99999996E-13 : f32
    %352 = vector.broadcast %cst_159 : f32 to vector<16x1xf32>
    %353 = arith.addf %351, %352 : vector<16x1xf32>
    %354 = math.rsqrt %353 : vector<16x1xf32>
    %355 = vector.broadcast %354 : vector<16x1xf32> to vector<16x32xf32>
    %356 = arith.mulf %346, %355 : vector<16x32xf32>
    %357 = vector.broadcast %339 : vector<1x32xf32> to vector<16x32xf32>
    %358 = arith.mulf %356, %357 : vector<16x32xf32>
    %359 = vector.broadcast %340 : vector<1x32xf32> to vector<16x32xf32>
    %360 = arith.addf %358, %359 : vector<16x32xf32>
    %c0_160 = arith.constant 0 : index
    %c0_161 = arith.constant 0 : index
    %361 = vector.load %arg8[%c0_160, %c0_161] : memref<32x194xf32, #tpu.memory_space<vmem>>, vector<32x128xf32>
    %c0_162 = arith.constant 0 : index
    %c128_163 = arith.constant 128 : index
    %362 = vector.load %arg8[%c0_162, %c128_163] : memref<32x194xf32, #tpu.memory_space<vmem>>, vector<32x32xf32>
    %c0_164 = arith.constant 0 : index
    %c160 = arith.constant 160 : index
    %363 = vector.load %arg8[%c0_164, %c160] : memref<32x194xf32, #tpu.memory_space<vmem>>, vector<32x32xf32>
    %c0_165 = arith.constant 0 : index
    %c192 = arith.constant 192 : index
    %364 = vector.load %arg8[%c0_165, %c192] : memref<32x194xf32, #tpu.memory_space<vmem>>, vector<32x2xf32>
    %c0_166 = arith.constant 0 : index
    %c0_167 = arith.constant 0 : index
    %365 = vector.load %arg9[%c0_166, %c0_167] : memref<1x194xf32, #tpu.memory_space<vmem>>, vector<1x128xf32>
    %c0_168 = arith.constant 0 : index
    %c128_169 = arith.constant 128 : index
    %366 = vector.load %arg9[%c0_168, %c128_169] : memref<1x194xf32, #tpu.memory_space<vmem>>, vector<1x32xf32>
    %c0_170 = arith.constant 0 : index
    %c160_171 = arith.constant 160 : index
    %367 = vector.load %arg9[%c0_170, %c160_171] : memref<1x194xf32, #tpu.memory_space<vmem>>, vector<1x32xf32>
    %c0_172 = arith.constant 0 : index
    %c192_173 = arith.constant 192 : index
    %368 = vector.load %arg9[%c0_172, %c192_173] : memref<1x194xf32, #tpu.memory_space<vmem>>, vector<1x2xf32>
    %369 = vector.extract_strided_slice %360 {offsets = [0, 0], sizes = [1, 32], strides = [1, 1]} : vector<16x32xf32> to vector<1x32xf32>
    %370 = vector.extract_strided_slice %360 {offsets = [8, 0], sizes = [1, 32], strides = [1, 1]} : vector<16x32xf32> to vector<1x32xf32>
    %371 = tpu.concatenate %369, %370 in 0 : vector<1x32xf32>, vector<1x32xf32> -> vector<2x32xf32>
    %cst_174 = arith.constant dense<0.000000e+00> : vector<2x32xf32>
    %372 = tpu.matmul %371, %362, %cst_174 {dimension_numbers = #tpu.dot_dimension_numbers<[1], [0], [0], [1], [0, 0, 1, 1], [], []>} : vector<2x32xf32>, vector<32x32xf32>, vector<2x32xf32> -> vector<2x32xf32>
    %373 = vector.broadcast %366 : vector<1x32xf32> to vector<2x32xf32>
    %374 = arith.addf %372, %373 : vector<2x32xf32>
    %375 = math.tanh %374 : vector<2x32xf32>
    %cst_175 = arith.constant dense<0.000000e+00> : vector<2x2xf32>
    %376 = tpu.matmul %375, %364, %cst_175 {dimension_numbers = #tpu.dot_dimension_numbers<[1], [0], [0], [1], [0, 0, 1, 1], [], []>} : vector<2x32xf32>, vector<32x2xf32>, vector<2x2xf32> -> vector<2x2xf32>
    %377 = vector.broadcast %368 : vector<1x2xf32> to vector<2x2xf32>
    %378 = arith.addf %376, %377 : vector<2x2xf32>
    %c0_176 = arith.constant 0 : index
    %c128_177 = arith.constant 128 : index
    %379 = vector.load %arg10[%c0_176, %c128_177] : memref<2x129xi32, #tpu.memory_space<vmem>>, vector<2x1xi32>
    %cst_178 = arith.constant dense<0xFF800000> : vector<2xf32>
    %380 = vector.multi_reduction <maximumf>, %378, %cst_178 [1] : vector<2x2xf32> to vector<2xf32>
    %381 = vector.shape_cast %380 : vector<2xf32> to vector<2x1xf32>
    %382 = vector.broadcast %381 : vector<2x1xf32> to vector<2x2xf32>
    %383 = arith.subf %378, %382 : vector<2x2xf32>
    %384 = math.exp %383 : vector<2x2xf32>
    %cst_179 = arith.constant dense<0.000000e+00> : vector<2xf32>
    %385 = vector.multi_reduction <add>, %384, %cst_179 [1] : vector<2x2xf32> to vector<2xf32>
    %386 = vector.shape_cast %385 : vector<2xf32> to vector<2x1xf32>
    %387 = math.log %386 : vector<2x1xf32>
    %388 = arith.addf %387, %381 : vector<2x1xf32>
    %389 = tpu.iota {dimensions = array<i32: 1>} : vector<2x2xi32>
    %390 = vector.broadcast %379 : vector<2x1xi32> to vector<2x2xi32>
    %391 = arith.cmpi eq, %389, %390 : vector<2x2xi32>
    %392 = arith.extui %391 : vector<2x2xi1> to vector<2x2xi32>
    %393 = arith.sitofp %392 : vector<2x2xi32> to vector<2x2xf32>
    %394 = arith.mulf %378, %393 : vector<2x2xf32>
    %cst_180 = arith.constant dense<0.000000e+00> : vector<2xf32>
    %395 = vector.multi_reduction <add>, %394, %cst_180 [1] : vector<2x2xf32> to vector<2xf32>
    %396 = vector.shape_cast %395 : vector<2xf32> to vector<2x1xf32>
    %397 = arith.subf %388, %396 : vector<2x1xf32>
    %cst_181 = arith.constant dense<0.000000e+00> : vector<1xf32>
    %398 = vector.multi_reduction <add>, %397, %cst_181 [0] : vector<2x1xf32> to vector<1xf32>
    %399 = vector.shape_cast %398 : vector<1xf32> to vector<1x1xf32>
    %cst_182 = arith.constant 5.000000e-01 : f32
    %400 = vector.broadcast %cst_182 : f32 to vector<1x1xf32>
    %401 = arith.mulf %399, %400 : vector<1x1xf32>
    %cst_183 = arith.constant dense<0.000000e+00> : vector<16x32xf32>
    %402 = tpu.matmul %360, %363, %cst_183 {dimension_numbers = #tpu.dot_dimension_numbers<[1], [0], [0], [1], [0, 0, 1, 1], [], []>} : vector<16x32xf32>, vector<32x32xf32>, vector<16x32xf32> -> vector<16x32xf32>
    %403 = vector.broadcast %367 : vector<1x32xf32> to vector<16x32xf32>
    %404 = arith.addf %402, %403 : vector<16x32xf32>
    %cst_184 = arith.constant 5.000000e-01 : f32
    %405 = vector.broadcast %cst_184 : f32 to vector<16x32xf32>
    %406 = arith.mulf %405, %404 : vector<16x32xf32>
    %cst_185 = arith.constant 0.707106769 : f32
    %407 = vector.broadcast %cst_185 : f32 to vector<16x32xf32>
    %408 = arith.mulf %404, %407 : vector<16x32xf32>
    %409 = math.erf %408 : vector<16x32xf32>
    %cst_186 = arith.constant 1.000000e+00 : f32
    %410 = vector.broadcast %cst_186 : f32 to vector<16x32xf32>
    %411 = arith.addf %410, %409 : vector<16x32xf32>
    %412 = arith.mulf %406, %411 : vector<16x32xf32>
    %c5 = arith.constant 5 : index
    %c0_187 = arith.constant 0 : index
    %413 = vector.load %arg2[%c5, %c0_187] : memref<6x32xf32, #tpu.memory_space<vmem>>, vector<1x32xf32>
    %c5_188 = arith.constant 5 : index
    %c0_189 = arith.constant 0 : index
    %414 = vector.load %arg3[%c5_188, %c0_189] : memref<6x32xf32, #tpu.memory_space<vmem>>, vector<1x32xf32>
    %cst_190 = arith.constant dense<0.000000e+00> : vector<16xf32>
    %415 = vector.multi_reduction <add>, %412, %cst_190 [1] : vector<16x32xf32> to vector<16xf32>
    %416 = vector.shape_cast %415 : vector<16xf32> to vector<16x1xf32>
    %cst_191 = arith.constant 3.200000e+01 : f32
    %417 = vector.broadcast %cst_191 : f32 to vector<16x1xf32>
    %418 = arith.divf %416, %417 : vector<16x1xf32>
    %419 = vector.broadcast %418 : vector<16x1xf32> to vector<16x32xf32>
    %420 = arith.subf %412, %419 : vector<16x32xf32>
    %421 = arith.mulf %420, %420 : vector<16x32xf32>
    %cst_192 = arith.constant dense<0.000000e+00> : vector<16xf32>
    %422 = vector.multi_reduction <add>, %421, %cst_192 [1] : vector<16x32xf32> to vector<16xf32>
    %423 = vector.shape_cast %422 : vector<16xf32> to vector<16x1xf32>
    %cst_193 = arith.constant 3.200000e+01 : f32
    %424 = vector.broadcast %cst_193 : f32 to vector<16x1xf32>
    %425 = arith.divf %423, %424 : vector<16x1xf32>
    %cst_194 = arith.constant 9.99999996E-13 : f32
    %426 = vector.broadcast %cst_194 : f32 to vector<16x1xf32>
    %427 = arith.addf %425, %426 : vector<16x1xf32>
    %428 = math.rsqrt %427 : vector<16x1xf32>
    %429 = vector.broadcast %428 : vector<16x1xf32> to vector<16x32xf32>
    %430 = arith.mulf %420, %429 : vector<16x32xf32>
    %431 = vector.broadcast %413 : vector<1x32xf32> to vector<16x32xf32>
    %432 = arith.mulf %430, %431 : vector<16x32xf32>
    %433 = vector.broadcast %414 : vector<1x32xf32> to vector<16x32xf32>
    %434 = arith.addf %432, %433 : vector<16x32xf32>
    %cst_195 = arith.constant dense<0.000000e+00> : vector<16x128xf32>
    %435 = tpu.matmul %434, %361, %cst_195 {dimension_numbers = #tpu.dot_dimension_numbers<[1], [0], [0], [1], [0, 0, 1, 1], [], []>} : vector<16x32xf32>, vector<32x128xf32>, vector<16x128xf32> -> vector<16x128xf32>
    %436 = vector.broadcast %365 : vector<1x128xf32> to vector<16x128xf32>
    %437 = arith.addf %435, %436 : vector<16x128xf32>
    %438 = vector.shape_cast %437 : vector<16x128xf32> to vector<2x8x128xf32>
    %c0_196 = arith.constant 0 : index
    %c0_197 = arith.constant 0 : index
    %439 = vector.load %arg10[%c0_196, %c0_197] : memref<2x129xi32, #tpu.memory_space<vmem>>, vector<2x128xi32>
    %cst_198 = arith.constant dense<0xFF800000> : vector<2x128xf32>
    %440 = vector.multi_reduction <maximumf>, %438, %cst_198 [1] : vector<2x8x128xf32> to vector<2x128xf32>
    %441 = vector.shape_cast %440 : vector<2x128xf32> to vector<2x1x128xf32>
    %442 = vector.broadcast %441 : vector<2x1x128xf32> to vector<2x8x128xf32>
    %443 = arith.subf %438, %442 : vector<2x8x128xf32>
    %444 = math.exp %443 : vector<2x8x128xf32>
    %cst_199 = arith.constant dense<0.000000e+00> : vector<2x128xf32>
    %445 = vector.multi_reduction <add>, %444, %cst_199 [1] : vector<2x8x128xf32> to vector<2x128xf32>
    %446 = vector.shape_cast %445 : vector<2x128xf32> to vector<2x1x128xf32>
    %447 = math.log %446 : vector<2x1x128xf32>
    %448 = arith.addf %447, %441 : vector<2x1x128xf32>
    %449 = tpu.iota {dimensions = array<i32: 1>} : vector<2x8x128xi32>
    %450 = vector.shape_cast %439 : vector<2x128xi32> to vector<2x1x128xi32>
    %451 = vector.broadcast %450 : vector<2x1x128xi32> to vector<2x8x128xi32>
    %452 = arith.cmpi eq, %449, %451 : vector<2x8x128xi32>
    %453 = arith.extui %452 : vector<2x8x128xi1> to vector<2x8x128xi32>
    %454 = arith.sitofp %453 : vector<2x8x128xi32> to vector<2x8x128xf32>
    %455 = arith.mulf %438, %454 : vector<2x8x128xf32>
    %cst_200 = arith.constant dense<0.000000e+00> : vector<2x128xf32>
    %456 = vector.multi_reduction <add>, %455, %cst_200 [1] : vector<2x8x128xf32> to vector<2x128xf32>
    %457 = vector.shape_cast %456 : vector<2x128xf32> to vector<2x1x128xf32>
    %458 = arith.subf %448, %457 : vector<2x1x128xf32>
    %cst_201 = arith.constant dense<0.000000e+00> : vector<2x1xf32>
    %459 = vector.multi_reduction <add>, %458, %cst_201 [2] : vector<2x1x128xf32> to vector<2x1xf32>
    %460 = vector.shape_cast %459 : vector<2x1xf32> to vector<2x1x1xf32>
    %cst_202 = arith.constant dense<0.000000e+00> : vector<1x1xf32>
    %461 = vector.multi_reduction <add>, %460, %cst_202 [0] : vector<2x1x1xf32> to vector<1x1xf32>
    %462 = vector.shape_cast %461 : vector<1x1xf32> to vector<1x1x1xf32>
    %463 = vector.shape_cast %462 : vector<1x1x1xf32> to vector<1x1xf32>
    %cst_203 = arith.constant 3.906250e-03 : f32
    %464 = vector.broadcast %cst_203 : f32 to vector<1x1xf32>
    %465 = arith.mulf %463, %464 : vector<1x1xf32>
    %466 = tpu.concatenate %401, %465 in 1 : vector<1x1xf32>, vector<1x1xf32> -> vector<1x2xf32>
    %c0_204 = arith.constant 0 : index
    %c0_205 = arith.constant 0 : index
    %467 = vector.load %arg11[%c0_204, %c0_205] : memref<1x2xf32, #tpu.memory_space<vmem>>, vector<1x2xf32>
    tpu.vector_store %arg11[%c0_204, %c0_205], %466 {strides = array<i32>} : memref<1x2xf32, #tpu.memory_space<vmem>>, vector<1x2xf32>,
    return
  }
}

</mosaic_0001>

<llo_original>
// kernel: forward.1
$region0: #{forward.1}
  #allocation0 [shape = 'u32[]', space=smem, size = 0x4, offset = 0x4, fixed_abs, tag = 'smem constant byte address 0x4 - core index']
  #allocation1 [shape = 'u32[72,128]{1,0:T(1,128)}', space=vmem, size = 0x9000, scoped, tag = 'internal scratch']
  #allocation2 [shape = 'f32[16,32]{1,0:T(8,128)}', space=vmem, size = 0x2000, scoped, tag = 'scratch operand']
  %s0 = inlined_call_operand.vmem [shape: f32[16,32], index: 0, kind: input, shape index: {}]
  %s1 = inlined_call_operand.vmem [shape: f32[2,8], index: 1, kind: input, shape index: {}]
  %s2 = inlined_call_operand.vmem [shape: f32[6,32], index: 2, kind: input, shape index: {}]
  %s3 = inlined_call_operand.vmem [shape: f32[6,32], index: 3, kind: input, shape index: {}]
  %s4 = inlined_call_operand.vmem [shape: f32[2,32,256], index: 4, kind: input, shape index: {}]
  %s5 = inlined_call_operand.vmem [shape: f32[2,1,256], index: 5, kind: input, shape index: {}]
  %s6 = inlined_call_operand.vmem [shape: f32[2,128,32], index: 6, kind: input, shape index: {}]
  %s7 = inlined_call_operand.vmem [shape: f32[2,1,32], index: 7, kind: input, shape index: {}]
  %s8 = inlined_call_operand.vmem [shape: f32[32,194], index: 8, kind: input, shape index: {}]
  %s9 = inlined_call_operand.vmem [shape: f32[1,194], index: 9, kind: input, shape index: {}]
  %s10 = inlined_call_operand.vmem [shape: s32[2,129], index: 10, kind: input, shape index: {}]
  %s11 = inlined_call_operand.vmem [shape: f32[1,2], index: 11, kind: output, shape index: {}]
  %s12 = sld [smem:[#allocation0]]
  $region54: #{forward.1} parent=0
    _
  %s14 = ssub.s32 1, %s12
  %s15 = scalar_select 0, %s14, %s12
  // Predicated region
  $region2: #{forward.1} parent=0 // pred_check
    _
  $region3: #{forward.1} parent=0 // pred_check_branch
    %17 = sbr.rel (0) target = $region5
  $region4: #{forward.1} parent=0 // pred_region
    _
  $region5: #{forward.1} parent=0 // pred_fallthru
    _
  // Predicated region
  $region6: #{forward.1} parent=0 // pred_check
    _
  $region7: #{forward.1} parent=0 // pred_check_branch
    %19 = sbr.rel (0) target = $region9
  $region8: #{forward.1} parent=0 // pred_region
    _
  $region9: #{forward.1} parent=0 // pred_fallthru
    _
  // Predicated region
  $region10: #{forward.1} parent=0 // pred_check
    _
  $region11: #{forward.1} parent=0 // pred_check_branch
    %21 = sbr.rel (0) target = $region13
  $region12: #{forward.1} parent=0 // pred_region
    _
  $region13: #{forward.1} parent=0 // pred_fallthru
    _
  // Predicated region
  $region14: #{forward.1} parent=0 // pred_check
    _
  $region15: #{forward.1} parent=0 // pred_check_branch
    %23 = sbr.rel (0) target = $region17
  $region16: #{forward.1} parent=0 // pred_region
    _
  $region17: #{forward.1} parent=0 // pred_fallthru
    _
  // Predicated region
  $region18: #{forward.1} parent=0 // pred_check
    _
  $region19: #{forward.1} parent=0 // pred_check_branch
    %25 = sbr.rel (0) target = $region21
  $region20: #{forward.1} parent=0 // pred_region
    _
  $region21: #{forward.1} parent=0 // pred_fallthru
    _
  // Predicated region
  $region22: #{forward.1} parent=0 // pred_check
    _
  $region23: #{forward.1} parent=0 // pred_check_branch
    %27 = sbr.rel (0) target = $region25
  $region24: #{forward.1} parent=0 // pred_region
    _
  $region25: #{forward.1} parent=0 // pred_fallthru
    _
  // Predicated region
  $region26: #{forward.1} parent=0 // pred_check
    _
  $region27: #{forward.1} parent=0 // pred_check_branch
    %29 = sbr.rel (0) target = $region29
  $region28: #{forward.1} parent=0 // pred_region
    _
  $region29: #{forward.1} parent=0 // pred_fallthru
    _
  // Predicated region
  $region30: #{forward.1} parent=0 // pred_check
    _
  $region31: #{forward.1} parent=0 // pred_check_branch
    %31 = sbr.rel (0) target = $region33
  $region32: #{forward.1} parent=0 // pred_region
    _
  $region33: #{forward.1} parent=0 // pred_fallthru
    _
  // Predicated region
  $region34: #{forward.1} parent=0 // pred_check
    _
  $region35: #{forward.1} parent=0 // pred_check_branch
    %33 = sbr.rel (0) target = $region37
  $region36: #{forward.1} parent=0 // pred_region
    _
  $region37: #{forward.1} parent=0 // pred_fallthru
    _
  // Predicated region
  $region38: #{forward.1} parent=0 // pred_check
    _
  $region39: #{forward.1} parent=0 // pred_check_branch
    %35 = sbr.rel (0) target = $region41
  $region40: #{forward.1} parent=0 // pred_region
    _
  $region41: #{forward.1} parent=0 // pred_fallthru
    _
  // Predicated region
  $region42: #{forward.1} parent=0 // pred_check
    _
  $region43: #{forward.1} parent=0 // pred_check_branch
    %37 = sbr.rel (0) target = $region45
  $region44: #{forward.1} parent=0 // pred_region
    _
  $region45: #{forward.1} parent=0 // pred_fallthru
    _
  %v38 = vld [vmem:[%s0] sm:$0xff]
  %v39 = vld [vmem:[%s0 + $0x8] sm:$0xff]
  %v40 = vld [vmem:[%s2] sm:$0x1]
  %v41 = vld [vmem:[%s3] sm:$0x1]
  %vm42 = vcmask 261120
  %v43 = vsel %vm42, %v38, 0.0
  %44 = vadd.xlane.f32.xlu0 %v43
  %v45 = vpop.xlane.xlu0 %44
  %v46 = vsel %vm42, %v39, 0.0
  %47 = vadd.xlane.f32.xlu0 %v46
  %v48 = vpop.xlane.xlu0 %47
  %v49 = vrcp.pop 32.0
  %v50 = vmul.f32 32.0, %v49
  %v51 = vsub.f32 1.0, %v50
  %v52 = vmul.f32 %v49, %v51
  %v53 = vadd.f32 %v49, %v52
  %vm54 = vweird.f32 %v49
  %v55 = vsel %vm54, %v49, %v53
  %v56 = vmul.f32 %v45, %v55
  %v57 = vmul.f32 %v48, %v55
  %v58 = vsub.f32 %v38, %v56
  %v59 = vsub.f32 %v39, %v57
  %v60 = vmul.f32 %v58, %v58
  %v61 = vmul.f32 %v59, %v59
  %v62 = vsel %vm42, %v60, 0.0
  %63 = vadd.xlane.f32.xlu0 %v62
  %v64 = vpop.xlane.xlu0 %63
  %v65 = vsel %vm42, %v61, 0.0
  %66 = vadd.xlane.f32.xlu0 %v65
  %v67 = vpop.xlane.xlu0 %66
  %v68 = vmul.f32 %v64, %v55
  %v69 = vmul.f32 %v67, %v55
  %v70 = vadd.f32 %v68, 1e-12
  %v71 = vadd.f32 %v69, 1e-12
  %v72 = vrsqrt.pop %v70
  %v73 = vmul.f32 %v72, %v70
  %v74 = vmul.f32 %v73, %v72
  %v75 = vmul.f32 0.5, %v74
  %v76 = vsub.f32 1.5, %v75
  %v77 = vmul.f32 %v72, %v76
  %vm78 = vweird.f32 %v70
  %vm79 = vweird.f32 %v72
  %vm80 = vmor %vm78, %vm79
  %v81 = vsel %vm80, %v72, %v77
  %v82 = vrsqrt.pop %v71
  %v83 = vmul.f32 %v82, %v71
  %v84 = vmul.f32 %v83, %v82
  %v85 = vmul.f32 0.5, %v84
  %v86 = vsub.f32 1.5, %v85
  %v87 = vmul.f32 %v82, %v86
  %vm88 = vweird.f32 %v71
  %vm89 = vweird.f32 %v82
  %vm90 = vmor %vm88, %vm89
  %v91 = vsel %vm90, %v82, %v87
  %v92 = vmul.f32 %v58, %v81
  %v93 = vmul.f32 %v59, %v91
  %v94 = vperm.slane %v40, 0
  %v95 = vmul.f32 %v92, %v94
  %v96 = vmul.f32 %v93, %v94
  %v97 = vperm.slane %v41, 0
  %v98 = vadd.f32 %v95, %v97
  %v99 = vadd.f32 %v96, %v97
  %v100 = vld [vmem:[%s1] sm:$0x3]
  %v102 = vrot.slane %v100, 1
  %v103 = vld [vmem:[%s4] sm:$0xff]
  %v104 = vld [vmem:[%s4 + $0x10] sm:$0xff]
  %v105 = vld [vmem:[%s4 + $0x20] sm:$0xff]
  %v106 = vld [vmem:[%s4 + $0x30] sm:$0xff]
  %v107 = vld [vmem:[%s4 + $0x8] sm:$0xff]
  %v108 = vld [vmem:[%s4 + $0x18] sm:$0xff]
  %v109 = vld [vmem:[%s4 + $0x28] sm:$0xff]
  %v110 = vld [vmem:[%s4 + $0x38] sm:$0xff]
  %v111 = vld [vmem:[%s5] sm:$0x1]
  %v112 = vld [vmem:[%s5 + $0x1] sm:$0x1]
  %v113 = vld [vmem:[%s6] sm:$0xff]
  %v114 = vld [vmem:[%s6 + $0x8] sm:$0xff]
  %v115 = vld [vmem:[%s6 + $0x10] sm:$0xff]
  %v116 = vld [vmem:[%s6 + $0x18] sm:$0xff]
  %v117 = vld [vmem:[%s6 + $0x20] sm:$0xff]
  %v118 = vld [vmem:[%s6 + $0x28] sm:$0xff]
  %v119 = vld [vmem:[%s6 + $0x30] sm:$0xff]
  %v120 = vld [vmem:[%s6 + $0x38] sm:$0xff]
  %v121 = vld [vmem:[%s6 + $0x40] sm:$0xff]
  %v122 = vld [vmem:[%s6 + $0x48] sm:$0xff]
  %v123 = vld [vmem:[%s6 + $0x50] sm:$0xff]
  %v124 = vld [vmem:[%s6 + $0x58] sm:$0xff]
  %v125 = vld [vmem:[%s6 + $0x60] sm:$0xff]
  %v126 = vld [vmem:[%s6 + $0x68] sm:$0xff]
  %v127 = vld [vmem:[%s6 + $0x70] sm:$0xff]
  %v128 = vld [vmem:[%s6 + $0x78] sm:$0xff]
  %v129 = vld [vmem:[%s7] sm:$0x1]
  %v131 = vperm.slane %v111, 0
  %v134 = vsel %vm42, %v98, 0
  %v137 = vsel %vm42, %v99, 0
  %139 = vmatpush.msra.mxu0 0.0
  %140 = vmatpush.msra.mxu0 0.0
  %141 = vmatpush.msra.mxu0 0.0
  %142 = vmatpush.msra.mxu0 0.0
  %143 = vmatpush.msra.mxu0 0.0
  %144 = vmatpush.msra.mxu0 0.0
  %145 = vmatpush.msra.mxu0 0.0
  %146 = vmatpush.msra.mxu0 0.0
  %147 = vmatpush.msra.mxu0 0.0
  %148 = vmatpush.msra.mxu0 0.0
  %149 = vmatpush.msra.mxu0 0.0
  %150 = vmatpush.msra.mxu0 0.0
  %151 = vmatpush.msra.mxu0 %v106
  %152 = vmatpush.msra.mxu0 %v105
  %153 = vmatpush.msra.mxu0 %v104
  %154 = vmatpush.msra.mxu0 %v103
  %155 = vmatmul.f32.gmra.mxu0 %v134
  %v156 = vpop.f32.mrf.mxu0
  %v157 = vadd.f32 %v131, %v156
  %158 = vmatmul.f32.gmra.mxu0 %v137
  %v159 = vpop.f32.mrf.mxu0
  %v160 = vadd.f32 %v131, %v159
  %161 = vdwg.mxu0
  %163 = vrot.lane.b32.xlu0 %v157, 96
  %v164 = vpop.permute.xlu0 %163
  %vm165 = vcmask 64512
  %v166 = vsel %vm165, %v157, 0
  %v168 = vsel %vm165, %v164, 0
  %170 = vmatpush.xpose.msra.mxu0 0.0
  %171 = vmatpush.xpose.msra.mxu0 0.0
  %172 = vmatpush.xpose.msra.mxu0 0.0
  %173 = vmatpush.xpose.msra.mxu0 0.0
  %174 = vmatpush.xpose.msra.mxu0 0.0
  %175 = vmatpush.xpose.msra.mxu0 0.0
  %176 = vmatpush.xpose.msra.mxu0 0.0
  %177 = vmatpush.xpose.msra.mxu0 0.0
  %178 = vmatpush.xpose.msra.mxu0 0.0
  %179 = vmatpush.xpose.msra.mxu0 0.0
  %180 = vmatpush.xpose.msra.mxu0 0.0
  %181 = vmatpush.xpose.msra.mxu0 0.0
  %182 = vmatpush.xpose.msra.mxu0 0.0
  %183 = vmatpush.xpose.msra.mxu0 0.0
  %184 = vmatpush.xpose.msra.mxu0 0.0
  %185 = vmatpush.xpose.msra.mxu0 %v168
  %186 = vmatmul.f32.gmra.mxu0 %v166
  %v187 = vpop.f32.mrf.mxu0
  %v188 = vadd.f32 0.0, %v187
  %189 = vdwg.mxu0
  %191 = vrot.lane.b32.xlu0 %v160, 96
  %v192 = vpop.permute.xlu0 %191
  %v193 = vsel %vm165, %v160, 0
  %v195 = vsel %vm165, %v192, 0
  %197 = vmatpush.xpose.msra.mxu0 0.0
  %198 = vmatpush.xpose.msra.mxu0 0.0
  %199 = vmatpush.xpose.msra.mxu0 0.0
  %200 = vmatpush.xpose.msra.mxu0 0.0
  %201 = vmatpush.xpose.msra.mxu0 0.0
  %202 = vmatpush.xpose.msra.mxu0 0.0
  %203 = vmatpush.xpose.msra.mxu0 0.0
  %204 = vmatpush.xpose.msra.mxu0 0.0
  %205 = vmatpush.xpose.msra.mxu0 0.0
  %206 = vmatpush.xpose.msra.mxu0 0.0
  %207 = vmatpush.xpose.msra.mxu0 0.0
  %208 = vmatpush.xpose.msra.mxu0 0.0
  %209 = vmatpush.xpose.msra.mxu0 0.0
  %210 = vmatpush.xpose.msra.mxu0 0.0
  %211 = vmatpush.xpose.msra.mxu0 0.0
  %212 = vmatpush.xpose.msra.mxu0 %v195
  %213 = vmatmul.f32.gmra.mxu0 %v193
  %v214 = vpop.f32.mrf.mxu0
  %v215 = vadd.f32 0.0, %v214
  %216 = vdwg.mxu0
  %v217 = vmul.f32 %v188, 0.35355338
  %v218 = vmul.f32 %v215, 0.35355338
  %v219 = vperm.slane %v100, 0
  %v220 = vperm.slane %v102, 0
  %v223 = vadd.f32 %v217, %v219
  %v224 = vadd.f32 %v218, %v220
  %v225 = vsel %vm165, %v223, -inf
  %226 = vmax.xlane.f32.xlu0 %v225
  %v227 = vpop.xlane.xlu0 %226
  %v228 = vsel %vm165, %v224, -inf
  %229 = vmax.xlane.f32.xlu0 %v228
  %v230 = vpop.xlane.xlu0 %229
  %v231 = vsub.f32 %v223, %v227
  %v232 = vsub.f32 %v224, %v230
  %v233 = vmul.f32 %v231, 1.442695
  %v234 = vpow.pop %v233
  %v235 = vmul.f32 %v232, 1.442695
  %v236 = vpow.pop %v235
  %v237 = vsel %vm165, %v234, 0.0
  %238 = vadd.xlane.f32.xlu0 %v237
  %v239 = vpop.xlane.xlu0 %238
  %v240 = vsel %vm165, %v236, 0.0
  %241 = vadd.xlane.f32.xlu0 %v240
  %v242 = vpop.xlane.xlu0 %241
  %v243 = vrcp.pop %v239
  %v244 = vrcp.pop %v242
  %v245 = vmul.f32 %v234, %v243
  %v246 = vmul.f32 %v236, %v244
  %247 = vrot.lane.b32.xlu0 %v157, 64
  %v248 = vpop.permute.xlu0 %247
  %v251 = vsel %vm165, %v245, 0
  %253 = vmatpush.msra.mxu0 0.0
  %254 = vmatpush.msra.mxu0 0.0
  %255 = vmatpush.msra.mxu0 0.0
  %256 = vmatpush.msra.mxu0 0.0
  %257 = vmatpush.msra.mxu0 0.0
  %258 = vmatpush.msra.mxu0 0.0
  %259 = vmatpush.msra.mxu0 0.0
  %260 = vmatpush.msra.mxu0 0.0
  %261 = vmatpush.msra.mxu0 0.0
  %262 = vmatpush.msra.mxu0 0.0
  %263 = vmatpush.msra.mxu0 0.0
  %264 = vmatpush.msra.mxu0 0.0
  %265 = vmatpush.msra.mxu0 0.0
  %266 = vmatpush.msra.mxu0 0.0
  %267 = vmatpush.msra.mxu0 0.0
  %268 = vmatpush.msra.mxu0 %v248
  %269 = vmatmul.f32.gmra.mxu0 %v251
  %v270 = vpop.f32.mrf.mxu0
  %v271 = vadd.f32 0.0, %v270
  %272 = vdwg.mxu0
  %273 = vrot.lane.b32.xlu0 %v160, 64
  %v274 = vpop.permute.xlu0 %273
  %v277 = vsel %vm165, %v246, 0
  %279 = vmatpush.msra.mxu0 0.0
  %280 = vmatpush.msra.mxu0 0.0
  %281 = vmatpush.msra.mxu0 0.0
  %282 = vmatpush.msra.mxu0 0.0
  %283 = vmatpush.msra.mxu0 0.0
  %284 = vmatpush.msra.mxu0 0.0
  %285 = vmatpush.msra.mxu0 0.0
  %286 = vmatpush.msra.mxu0 0.0
  %287 = vmatpush.msra.mxu0 0.0
  %288 = vmatpush.msra.mxu0 0.0
  %289 = vmatpush.msra.mxu0 0.0
  %290 = vmatpush.msra.mxu0 0.0
  %291 = vmatpush.msra.mxu0 0.0
  %292 = vmatpush.msra.mxu0 0.0
  %293 = vmatpush.msra.mxu0 0.0
  %294 = vmatpush.msra.mxu0 %v274
  %295 = vmatmul.f32.gmra.mxu0 %v277
  %v296 = vpop.f32.mrf.mxu0
  %v297 = vadd.f32 0.0, %v296
  %298 = vdwg.mxu0
  %299 = vst.msk [vmem:[#allocation2] sm:$0xff] %vm165, %v271
  %300 = vst.msk [vmem:[#allocation2 + $0x8] sm:$0xff] %vm165, %v297
  %301 = vrot.lane.b32.xlu0 %v157, 120
  %v302 = vpop.permute.xlu0 %301
  %303 = vrot.lane.b32.xlu0 %v157, 88
  %v304 = vpop.permute.xlu0 %303
  %v305 = vsel %vm165, %v302, 0
  %v307 = vsel %vm165, %v304, 0
  %309 = vmatpush.xpose.msra.mxu0 0.0
  %310 = vmatpush.xpose.msra.mxu0 0.0
  %311 = vmatpush.xpose.msra.mxu0 0.0
  %312 = vmatpush.xpose.msra.mxu0 0.0
  %313 = vmatpush.xpose.msra.mxu0 0.0
  %314 = vmatpush.xpose.msra.mxu0 0.0
  %315 = vmatpush.xpose.msra.mxu0 0.0
  %316 = vmatpush.xpose.msra.mxu0 0.0
  %317 = vmatpush.xpose.msra.mxu0 0.0
  %318 = vmatpush.xpose.msra.mxu0 0.0
  %319 = vmatpush.xpose.msra.mxu0 0.0
  %320 = vmatpush.xpose.msra.mxu0 0.0
  %321 = vmatpush.xpose.msra.mxu0 0.0
  %322 = vmatpush.xpose.msra.mxu0 0.0
  %323 = vmatpush.xpose.msra.mxu0 0.0
  %324 = vmatpush.xpose.msra.mxu0 %v307
  %325 = vmatmul.f32.gmra.mxu0 %v305
  %v326 = vpop.f32.mrf.mxu0
  %v327 = vadd.f32 0.0, %v326
  %328 = vdwg.mxu0
  %329 = vrot.lane.b32.xlu0 %v160, 120
  %v330 = vpop.permute.xlu0 %329
  %331 = vrot.lane.b32.xlu0 %v160, 88
  %v332 = vpop.permute.xlu0 %331
  %v333 = vsel %vm165, %v330, 0
  %v335 = vsel %vm165, %v332, 0
  %337 = vmatpush.xpose.msra.mxu0 0.0
  %338 = vmatpush.xpose.msra.mxu0 0.0
  %339 = vmatpush.xpose.msra.mxu0 0.0
  %340 = vmatpush.xpose.msra.mxu0 0.0
  %341 = vmatpush.xpose.msra.mxu0 0.0
  %342 = vmatpush.xpose.msra.mxu0 0.0
  %343 = vmatpush.xpose.msra.mxu0 0.0
  %344 = vmatpush.xpose.msra.mxu0 0.0
  %345 = vmatpush.xpose.msra.mxu0 0.0
  %346 = vmatpush.xpose.msra.mxu0 0.0
  %347 = vmatpush.xpose.msra.mxu0 0.0
  %348 = vmatpush.xpose.msra.mxu0 0.0
  %349 = vmatpush.xpose.msra.mxu0 0.0
  %350 = vmatpush.xpose.msra.mxu0 0.0
  %351 = vmatpush.xpose.msra.mxu0 0.0
  %352 = vmatpush.xpose.msra.mxu0 %v335
  %353 = vmatmul.f32.gmra.mxu0 %v333
  %v354 = vpop.f32.mrf.mxu0
  %v355 = vadd.f32 0.0, %v354
  %356 = vdwg.mxu0
  %v357 = vmul.f32 %v327, 0.35355338
  %v358 = vmul.f32 %v355, 0.35355338
  %v359 = vadd.f32 %v357, %v219
  %v360 = vadd.f32 %v358, %v220
  %v361 = vsel %vm165, %v359, -inf
  %362 = vmax.xlane.f32.xlu0 %v361
  %v363 = vpop.xlane.xlu0 %362
  %v364 = vsel %vm165, %v360, -inf
  %365 = vmax.xlane.f32.xlu0 %v364
  %v366 = vpop.xlane.xlu0 %365
  %v367 = vsub.f32 %v359, %v363
  %v368 = vsub.f32 %v360, %v366
  %v369 = vmul.f32 %v367, 1.442695
  %v370 = vpow.pop %v369
  %v371 = vmul.f32 %v368, 1.442695
  %v372 = vpow.pop %v371
  %v373 = vsel %vm165, %v370, 0.0
  %374 = vadd.xlane.f32.xlu0 %v373
  %v375 = vpop.xlane.xlu0 %374
  %v376 = vsel %vm165, %v372, 0.0
  %377 = vadd.xlane.f32.xlu0 %v376
  %v378 = vpop.xlane.xlu0 %377
  %v379 = vrcp.pop %v375
  %v380 = vrcp.pop %v378
  %v381 = vmul.f32 %v370, %v379
  %v382 = vmul.f32 %v372, %v380
  %383 = vrot.lane.b32.xlu0 %v157, 56
  %v384 = vpop.permute.xlu0 %383
  %v387 = vsel %vm165, %v381, 0
  %389 = vmatpush.msra.mxu0 0.0
  %390 = vmatpush.msra.mxu0 0.0
  %391 = vmatpush.msra.mxu0 0.0
  %392 = vmatpush.msra.mxu0 0.0
  %393 = vmatpush.msra.mxu0 0.0
  %394 = vmatpush.msra.mxu0 0.0
  %395 = vmatpush.msra.mxu0 0.0
  %396 = vmatpush.msra.mxu0 0.0
  %397 = vmatpush.msra.mxu0 0.0
  %398 = vmatpush.msra.mxu0 0.0
  %399 = vmatpush.msra.mxu0 0.0
  %400 = vmatpush.msra.mxu0 0.0
  %401 = vmatpush.msra.mxu0 0.0
  %402 = vmatpush.msra.mxu0 0.0
  %403 = vmatpush.msra.mxu0 0.0
  %404 = vmatpush.msra.mxu0 %v384
  %405 = vmatmul.f32.gmra.mxu0 %v387
  %v406 = vpop.f32.mrf.mxu0
  %v407 = vadd.f32 0.0, %v406
  %408 = vdwg.mxu0
  %409 = vrot.lane.b32.xlu0 %v160, 56
  %v410 = vpop.permute.xlu0 %409
  %v413 = vsel %vm165, %v382, 0
  %415 = vmatpush.msra.mxu0 0.0
  %416 = vmatpush.msra.mxu0 0.0
  %417 = vmatpush.msra.mxu0 0.0
  %418 = vmatpush.msra.mxu0 0.0
  %419 = vmatpush.msra.mxu0 0.0
  %420 = vmatpush.msra.mxu0 0.0
  %421 = vmatpush.msra.mxu0 0.0
  %422 = vmatpush.msra.mxu0 0.0
  %423 = vmatpush.msra.mxu0 0.0
  %424 = vmatpush.msra.mxu0 0.0
  %425 = vmatpush.msra.mxu0 0.0
  %426 = vmatpush.msra.mxu0 0.0
  %427 = vmatpush.msra.mxu0 0.0
  %428 = vmatpush.msra.mxu0 0.0
  %429 = vmatpush.msra.mxu0 0.0
  %430 = vmatpush.msra.mxu0 %v410
  %431 = vmatmul.f32.gmra.mxu0 %v413
  %v432 = vpop.f32.mrf.mxu0
  %v433 = vadd.f32 0.0, %v432
  %434 = vdwg.mxu0
  %437 = vrot.lane.b32.xlu0 %v407, 8
  %v438 = vpop.permute.xlu0 %437
  %439 = vrot.lane.b32.xlu0 %v433, 8
  %v440 = vpop.permute.xlu0 %439
  %vm443 = vcmask 130112
  %444 = vst.msk [vmem:[#allocation2] sm:$0xff] %vm443, %v438
  %445 = vst.msk [vmem:[#allocation2 + $0x8] sm:$0xff] %vm443, %v440
  %446 = vrot.lane.b32.xlu0 %v157, 112
  %v447 = vpop.permute.xlu0 %446
  %448 = vrot.lane.b32.xlu0 %v157, 80
  %v449 = vpop.permute.xlu0 %448
  %v450 = vsel %vm165, %v447, 0
  %v452 = vsel %vm165, %v449, 0
  %454 = vmatpush.xpose.msra.mxu0 0.0
  %455 = vmatpush.xpose.msra.mxu0 0.0
  %456 = vmatpush.xpose.msra.mxu0 0.0
  %457 = vmatpush.xpose.msra.mxu0 0.0
  %458 = vmatpush.xpose.msra.mxu0 0.0
  %459 = vmatpush.xpose.msra.mxu0 0.0
  %460 = vmatpush.xpose.msra.mxu0 0.0
  %461 = vmatpush.xpose.msra.mxu0 0.0
  %462 = vmatpush.xpose.msra.mxu0 0.0
  %463 = vmatpush.xpose.msra.mxu0 0.0
  %464 = vmatpush.xpose.msra.mxu0 0.0
  %465 = vmatpush.xpose.msra.mxu0 0.0
  %466 = vmatpush.xpose.msra.mxu0 0.0
  %467 = vmatpush.xpose.msra.mxu0 0.0
  %468 = vmatpush.xpose.msra.mxu0 0.0
  %469 = vmatpush.xpose.msra.mxu0 %v452
  %470 = vmatmul.f32.gmra.mxu0 %v450
  %v471 = vpop.f32.mrf.mxu0
  %v472 = vadd.f32 0.0, %v471
  %473 = vdwg.mxu0
  %474 = vrot.lane.b32.xlu0 %v160, 112
  %v475 = vpop.permute.xlu0 %474
  %476 = vrot.lane.b32.xlu0 %v160, 80
  %v477 = vpop.permute.xlu0 %476
  %v478 = vsel %vm165, %v475, 0
  %v480 = vsel %vm165, %v477, 0
  %482 = vmatpush.xpose.msra.mxu0 0.0
  %483 = vmatpush.xpose.msra.mxu0 0.0
  %484 = vmatpush.xpose.msra.mxu0 0.0
  %485 = vmatpush.xpose.msra.mxu0 0.0
  %486 = vmatpush.xpose.msra.mxu0 0.0
  %487 = vmatpush.xpose.msra.mxu0 0.0
  %488 = vmatpush.xpose.msra.mxu0 0.0
  %489 = vmatpush.xpose.msra.mxu0 0.0
  %490 = vmatpush.xpose.msra.mxu0 0.0
  %491 = vmatpush.xpose.msra.mxu0 0.0
  %492 = vmatpush.xpose.msra.mxu0 0.0
  %493 = vmatpush.xpose.msra.mxu0 0.0
  %494 = vmatpush.xpose.msra.mxu0 0.0
  %495 = vmatpush.xpose.msra.mxu0 0.0
  %496 = vmatpush.xpose.msra.mxu0 0.0
  %497 = vmatpush.xpose.msra.mxu0 %v480
  %498 = vmatmul.f32.gmra.mxu0 %v478
  %v499 = vpop.f32.mrf.mxu0
  %v500 = vadd.f32 0.0, %v499
  %501 = vdwg.mxu0
  %v502 = vmul.f32 %v472, 0.35355338
  %v503 = vmul.f32 %v500, 0.35355338
  %v504 = vadd.f32 %v502, %v219
  %v505 = vadd.f32 %v503, %v220
  %v506 = vsel %vm165, %v504, -inf
  %507 = vmax.xlane.f32.xlu0 %v506
  %v508 = vpop.xlane.xlu0 %507
  %v509 = vsel %vm165, %v505, -inf
  %510 = vmax.xlane.f32.xlu0 %v509
  %v511 = vpop.xlane.xlu0 %510
  %v512 = vsub.f32 %v504, %v508
  %v513 = vsub.f32 %v505, %v511
  %v514 = vmul.f32 %v512, 1.442695
  %v515 = vpow.pop %v514
  %v516 = vmul.f32 %v513, 1.442695
  %v517 = vpow.pop %v516
  %v518 = vsel %vm165, %v515, 0.0
  %519 = vadd.xlane.f32.xlu0 %v518
  %v520 = vpop.xlane.xlu0 %519
  %v521 = vsel %vm165, %v517, 0.0
  %522 = vadd.xlane.f32.xlu0 %v521
  %v523 = vpop.xlane.xlu0 %522
  %v524 = vrcp.pop %v520
  %v525 = vrcp.pop %v523
  %v526 = vmul.f32 %v515, %v524
  %v527 = vmul.f32 %v517, %v525
  %528 = vrot.lane.b32.xlu0 %v157, 48
  %v529 = vpop.permute.xlu0 %528
  %v532 = vsel %vm165, %v526, 0
  %534 = vmatpush.msra.mxu0 0.0
  %535 = vmatpush.msra.mxu0 0.0
  %536 = vmatpush.msra.mxu0 0.0
  %537 = vmatpush.msra.mxu0 0.0
  %538 = vmatpush.msra.mxu0 0.0
  %539 = vmatpush.msra.mxu0 0.0
  %540 = vmatpush.msra.mxu0 0.0
  %541 = vmatpush.msra.mxu0 0.0
  %542 = vmatpush.msra.mxu0 0.0
  %543 = vmatpush.msra.mxu0 0.0
  %544 = vmatpush.msra.mxu0 0.0
  %545 = vmatpush.msra.mxu0 0.0
  %546 = vmatpush.msra.mxu0 0.0
  %547 = vmatpush.msra.mxu0 0.0
  %548 = vmatpush.msra.mxu0 0.0
  %549 = vmatpush.msra.mxu0 %v529
  %550 = vmatmul.f32.gmra.mxu0 %v532
  %v551 = vpop.f32.mrf.mxu0
  %v552 = vadd.f32 0.0, %v551
  %553 = vdwg.mxu0
  %554 = vrot.lane.b32.xlu0 %v160, 48
  %v555 = vpop.permute.xlu0 %554
  %v558 = vsel %vm165, %v527, 0
  %560 = vmatpush.msra.mxu0 0.0
  %561 = vmatpush.msra.mxu0 0.0
  %562 = vmatpush.msra.mxu0 0.0
  %563 = vmatpush.msra.mxu0 0.0
  %564 = vmatpush.msra.mxu0 0.0
  %565 = vmatpush.msra.mxu0 0.0
  %566 = vmatpush.msra.mxu0 0.0
  %567 = vmatpush.msra.mxu0 0.0
  %568 = vmatpush.msra.mxu0 0.0
  %569 = vmatpush.msra.mxu0 0.0
  %570 = vmatpush.msra.mxu0 0.0
  %571 = vmatpush.msra.mxu0 0.0
  %572 = vmatpush.msra.mxu0 0.0
  %573 = vmatpush.msra.mxu0 0.0
  %574 = vmatpush.msra.mxu0 0.0
  %575 = vmatpush.msra.mxu0 %v555
  %576 = vmatmul.f32.gmra.mxu0 %v558
  %v577 = vpop.f32.mrf.mxu0
  %v578 = vadd.f32 0.0, %v577
  %579 = vdwg.mxu0
  %582 = vrot.lane.b32.xlu0 %v552, 16
  %v583 = vpop.permute.xlu0 %582
  %584 = vrot.lane.b32.xlu0 %v578, 16
  %v585 = vpop.permute.xlu0 %584
  %vm588 = vcmask 195712
  %589 = vst.msk [vmem:[#allocation2] sm:$0xff] %vm588, %v583
  %590 = vst.msk [vmem:[#allocation2 + $0x8] sm:$0xff] %vm588, %v585
  %591 = vrot.lane.b32.xlu0 %v157, 104
  %v592 = vpop.permute.xlu0 %591
  %593 = vrot.lane.b32.xlu0 %v157, 72
  %v594 = vpop.permute.xlu0 %593
  %v595 = vsel %vm165, %v592, 0
  %v597 = vsel %vm165, %v594, 0
  %599 = vmatpush.xpose.msra.mxu0 0.0
  %600 = vmatpush.xpose.msra.mxu0 0.0
  %601 = vmatpush.xpose.msra.mxu0 0.0
  %602 = vmatpush.xpose.msra.mxu0 0.0
  %603 = vmatpush.xpose.msra.mxu0 0.0
  %604 = vmatpush.xpose.msra.mxu0 0.0
  %605 = vmatpush.xpose.msra.mxu0 0.0
  %606 = vmatpush.xpose.msra.mxu0 0.0
  %607 = vmatpush.xpose.msra.mxu0 0.0
  %608 = vmatpush.xpose.msra.mxu0 0.0
  %609 = vmatpush.xpose.msra.mxu0 0.0
  %610 = vmatpush.xpose.msra.mxu0 0.0
  %611 = vmatpush.xpose.msra.mxu0 0.0
  %612 = vmatpush.xpose.msra.mxu0 0.0
  %613 = vmatpush.xpose.msra.mxu0 0.0
  %614 = vmatpush.xpose.msra.mxu0 %v597
  %615 = vmatmul.f32.gmra.mxu0 %v595
  %v616 = vpop.f32.mrf.mxu0
  %v617 = vadd.f32 0.0, %v616
  %618 = vdwg.mxu0
  %619 = vrot.lane.b32.xlu0 %v160, 104
  %v620 = vpop.permute.xlu0 %619
  %621 = vrot.lane.b32.xlu0 %v160, 72
  %v622 = vpop.permute.xlu0 %621
  %v623 = vsel %vm165, %v620, 0
  %v625 = vsel %vm165, %v622, 0
  %627 = vmatpush.xpose.msra.mxu0 0.0
  %628 = vmatpush.xpose.msra.mxu0 0.0
  %629 = vmatpush.xpose.msra.mxu0 0.0
  %630 = vmatpush.xpose.msra.mxu0 0.0
  %631 = vmatpush.xpose.msra.mxu0 0.0
  %632 = vmatpush.xpose.msra.mxu0 0.0
  %633 = vmatpush.xpose.msra.mxu0 0.0
  %634 = vmatpush.xpose.msra.mxu0 0.0
  %635 = vmatpush.xpose.msra.mxu0 0.0
  %636 = vmatpush.xpose.msra.mxu0 0.0
  %637 = vmatpush.xpose.msra.mxu0 0.0
  %638 = vmatpush.xpose.msra.mxu0 0.0
  %639 = vmatpush.xpose.msra.mxu0 0.0
  %640 = vmatpush.xpose.msra.mxu0 0.0
  %641 = vmatpush.xpose.msra.mxu0 0.0
  %642 = vmatpush.xpose.msra.mxu0 %v625
  %643 = vmatmul.f32.gmra.mxu0 %v623
  %v644 = vpop.f32.mrf.mxu0
  %v645 = vadd.f32 0.0, %v644
  %646 = vdwg.mxu0
  %v647 = vmul.f32 %v617, 0.35355338
  %v648 = vmul.f32 %v645, 0.35355338
  %v649 = vadd.f32 %v647, %v219
  %v650 = vadd.f32 %v648, %v220
  %v651 = vsel %vm165, %v649, -inf
  %652 = vmax.xlane.f32.xlu0 %v651
  %v653 = vpop.xlane.xlu0 %652
  %v654 = vsel %vm165, %v650, -inf
  %655 = vmax.xlane.f32.xlu0 %v654
  %v656 = vpop.xlane.xlu0 %655
  %v657 = vsub.f32 %v649, %v653
  %v658 = vsub.f32 %v650, %v656
  %v659 = vmul.f32 %v657, 1.442695
  %v660 = vpow.pop %v659
  %v661 = vmul.f32 %v658, 1.442695
  %v662 = vpow.pop %v661
  %v663 = vsel %vm165, %v660, 0.0
  %664 = vadd.xlane.f32.xlu0 %v663
  %v665 = vpop.xlane.xlu0 %664
  %v666 = vsel %vm165, %v662, 0.0
  %667 = vadd.xlane.f32.xlu0 %v666
  %v668 = vpop.xlane.xlu0 %667
  %v669 = vrcp.pop %v665
  %v670 = vrcp.pop %v668
  %v671 = vmul.f32 %v660, %v669
  %v672 = vmul.f32 %v662, %v670
  %673 = vrot.lane.b32.xlu0 %v157, 40
  %v674 = vpop.permute.xlu0 %673
  %v677 = vsel %vm165, %v671, 0
  %679 = vmatpush.msra.mxu0 0.0
  %680 = vmatpush.msra.mxu0 0.0
  %681 = vmatpush.msra.mxu0 0.0
  %682 = vmatpush.msra.mxu0 0.0
  %683 = vmatpush.msra.mxu0 0.0
  %684 = vmatpush.msra.mxu0 0.0
  %685 = vmatpush.msra.mxu0 0.0
  %686 = vmatpush.msra.mxu0 0.0
  %687 = vmatpush.msra.mxu0 0.0
  %688 = vmatpush.msra.mxu0 0.0
  %689 = vmatpush.msra.mxu0 0.0
  %690 = vmatpush.msra.mxu0 0.0
  %691 = vmatpush.msra.mxu0 0.0
  %692 = vmatpush.msra.mxu0 0.0
  %693 = vmatpush.msra.mxu0 0.0
  %694 = vmatpush.msra.mxu0 %v674
  %695 = vmatmul.f32.gmra.mxu0 %v677
  %v696 = vpop.f32.mrf.mxu0
  %v697 = vadd.f32 0.0, %v696
  %698 = vdwg.mxu0
  %699 = vrot.lane.b32.xlu0 %v160, 40
  %v700 = vpop.permute.xlu0 %699
  %v703 = vsel %vm165, %v672, 0
  %705 = vmatpush.msra.mxu0 0.0
  %706 = vmatpush.msra.mxu0 0.0
  %707 = vmatpush.msra.mxu0 0.0
  %708 = vmatpush.msra.mxu0 0.0
  %709 = vmatpush.msra.mxu0 0.0
  %710 = vmatpush.msra.mxu0 0.0
  %711 = vmatpush.msra.mxu0 0.0
  %712 = vmatpush.msra.mxu0 0.0
  %713 = vmatpush.msra.mxu0 0.0
  %714 = vmatpush.msra.mxu0 0.0
  %715 = vmatpush.msra.mxu0 0.0
  %716 = vmatpush.msra.mxu0 0.0
  %717 = vmatpush.msra.mxu0 0.0
  %718 = vmatpush.msra.mxu0 0.0
  %719 = vmatpush.msra.mxu0 0.0
  %720 = vmatpush.msra.mxu0 %v700
  %721 = vmatmul.f32.gmra.mxu0 %v703
  %v722 = vpop.f32.mrf.mxu0
  %v723 = vadd.f32 0.0, %v722
  %724 = vdwg.mxu0
  %727 = vrot.lane.b32.xlu0 %v697, 24
  %v728 = vpop.permute.xlu0 %727
  %729 = vrot.lane.b32.xlu0 %v723, 24
  %v730 = vpop.permute.xlu0 %729
  %vm733 = vcmask 261312
  %734 = vst.msk [vmem:[#allocation2] sm:$0xff] %vm733, %v728
  %735 = vst.msk [vmem:[#allocation2 + $0x8] sm:$0xff] %vm733, %v730
  %v736 = vld [vmem:[#allocation2] sm:$0xff]
  %v737 = vld [vmem:[#allocation2 + $0x8] sm:$0xff]
  %742 = vrot.lane.b32.xlu0 %v103, 32
  %v743 = vpop.permute.xlu0 %742
  %744 = vrot.lane.b32.xlu0 %v104, 32
  %v745 = vpop.permute.xlu0 %744
  %746 = vrot.lane.b32.xlu0 %v105, 32
  %v747 = vpop.permute.xlu0 %746
  %748 = vrot.lane.b32.xlu0 %v106, 32
  %v749 = vpop.permute.xlu0 %748
  %754 = vrot.lane.b32.xlu0 %v131, 32
  %v755 = vpop.permute.xlu0 %754
  %v758 = vsel %vm42, %v736, 0
  %v761 = vsel %vm42, %v737, 0
  %763 = vmatpush.msra.mxu0 0.0
  %764 = vmatpush.msra.mxu0 0.0
  %765 = vmatpush.msra.mxu0 0.0
  %766 = vmatpush.msra.mxu0 0.0
  %767 = vmatpush.msra.mxu0 0.0
  %768 = vmatpush.msra.mxu0 0.0
  %769 = vmatpush.msra.mxu0 0.0
  %770 = vmatpush.msra.mxu0 0.0
  %771 = vmatpush.msra.mxu0 0.0
  %772 = vmatpush.msra.mxu0 0.0
  %773 = vmatpush.msra.mxu0 0.0
  %774 = vmatpush.msra.mxu0 0.0
  %775 = vmatpush.msra.mxu0 %v749
  %776 = vmatpush.msra.mxu0 %v747
  %777 = vmatpush.msra.mxu0 %v745
  %778 = vmatpush.msra.mxu0 %v743
  %779 = vmatmul.f32.gmra.mxu0 %v758
  %v780 = vpop.f32.mrf.mxu0
  %v781 = vadd.f32 %v755, %v780
  %782 = vmatmul.f32.gmra.mxu0 %v761
  %v783 = vpop.f32.mrf.mxu0
  %v784 = vadd.f32 %v755, %v783
  %785 = vdwg.mxu0
  %v786 = vadd.f32 %v781, %v98
  %v787 = vadd.f32 %v784, %v99
  %v788 = vld [vmem:[%s2 + $0x1] sm:$0x1]
  %v789 = vld [vmem:[%s3 + $0x1] sm:$0x1]
  %v790 = vsel %vm42, %v786, 0.0
  %791 = vadd.xlane.f32.xlu0 %v790
  %v792 = vpop.xlane.xlu0 %791
  %v793 = vsel %vm42, %v787, 0.0
  %794 = vadd.xlane.f32.xlu0 %v793
  %v795 = vpop.xlane.xlu0 %794
  %v796 = vmul.f32 %v792, %v55
  %v797 = vmul.f32 %v795, %v55
  %v798 = vsub.f32 %v786, %v796
  %v799 = vsub.f32 %v787, %v797
  %v800 = vmul.f32 %v798, %v798
  %v801 = vmul.f32 %v799, %v799
  %v802 = vsel %vm42, %v800, 0.0
  %803 = vadd.xlane.f32.xlu0 %v802
  %v804 = vpop.xlane.xlu0 %803
  %v805 = vsel %vm42, %v801, 0.0
  %806 = vadd.xlane.f32.xlu0 %v805
  %v807 = vpop.xlane.xlu0 %806
  %v808 = vmul.f32 %v804, %v55
  %v809 = vmul.f32 %v807, %v55
  %v810 = vadd.f32 %v808, 1e-12
  %v811 = vadd.f32 %v809, 1e-12
  %v812 = vrsqrt.pop %v810
  %v813 = vmul.f32 %v812, %v810
  %v814 = vmul.f32 %v813, %v812
  %v815 = vmul.f32 0.5, %v814
  %v816 = vsub.f32 1.5, %v815
  %v817 = vmul.f32 %v812, %v816
  %vm818 = vweird.f32 %v810
  %vm819 = vweird.f32 %v812
  %vm820 = vmor %vm818, %vm819
  %v821 = vsel %vm820, %v812, %v817
  %v822 = vrsqrt.pop %v811
  %v823 = vmul.f32 %v822, %v811
  %v824 = vmul.f32 %v823, %v822
  %v825 = vmul.f32 0.5, %v824
  %v826 = vsub.f32 1.5, %v825
  %v827 = vmul.f32 %v822, %v826
  %vm828 = vweird.f32 %v811
  %vm829 = vweird.f32 %v822
  %vm830 = vmor %vm828, %vm829
  %v831 = vsel %vm830, %v822, %v827
  %v832 = vmul.f32 %v798, %v821
  %v833 = vmul.f32 %v799, %v831
  %v834 = vperm.slane %v788, 0
  %v835 = vmul.f32 %v832, %v834
  %v836 = vmul.f32 %v833, %v834
  %v837 = vperm.slane %v789, 0
  %v838 = vadd.f32 %v835, %v837
  %v839 = vadd.f32 %v836, %v837
  %v841 = vperm.slane %v112, 0
  %v844 = vsel %vm42, %v838, 0
  %v847 = vsel %vm42, %v839, 0
  %849 = vmatpush.msra.mxu0 0.0
  %850 = vmatpush.msra.mxu0 0.0
  %851 = vmatpush.msra.mxu0 0.0
  %852 = vmatpush.msra.mxu0 0.0
  %853 = vmatpush.msra.mxu0 0.0
  %854 = vmatpush.msra.mxu0 0.0
  %855 = vmatpush.msra.mxu0 0.0
  %856 = vmatpush.msra.mxu0 0.0
  %857 = vmatpush.msra.mxu0 0.0
  %858 = vmatpush.msra.mxu0 0.0
  %859 = vmatpush.msra.mxu0 0.0
  %860 = vmatpush.msra.mxu0 0.0
  %861 = vmatpush.msra.mxu0 %v110
  %862 = vmatpush.msra.mxu0 %v109
  %863 = vmatpush.msra.mxu0 %v108
  %864 = vmatpush.msra.mxu0 %v107
  %865 = vmatmul.f32.gmra.mxu0 %v844
  %v866 = vpop.f32.mrf.mxu0
  %v867 = vadd.f32 %v841, %v866
  %868 = vmatmul.f32.gmra.mxu0 %v847
  %v869 = vpop.f32.mrf.mxu0
  %v870 = vadd.f32 %v841, %v869
  %871 = vdwg.mxu0
  %v872 = vmul.f32 %v867, 0.5
  %v873 = vmul.f32 %v870, 0.5
  %v874 = vmul.f32 %v867, 0.70710677
  %v875 = vmul.f32 %v870, 0.70710677
  %v876 = vmul.f32 %v874, %v874
  %v877 = vmin.f32 16.0, %v876
  %v878 = vmul.f32 %v877, 2.1237322e-06
  %v879 = vadd.f32 %v878, 0.00028619796
  %v880 = vmul.f32 %v877, %v879
  %v881 = vadd.f32 %v880, 0.0036580483
  %v882 = vmul.f32 %v877, %v881
  %v883 = vadd.f32 %v882, 0.05243302
  %v884 = vmul.f32 %v877, %v883
  %v885 = vadd.f32 %v884, 0.18741608
  %v886 = vmul.f32 %v877, %v885
  %v887 = vadd.f32 %v886, 1.1283791
  %v888 = vmul.f32 %v874, %v887
  %v889 = vmul.f32 %v877, 3.8918573e-05
  %v890 = vadd.f32 %v889, 0.001143296
  %v891 = vmul.f32 %v877, %v890
  %v892 = vadd.f32 %v891, 0.014752088
  %v893 = vmul.f32 %v877, %v892
  %v894 = vadd.f32 %v893, 0.112945676
  %v895 = vmul.f32 %v877, %v894
  %v896 = vadd.f32 %v895, 0.4994258
  %v897 = vmul.f32 %v877, %v896
  %v898 = vadd.f32 %v897, 1.0
  %v899 = vrcp.pop %v898
  %v900 = vmul.f32 %v898, %v899
  %v901 = vsub.f32 1.0, %v900
  %v902 = vmul.f32 %v899, %v901
  %v903 = vadd.f32 %v899, %v902
  %vm904 = vweird.f32 %v898
  %vm905 = vweird.f32 %v899
  %vm906 = vmor %vm904, %vm905
  %v907 = vsel %vm906, %v899, %v903
  %v908 = vand.u32 2147483647, %v898
  %vm909 = vcmp.eq.f32.partialorder %v908, 8.507059e+37
  %v910 = vand.u32 %v898, 2147483648
  %v911 = vor.u32 1.1754944e-38, %v910
  %v912 = vsel %vm909, %v911, %v907
  %v913 = vmul.f32 %v888, %v912
  %v914 = vmin.f32 %v913, 1.0
  %v915 = vmax.f32 %v914, -1.0
  %v916 = vmul.f32 %v875, %v875
  %v917 = vmin.f32 16.0, %v916
  %v918 = vmul.f32 %v917, 2.1237322e-06
  %v919 = vadd.f32 %v918, 0.00028619796
  %v920 = vmul.f32 %v917, %v919
  %v921 = vadd.f32 %v920, 0.0036580483
  %v922 = vmul.f32 %v917, %v921
  %v923 = vadd.f32 %v922, 0.05243302
  %v924 = vmul.f32 %v917, %v923
  %v925 = vadd.f32 %v924, 0.18741608
  %v926 = vmul.f32 %v917, %v925
  %v927 = vadd.f32 %v926, 1.1283791
  %v928 = vmul.f32 %v875, %v927
  %v929 = vmul.f32 %v917, 3.8918573e-05
  %v930 = vadd.f32 %v929, 0.001143296
  %v931 = vmul.f32 %v917, %v930
  %v932 = vadd.f32 %v931, 0.014752088
  %v933 = vmul.f32 %v917, %v932
  %v934 = vadd.f32 %v933, 0.112945676
  %v935 = vmul.f32 %v917, %v934
  %v936 = vadd.f32 %v935, 0.4994258
  %v937 = vmul.f32 %v917, %v936
  %v938 = vadd.f32 %v937, 1.0
  %v939 = vrcp.pop %v938
  %v940 = vmul.f32 %v938, %v939
  %v941 = vsub.f32 1.0, %v940
  %v942 = vmul.f32 %v939, %v941
  %v943 = vadd.f32 %v939, %v942
  %vm944 = vweird.f32 %v938
  %vm945 = vweird.f32 %v939
  %vm946 = vmor %vm944, %vm945
  %v947 = vsel %vm946, %v939, %v943
  %v948 = vand.u32 2147483647, %v938
  %vm949 = vcmp.eq.f32.partialorder %v948, 8.507059e+37
  %v950 = vand.u32 %v938, 2147483648
  %v951 = vor.u32 1.1754944e-38, %v950
  %v952 = vsel %vm949, %v951, %v947
  %v953 = vmul.f32 %v928, %v952
  %v954 = vmin.f32 %v953, 1.0
  %v955 = vmax.f32 %v954, -1.0
  %v956 = vadd.f32 %v915, 1.0
  %v957 = vadd.f32 %v955, 1.0
  %v958 = vmul.f32 %v872, %v956
  %v959 = vmul.f32 %v873, %v957
  %v961 = vperm.slane %v129, 0
  %963 = vmatpush.msra.mxu0 %v128
  %964 = vmatpush.msra.mxu0 %v127
  %965 = vmatpush.msra.mxu0 %v126
  %966 = vmatpush.msra.mxu0 %v125
  %967 = vmatpush.msra.mxu0 %v124
  %968 = vmatpush.msra.mxu0 %v123
  %969 = vmatpush.msra.mxu0 %v122
  %970 = vmatpush.msra.mxu0 %v121
  %971 = vmatpush.msra.mxu0 %v120
  %972 = vmatpush.msra.mxu0 %v119
  %973 = vmatpush.msra.mxu0 %v118
  %974 = vmatpush.msra.mxu0 %v117
  %975 = vmatpush.msra.mxu0 %v116
  %976 = vmatpush.msra.mxu0 %v115
  %977 = vmatpush.msra.mxu0 %v114
  %978 = vmatpush.msra.mxu0 %v113
  %979 = vmatmul.f32.gmra.mxu0 %v958
  %v980 = vpop.f32.mrf.mxu0
  %v981 = vadd.f32 %v961, %v980
  %982 = vmatmul.f32.gmra.mxu0 %v959
  %v983 = vpop.f32.mrf.mxu0
  %v984 = vadd.f32 %v961, %v983
  %985 = vdwg.mxu0
  %v986 = vadd.f32 %v981, %v838
  %v987 = vadd.f32 %v984, %v839
  %v988 = vld [vmem:[%s2 + $0x2] sm:$0x1]
  %v989 = vld [vmem:[%s3 + $0x2] sm:$0x1]
  %v990 = vsel %vm42, %v986, 0.0
  %991 = vadd.xlane.f32.xlu0 %v990
  %v992 = vpop.xlane.xlu0 %991
  %v993 = vsel %vm42, %v987, 0.0
  %994 = vadd.xlane.f32.xlu0 %v993
  %v995 = vpop.xlane.xlu0 %994
  %v996 = vmul.f32 %v992, %v55
  %v997 = vmul.f32 %v995, %v55
  %v998 = vsub.f32 %v986, %v996
  %v999 = vsub.f32 %v987, %v997
  %v1000 = vmul.f32 %v998, %v998
  %v1001 = vmul.f32 %v999, %v999
  %v1002 = vsel %vm42, %v1000, 0.0
  %1003 = vadd.xlane.f32.xlu0 %v1002
  %v1004 = vpop.xlane.xlu0 %1003
  %v1005 = vsel %vm42, %v1001, 0.0
  %1006 = vadd.xlane.f32.xlu0 %v1005
  %v1007 = vpop.xlane.xlu0 %1006
  %v1008 = vmul.f32 %v1004, %v55
  %v1009 = vmul.f32 %v1007, %v55
  %v1010 = vadd.f32 %v1008, 1e-12
  %v1011 = vadd.f32 %v1009, 1e-12
  %v1012 = vrsqrt.pop %v1010
  %v1013 = vmul.f32 %v1012, %v1010
  %v1014 = vmul.f32 %v1013, %v1012
  %v1015 = vmul.f32 0.5, %v1014
  %v1016 = vsub.f32 1.5, %v1015
  %v1017 = vmul.f32 %v1012, %v1016
  %vm1018 = vweird.f32 %v1010
  %vm1019 = vweird.f32 %v1012
  %vm1020 = vmor %vm1018, %vm1019
  %v1021 = vsel %vm1020, %v1012, %v1017
  %v1022 = vrsqrt.pop %v1011
  %v1023 = vmul.f32 %v1022, %v1011
  %v1024 = vmul.f32 %v1023, %v1022
  %v1025 = vmul.f32 0.5, %v1024
  %v1026 = vsub.f32 1.5, %v1025
  %v1027 = vmul.f32 %v1022, %v1026
  %vm1028 = vweird.f32 %v1011
  %vm1029 = vweird.f32 %v1022
  %vm1030 = vmor %vm1028, %vm1029
  %v1031 = vsel %vm1030, %v1022, %v1027
  %v1032 = vmul.f32 %v998, %v1021
  %v1033 = vmul.f32 %v999, %v1031
  %v1034 = vperm.slane %v988, 0
  %v1035 = vmul.f32 %v1032, %v1034
  %v1036 = vmul.f32 %v1033, %v1034
  %v1037 = vperm.slane %v989, 0
  %v1038 = vadd.f32 %v1035, %v1037
  %v1039 = vadd.f32 %v1036, %v1037
  %s1040 = scalar_lea.vmem %s4, 64
  %v1041 = vld [vmem:[%s1040] sm:$0xff]
  %v1042 = vld [vmem:[%s1040 + $0x10] sm:$0xff]
  %v1043 = vld [vmem:[%s1040 + $0x20] sm:$0xff]
  %v1044 = vld [vmem:[%s1040 + $0x30] sm:$0xff]
  %v1045 = vld [vmem:[%s1040 + $0x8] sm:$0xff]
  %v1046 = vld [vmem:[%s1040 + $0x18] sm:$0xff]
  %v1047 = vld [vmem:[%s1040 + $0x28] sm:$0xff]
  %v1048 = vld [vmem:[%s1040 + $0x38] sm:$0xff]
  %s1049 = scalar_lea.vmem %s5, 2
  %v1050 = vld [vmem:[%s1049] sm:$0x1]
  %v1051 = vld [vmem:[%s1049 + $0x1] sm:$0x1]
  %s1052 = scalar_lea.vmem %s6, 128
  %v1053 = vld [vmem:[%s1052] sm:$0xff]
  %v1054 = vld [vmem:[%s1052 + $0x8] sm:$0xff]
  %v1055 = vld [vmem:[%s1052 + $0x10] sm:$0xff]
  %v1056 = vld [vmem:[%s1052 + $0x18] sm:$0xff]
  %v1057 = vld [vmem:[%s1052 + $0x20] sm:$0xff]
  %v1058 = vld [vmem:[%s1052 + $0x28] sm:$0xff]
  %v1059 = vld [vmem:[%s1052 + $0x30] sm:$0xff]
  %v1060 = vld [vmem:[%s1052 + $0x38] sm:$0xff]
  %v1061 = vld [vmem:[%s1052 + $0x40] sm:$0xff]
  %v1062 = vld [vmem:[%s1052 + $0x48] sm:$0xff]
  %v1063 = vld [vmem:[%s1052 + $0x50] sm:$0xff]
  %v1064 = vld [vmem:[%s1052 + $0x58] sm:$0xff]
  %v1065 = vld [vmem:[%s1052 + $0x60] sm:$0xff]
  %v1066 = vld [vmem:[%s1052 + $0x68] sm:$0xff]
  %v1067 = vld [vmem:[%s1052 + $0x70] sm:$0xff]
  %v1068 = vld [vmem:[%s1052 + $0x78] sm:$0xff]
  %s1069 = scalar_lea.vmem %s7, 1
  %v1070 = vld [vmem:[%s1069] sm:$0x1]
  %v1072 = vperm.slane %v1050, 0
  %v1075 = vsel %vm42, %v1038, 0
  %v1078 = vsel %vm42, %v1039, 0
  %1080 = vmatpush.msra.mxu0 0.0
  %1081 = vmatpush.msra.mxu0 0.0
  %1082 = vmatpush.msra.mxu0 0.0
  %1083 = vmatpush.msra.mxu0 0.0
  %1084 = vmatpush.msra.mxu0 0.0
  %1085 = vmatpush.msra.mxu0 0.0
  %1086 = vmatpush.msra.mxu0 0.0
  %1087 = vmatpush.msra.mxu0 0.0
  %1088 = vmatpush.msra.mxu0 0.0
  %1089 = vmatpush.msra.mxu0 0.0
  %1090 = vmatpush.msra.mxu0 0.0
  %1091 = vmatpush.msra.mxu0 0.0
  %1092 = vmatpush.msra.mxu0 %v1044
  %1093 = vmatpush.msra.mxu0 %v1043
  %1094 = vmatpush.msra.mxu0 %v1042
  %1095 = vmatpush.msra.mxu0 %v1041
  %1096 = vmatmul.f32.gmra.mxu0 %v1075
  %v1097 = vpop.f32.mrf.mxu0
  %v1098 = vadd.f32 %v1072, %v1097
  %1099 = vmatmul.f32.gmra.mxu0 %v1078
  %v1100 = vpop.f32.mrf.mxu0
  %v1101 = vadd.f32 %v1072, %v1100
  %1102 = vdwg.mxu0
  %1104 = vrot.lane.b32.xlu0 %v1098, 96
  %v1105 = vpop.permute.xlu0 %1104
  %v1106 = vsel %vm165, %v1098, 0
  %v1108 = vsel %vm165, %v1105, 0
  %1110 = vmatpush.xpose.msra.mxu0 0.0
  %1111 = vmatpush.xpose.msra.mxu0 0.0
  %1112 = vmatpush.xpose.msra.mxu0 0.0
  %1113 = vmatpush.xpose.msra.mxu0 0.0
  %1114 = vmatpush.xpose.msra.mxu0 0.0
  %1115 = vmatpush.xpose.msra.mxu0 0.0
  %1116 = vmatpush.xpose.msra.mxu0 0.0
  %1117 = vmatpush.xpose.msra.mxu0 0.0
  %1118 = vmatpush.xpose.msra.mxu0 0.0
  %1119 = vmatpush.xpose.msra.mxu0 0.0
  %1120 = vmatpush.xpose.msra.mxu0 0.0
  %1121 = vmatpush.xpose.msra.mxu0 0.0
  %1122 = vmatpush.xpose.msra.mxu0 0.0
  %1123 = vmatpush.xpose.msra.mxu0 0.0
  %1124 = vmatpush.xpose.msra.mxu0 0.0
  %1125 = vmatpush.xpose.msra.mxu0 %v1108
  %1126 = vmatmul.f32.gmra.mxu0 %v1106
  %v1127 = vpop.f32.mrf.mxu0
  %v1128 = vadd.f32 0.0, %v1127
  %1129 = vdwg.mxu0
  %1131 = vrot.lane.b32.xlu0 %v1101, 96
  %v1132 = vpop.permute.xlu0 %1131
  %v1133 = vsel %vm165, %v1101, 0
  %v1135 = vsel %vm165, %v1132, 0
  %1137 = vmatpush.xpose.msra.mxu0 0.0
  %1138 = vmatpush.xpose.msra.mxu0 0.0
  %1139 = vmatpush.xpose.msra.mxu0 0.0
  %1140 = vmatpush.xpose.msra.mxu0 0.0
  %1141 = vmatpush.xpose.msra.mxu0 0.0
  %1142 = vmatpush.xpose.msra.mxu0 0.0
  %1143 = vmatpush.xpose.msra.mxu0 0.0
  %1144 = vmatpush.xpose.msra.mxu0 0.0
  %1145 = vmatpush.xpose.msra.mxu0 0.0
  %1146 = vmatpush.xpose.msra.mxu0 0.0
  %1147 = vmatpush.xpose.msra.mxu0 0.0
  %1148 = vmatpush.xpose.msra.mxu0 0.0
  %1149 = vmatpush.xpose.msra.mxu0 0.0
  %1150 = vmatpush.xpose.msra.mxu0 0.0
  %1151 = vmatpush.xpose.msra.mxu0 0.0
  %1152 = vmatpush.xpose.msra.mxu0 %v1135
  %1153 = vmatmul.f32.gmra.mxu0 %v1133
  %v1154 = vpop.f32.mrf.mxu0
  %v1155 = vadd.f32 0.0, %v1154
  %1156 = vdwg.mxu0
  %v1157 = vmul.f32 %v1128, 0.35355338
  %v1158 = vmul.f32 %v1155, 0.35355338
  %v1159 = vadd.f32 %v1157, %v219
  %v1160 = vadd.f32 %v1158, %v220
  %v1161 = vsel %vm165, %v1159, -inf
  %1162 = vmax.xlane.f32.xlu0 %v1161
  %v1163 = vpop.xlane.xlu0 %1162
  %v1164 = vsel %vm165, %v1160, -inf
  %1165 = vmax.xlane.f32.xlu0 %v1164
  %v1166 = vpop.xlane.xlu0 %1165
  %v1167 = vsub.f32 %v1159, %v1163
  %v1168 = vsub.f32 %v1160, %v1166
  %v1169 = vmul.f32 %v1167, 1.442695
  %v1170 = vpow.pop %v1169
  %v1171 = vmul.f32 %v1168, 1.442695
  %v1172 = vpow.pop %v1171
  %v1173 = vsel %vm165, %v1170, 0.0
  %1174 = vadd.xlane.f32.xlu0 %v1173
  %v1175 = vpop.xlane.xlu0 %1174
  %v1176 = vsel %vm165, %v1172, 0.0
  %1177 = vadd.xlane.f32.xlu0 %v1176
  %v1178 = vpop.xlane.xlu0 %1177
  %v1179 = vrcp.pop %v1175
  %v1180 = vrcp.pop %v1178
  %v1181 = vmul.f32 %v1170, %v1179
  %v1182 = vmul.f32 %v1172, %v1180
  %1183 = vrot.lane.b32.xlu0 %v1098, 64
  %v1184 = vpop.permute.xlu0 %1183
  %v1187 = vsel %vm165, %v1181, 0
  %1189 = vmatpush.msra.mxu0 0.0
  %1190 = vmatpush.msra.mxu0 0.0
  %1191 = vmatpush.msra.mxu0 0.0
  %1192 = vmatpush.msra.mxu0 0.0
  %1193 = vmatpush.msra.mxu0 0.0
  %1194 = vmatpush.msra.mxu0 0.0
  %1195 = vmatpush.msra.mxu0 0.0
  %1196 = vmatpush.msra.mxu0 0.0
  %1197 = vmatpush.msra.mxu0 0.0
  %1198 = vmatpush.msra.mxu0 0.0
  %1199 = vmatpush.msra.mxu0 0.0
  %1200 = vmatpush.msra.mxu0 0.0
  %1201 = vmatpush.msra.mxu0 0.0
  %1202 = vmatpush.msra.mxu0 0.0
  %1203 = vmatpush.msra.mxu0 0.0
  %1204 = vmatpush.msra.mxu0 %v1184
  %1205 = vmatmul.f32.gmra.mxu0 %v1187
  %v1206 = vpop.f32.mrf.mxu0
  %v1207 = vadd.f32 0.0, %v1206
  %1208 = vdwg.mxu0
  %1209 = vrot.lane.b32.xlu0 %v1101, 64
  %v1210 = vpop.permute.xlu0 %1209
  %v1213 = vsel %vm165, %v1182, 0
  %1215 = vmatpush.msra.mxu0 0.0
  %1216 = vmatpush.msra.mxu0 0.0
  %1217 = vmatpush.msra.mxu0 0.0
  %1218 = vmatpush.msra.mxu0 0.0
  %1219 = vmatpush.msra.mxu0 0.0
  %1220 = vmatpush.msra.mxu0 0.0
  %1221 = vmatpush.msra.mxu0 0.0
  %1222 = vmatpush.msra.mxu0 0.0
  %1223 = vmatpush.msra.mxu0 0.0
  %1224 = vmatpush.msra.mxu0 0.0
  %1225 = vmatpush.msra.mxu0 0.0
  %1226 = vmatpush.msra.mxu0 0.0
  %1227 = vmatpush.msra.mxu0 0.0
  %1228 = vmatpush.msra.mxu0 0.0
  %1229 = vmatpush.msra.mxu0 0.0
  %1230 = vmatpush.msra.mxu0 %v1210
  %1231 = vmatmul.f32.gmra.mxu0 %v1213
  %v1232 = vpop.f32.mrf.mxu0
  %v1233 = vadd.f32 0.0, %v1232
  %1234 = vdwg.mxu0
  %1235 = vst.msk [vmem:[#allocation2] sm:$0xff] %vm165, %v1207
  %1236 = vst.msk [vmem:[#allocation2 + $0x8] sm:$0xff] %vm165, %v1233
  %1237 = vrot.lane.b32.xlu0 %v1098, 120
  %v1238 = vpop.permute.xlu0 %1237
  %1239 = vrot.lane.b32.xlu0 %v1098, 88
  %v1240 = vpop.permute.xlu0 %1239
  %v1241 = vsel %vm165, %v1238, 0
  %v1243 = vsel %vm165, %v1240, 0
  %1245 = vmatpush.xpose.msra.mxu0 0.0
  %1246 = vmatpush.xpose.msra.mxu0 0.0
  %1247 = vmatpush.xpose.msra.mxu0 0.0
  %1248 = vmatpush.xpose.msra.mxu0 0.0
  %1249 = vmatpush.xpose.msra.mxu0 0.0
  %1250 = vmatpush.xpose.msra.mxu0 0.0
  %1251 = vmatpush.xpose.msra.mxu0 0.0
  %1252 = vmatpush.xpose.msra.mxu0 0.0
  %1253 = vmatpush.xpose.msra.mxu0 0.0
  %1254 = vmatpush.xpose.msra.mxu0 0.0
  %1255 = vmatpush.xpose.msra.mxu0 0.0
  %1256 = vmatpush.xpose.msra.mxu0 0.0
  %1257 = vmatpush.xpose.msra.mxu0 0.0
  %1258 = vmatpush.xpose.msra.mxu0 0.0
  %1259 = vmatpush.xpose.msra.mxu0 0.0
  %1260 = vmatpush.xpose.msra.mxu0 %v1243
  %1261 = vmatmul.f32.gmra.mxu0 %v1241
  %v1262 = vpop.f32.mrf.mxu0
  %v1263 = vadd.f32 0.0, %v1262
  %1264 = vdwg.mxu0
  %1265 = vrot.lane.b32.xlu0 %v1101, 120
  %v1266 = vpop.permute.xlu0 %1265
  %1267 = vrot.lane.b32.xlu0 %v1101, 88
  %v1268 = vpop.permute.xlu0 %1267
  %v1269 = vsel %vm165, %v1266, 0
  %v1271 = vsel %vm165, %v1268, 0
  %1273 = vmatpush.xpose.msra.mxu0 0.0
  %1274 = vmatpush.xpose.msra.mxu0 0.0
  %1275 = vmatpush.xpose.msra.mxu0 0.0
  %1276 = vmatpush.xpose.msra.mxu0 0.0
  %1277 = vmatpush.xpose.msra.mxu0 0.0
  %1278 = vmatpush.xpose.msra.mxu0 0.0
  %1279 = vmatpush.xpose.msra.mxu0 0.0
  %1280 = vmatpush.xpose.msra.mxu0 0.0
  %1281 = vmatpush.xpose.msra.mxu0 0.0
  %1282 = vmatpush.xpose.msra.mxu0 0.0
  %1283 = vmatpush.xpose.msra.mxu0 0.0
  %1284 = vmatpush.xpose.msra.mxu0 0.0
  %1285 = vmatpush.xpose.msra.mxu0 0.0
  %1286 = vmatpush.xpose.msra.mxu0 0.0
  %1287 = vmatpush.xpose.msra.mxu0 0.0
  %1288 = vmatpush.xpose.msra.mxu0 %v1271
  %1289 = vmatmul.f32.gmra.mxu0 %v1269
  %v1290 = vpop.f32.mrf.mxu0
  %v1291 = vadd.f32 0.0, %v1290
  %1292 = vdwg.mxu0
  %v1293 = vmul.f32 %v1263, 0.35355338
  %v1294 = vmul.f32 %v1291, 0.35355338
  %v1295 = vadd.f32 %v1293, %v219
  %v1296 = vadd.f32 %v1294, %v220
  %v1297 = vsel %vm165, %v1295, -inf
  %1298 = vmax.xlane.f32.xlu0 %v1297
  %v1299 = vpop.xlane.xlu0 %1298
  %v1300 = vsel %vm165, %v1296, -inf
  %1301 = vmax.xlane.f32.xlu0 %v1300
  %v1302 = vpop.xlane.xlu0 %1301
  %v1303 = vsub.f32 %v1295, %v1299
  %v1304 = vsub.f32 %v1296, %v1302
  %v1305 = vmul.f32 %v1303, 1.442695
  %v1306 = vpow.pop %v1305
  %v1307 = vmul.f32 %v1304, 1.442695
  %v1308 = vpow.pop %v1307
  %v1309 = vsel %vm165, %v1306, 0.0
  %1310 = vadd.xlane.f32.xlu0 %v1309
  %v1311 = vpop.xlane.xlu0 %1310
  %v1312 = vsel %vm165, %v1308, 0.0
  %1313 = vadd.xlane.f32.xlu0 %v1312
  %v1314 = vpop.xlane.xlu0 %1313
  %v1315 = vrcp.pop %v1311
  %v1316 = vrcp.pop %v1314
  %v1317 = vmul.f32 %v1306, %v1315
  %v1318 = vmul.f32 %v1308, %v1316
  %1319 = vrot.lane.b32.xlu0 %v1098, 56
  %v1320 = vpop.permute.xlu0 %1319
  %v1323 = vsel %vm165, %v1317, 0
  %1325 = vmatpush.msra.mxu0 0.0
  %1326 = vmatpush.msra.mxu0 0.0
  %1327 = vmatpush.msra.mxu0 0.0
  %1328 = vmatpush.msra.mxu0 0.0
  %1329 = vmatpush.msra.mxu0 0.0
  %1330 = vmatpush.msra.mxu0 0.0
  %1331 = vmatpush.msra.mxu0 0.0
  %1332 = vmatpush.msra.mxu0 0.0
  %1333 = vmatpush.msra.mxu0 0.0
  %1334 = vmatpush.msra.mxu0 0.0
  %1335 = vmatpush.msra.mxu0 0.0
  %1336 = vmatpush.msra.mxu0 0.0
  %1337 = vmatpush.msra.mxu0 0.0
  %1338 = vmatpush.msra.mxu0 0.0
  %1339 = vmatpush.msra.mxu0 0.0
  %1340 = vmatpush.msra.mxu0 %v1320
  %1341 = vmatmul.f32.gmra.mxu0 %v1323
  %v1342 = vpop.f32.mrf.mxu0
  %v1343 = vadd.f32 0.0, %v1342
  %1344 = vdwg.mxu0
  %1345 = vrot.lane.b32.xlu0 %v1101, 56
  %v1346 = vpop.permute.xlu0 %1345
  %v1349 = vsel %vm165, %v1318, 0
  %1351 = vmatpush.msra.mxu0 0.0
  %1352 = vmatpush.msra.mxu0 0.0
  %1353 = vmatpush.msra.mxu0 0.0
  %1354 = vmatpush.msra.mxu0 0.0
  %1355 = vmatpush.msra.mxu0 0.0
  %1356 = vmatpush.msra.mxu0 0.0
  %1357 = vmatpush.msra.mxu0 0.0
  %1358 = vmatpush.msra.mxu0 0.0
  %1359 = vmatpush.msra.mxu0 0.0
  %1360 = vmatpush.msra.mxu0 0.0
  %1361 = vmatpush.msra.mxu0 0.0
  %1362 = vmatpush.msra.mxu0 0.0
  %1363 = vmatpush.msra.mxu0 0.0
  %1364 = vmatpush.msra.mxu0 0.0
  %1365 = vmatpush.msra.mxu0 0.0
  %1366 = vmatpush.msra.mxu0 %v1346
  %1367 = vmatmul.f32.gmra.mxu0 %v1349
  %v1368 = vpop.f32.mrf.mxu0
  %v1369 = vadd.f32 0.0, %v1368
  %1370 = vdwg.mxu0
  %1373 = vrot.lane.b32.xlu0 %v1343, 8
  %v1374 = vpop.permute.xlu0 %1373
  %1375 = vrot.lane.b32.xlu0 %v1369, 8
  %v1376 = vpop.permute.xlu0 %1375
  %1379 = vst.msk [vmem:[#allocation2] sm:$0xff] %vm443, %v1374
  %1380 = vst.msk [vmem:[#allocation2 + $0x8] sm:$0xff] %vm443, %v1376
  %1381 = vrot.lane.b32.xlu0 %v1098, 112
  %v1382 = vpop.permute.xlu0 %1381
  %1383 = vrot.lane.b32.xlu0 %v1098, 80
  %v1384 = vpop.permute.xlu0 %1383
  %v1385 = vsel %vm165, %v1382, 0
  %v1387 = vsel %vm165, %v1384, 0
  %1389 = vmatpush.xpose.msra.mxu0 0.0
  %1390 = vmatpush.xpose.msra.mxu0 0.0
  %1391 = vmatpush.xpose.msra.mxu0 0.0
  %1392 = vmatpush.xpose.msra.mxu0 0.0
  %1393 = vmatpush.xpose.msra.mxu0 0.0
  %1394 = vmatpush.xpose.msra.mxu0 0.0
  %1395 = vmatpush.xpose.msra.mxu0 0.0
  %1396 = vmatpush.xpose.msra.mxu0 0.0
  %1397 = vmatpush.xpose.msra.mxu0 0.0
  %1398 = vmatpush.xpose.msra.mxu0 0.0
  %1399 = vmatpush.xpose.msra.mxu0 0.0
  %1400 = vmatpush.xpose.msra.mxu0 0.0
  %1401 = vmatpush.xpose.msra.mxu0 0.0
  %1402 = vmatpush.xpose.msra.mxu0 0.0
  %1403 = vmatpush.xpose.msra.mxu0 0.0
  %1404 = vmatpush.xpose.msra.mxu0 %v1387
  %1405 = vmatmul.f32.gmra.mxu0 %v1385
  %v1406 = vpop.f32.mrf.mxu0
  %v1407 = vadd.f32 0.0, %v1406
  %1408 = vdwg.mxu0
  %1409 = vrot.lane.b32.xlu0 %v1101, 112
  %v1410 = vpop.permute.xlu0 %1409
  %1411 = vrot.lane.b32.xlu0 %v1101, 80
  %v1412 = vpop.permute.xlu0 %1411
  %v1413 = vsel %vm165, %v1410, 0
  %v1415 = vsel %vm165, %v1412, 0
  %1417 = vmatpush.xpose.msra.mxu0 0.0
  %1418 = vmatpush.xpose.msra.mxu0 0.0
  %1419 = vmatpush.xpose.msra.mxu0 0.0
  %1420 = vmatpush.xpose.msra.mxu0 0.0
  %1421 = vmatpush.xpose.msra.mxu0 0.0
  %1422 = vmatpush.xpose.msra.mxu0 0.0
  %1423 = vmatpush.xpose.msra.mxu0 0.0
  %1424 = vmatpush.xpose.msra.mxu0 0.0
  %1425 = vmatpush.xpose.msra.mxu0 0.0
  %1426 = vmatpush.xpose.msra.mxu0 0.0
  %1427 = vmatpush.xpose.msra.mxu0 0.0
  %1428 = vmatpush.xpose.msra.mxu0 0.0
  %1429 = vmatpush.xpose.msra.mxu0 0.0
  %1430 = vmatpush.xpose.msra.mxu0 0.0
  %1431 = vmatpush.xpose.msra.mxu0 0.0
  %1432 = vmatpush.xpose.msra.mxu0 %v1415
  %1433 = vmatmul.f32.gmra.mxu0 %v1413
  %v1434 = vpop.f32.mrf.mxu0
  %v1435 = vadd.f32 0.0, %v1434
  %1436 = vdwg.mxu0
  %v1437 = vmul.f32 %v1407, 0.35355338
  %v1438 = vmul.f32 %v1435, 0.35355338
  %v1439 = vadd.f32 %v1437, %v219
  %v1440 = vadd.f32 %v1438, %v220
  %v1441 = vsel %vm165, %v1439, -inf
  %1442 = vmax.xlane.f32.xlu0 %v1441
  %v1443 = vpop.xlane.xlu0 %1442
  %v1444 = vsel %vm165, %v1440, -inf
  %1445 = vmax.xlane.f32.xlu0 %v1444
  %v1446 = vpop.xlane.xlu0 %1445
  %v1447 = vsub.f32 %v1439, %v1443
  %v1448 = vsub.f32 %v1440, %v1446
  %v1449 = vmul.f32 %v1447, 1.442695
  %v1450 = vpow.pop %v1449
  %v1451 = vmul.f32 %v1448, 1.442695
  %v1452 = vpow.pop %v1451
  %v1453 = vsel %vm165, %v1450, 0.0
  %1454 = vadd.xlane.f32.xlu0 %v1453
  %v1455 = vpop.xlane.xlu0 %1454
  %v1456 = vsel %vm165, %v1452, 0.0
  %1457 = vadd.xlane.f32.xlu0 %v1456
  %v1458 = vpop.xlane.xlu0 %1457
  %v1459 = vrcp.pop %v1455
  %v1460 = vrcp.pop %v1458
  %v1461 = vmul.f32 %v1450, %v1459
  %v1462 = vmul.f32 %v1452, %v1460
  %1463 = vrot.lane.b32.xlu0 %v1098, 48
  %v1464 = vpop.permute.xlu0 %1463
  %v1467 = vsel %vm165, %v1461, 0
  %1469 = vmatpush.msra.mxu0 0.0
  %1470 = vmatpush.msra.mxu0 0.0
  %1471 = vmatpush.msra.mxu0 0.0
  %1472 = vmatpush.msra.mxu0 0.0
  %1473 = vmatpush.msra.mxu0 0.0
  %1474 = vmatpush.msra.mxu0 0.0
  %1475 = vmatpush.msra.mxu0 0.0
  %1476 = vmatpush.msra.mxu0 0.0
  %1477 = vmatpush.msra.mxu0 0.0
  %1478 = vmatpush.msra.mxu0 0.0
  %1479 = vmatpush.msra.mxu0 0.0
  %1480 = vmatpush.msra.mxu0 0.0
  %1481 = vmatpush.msra.mxu0 0.0
  %1482 = vmatpush.msra.mxu0 0.0
  %1483 = vmatpush.msra.mxu0 0.0
  %1484 = vmatpush.msra.mxu0 %v1464
  %1485 = vmatmul.f32.gmra.mxu0 %v1467
  %v1486 = vpop.f32.mrf.mxu0
  %v1487 = vadd.f32 0.0, %v1486
  %1488 = vdwg.mxu0
  %1489 = vrot.lane.b32.xlu0 %v1101, 48
  %v1490 = vpop.permute.xlu0 %1489
  %v1493 = vsel %vm165, %v1462, 0
  %1495 = vmatpush.msra.mxu0 0.0
  %1496 = vmatpush.msra.mxu0 0.0
  %1497 = vmatpush.msra.mxu0 0.0
  %1498 = vmatpush.msra.mxu0 0.0
  %1499 = vmatpush.msra.mxu0 0.0
  %1500 = vmatpush.msra.mxu0 0.0
  %1501 = vmatpush.msra.mxu0 0.0
  %1502 = vmatpush.msra.mxu0 0.0
  %1503 = vmatpush.msra.mxu0 0.0
  %1504 = vmatpush.msra.mxu0 0.0
  %1505 = vmatpush.msra.mxu0 0.0
  %1506 = vmatpush.msra.mxu0 0.0
  %1507 = vmatpush.msra.mxu0 0.0
  %1508 = vmatpush.msra.mxu0 0.0
  %1509 = vmatpush.msra.mxu0 0.0
  %1510 = vmatpush.msra.mxu0 %v1490
  %1511 = vmatmul.f32.gmra.mxu0 %v1493
  %v1512 = vpop.f32.mrf.mxu0
  %v1513 = vadd.f32 0.0, %v1512
  %1514 = vdwg.mxu0
  %1517 = vrot.lane.b32.xlu0 %v1487, 16
  %v1518 = vpop.permute.xlu0 %1517
  %1519 = vrot.lane.b32.xlu0 %v1513, 16
  %v1520 = vpop.permute.xlu0 %1519
  %1523 = vst.msk [vmem:[#allocation2] sm:$0xff] %vm588, %v1518
  %1524 = vst.msk [vmem:[#allocation2 + $0x8] sm:$0xff] %vm588, %v1520
  %1525 = vrot.lane.b32.xlu0 %v1098, 104
  %v1526 = vpop.permute.xlu0 %1525
  %1527 = vrot.lane.b32.xlu0 %v1098, 72
  %v1528 = vpop.permute.xlu0 %1527
  %v1529 = vsel %vm165, %v1526, 0
  %v1531 = vsel %vm165, %v1528, 0
  %1533 = vmatpush.xpose.msra.mxu0 0.0
  %1534 = vmatpush.xpose.msra.mxu0 0.0
  %1535 = vmatpush.xpose.msra.mxu0 0.0
  %1536 = vmatpush.xpose.msra.mxu0 0.0
  %1537 = vmatpush.xpose.msra.mxu0 0.0
  %1538 = vmatpush.xpose.msra.mxu0 0.0
  %1539 = vmatpush.xpose.msra.mxu0 0.0
  %1540 = vmatpush.xpose.msra.mxu0 0.0
  %1541 = vmatpush.xpose.msra.mxu0 0.0
  %1542 = vmatpush.xpose.msra.mxu0 0.0
  %1543 = vmatpush.xpose.msra.mxu0 0.0
  %1544 = vmatpush.xpose.msra.mxu0 0.0
  %1545 = vmatpush.xpose.msra.mxu0 0.0
  %1546 = vmatpush.xpose.msra.mxu0 0.0
  %1547 = vmatpush.xpose.msra.mxu0 0.0
  %1548 = vmatpush.xpose.msra.mxu0 %v1531
  %1549 = vmatmul.f32.gmra.mxu0 %v1529
  %v1550 = vpop.f32.mrf.mxu0
  %v1551 = vadd.f32 0.0, %v1550
  %1552 = vdwg.mxu0
  %1553 = vrot.lane.b32.xlu0 %v1101, 104
  %v1554 = vpop.permute.xlu0 %1553
  %1555 = vrot.lane.b32.xlu0 %v1101, 72
  %v1556 = vpop.permute.xlu0 %1555
  %v1557 = vsel %vm165, %v1554, 0
  %v1559 = vsel %vm165, %v1556, 0
  %1561 = vmatpush.xpose.msra.mxu0 0.0
  %1562 = vmatpush.xpose.msra.mxu0 0.0
  %1563 = vmatpush.xpose.msra.mxu0 0.0
  %1564 = vmatpush.xpose.msra.mxu0 0.0
  %1565 = vmatpush.xpose.msra.mxu0 0.0
  %1566 = vmatpush.xpose.msra.mxu0 0.0
  %1567 = vmatpush.xpose.msra.mxu0 0.0
  %1568 = vmatpush.xpose.msra.mxu0 0.0
  %1569 = vmatpush.xpose.msra.mxu0 0.0
  %1570 = vmatpush.xpose.msra.mxu0 0.0
  %1571 = vmatpush.xpose.msra.mxu0 0.0
  %1572 = vmatpush.xpose.msra.mxu0 0.0
  %1573 = vmatpush.xpose.msra.mxu0 0.0
  %1574 = vmatpush.xpose.msra.mxu0 0.0
  %1575 = vmatpush.xpose.msra.mxu0 0.0
  %1576 = vmatpush.xpose.msra.mxu0 %v1559
  %1577 = vmatmul.f32.gmra.mxu0 %v1557
  %v1578 = vpop.f32.mrf.mxu0
  %v1579 = vadd.f32 0.0, %v1578
  %1580 = vdwg.mxu0
  %v1581 = vmul.f32 %v1551, 0.35355338
  %v1582 = vmul.f32 %v1579, 0.35355338
  %v1583 = vadd.f32 %v1581, %v219
  %v1584 = vadd.f32 %v1582, %v220
  %v1585 = vsel %vm165, %v1583, -inf
  %1586 = vmax.xlane.f32.xlu0 %v1585
  %v1587 = vpop.xlane.xlu0 %1586
  %v1588 = vsel %vm165, %v1584, -inf
  %1589 = vmax.xlane.f32.xlu0 %v1588
  %v1590 = vpop.xlane.xlu0 %1589
  %v1591 = vsub.f32 %v1583, %v1587
  %v1592 = vsub.f32 %v1584, %v1590
  %v1593 = vmul.f32 %v1591, 1.442695
  %v1594 = vpow.pop %v1593
  %v1595 = vmul.f32 %v1592, 1.442695
  %v1596 = vpow.pop %v1595
  %v1597 = vsel %vm165, %v1594, 0.0
  %1598 = vadd.xlane.f32.xlu0 %v1597
  %v1599 = vpop.xlane.xlu0 %1598
  %v1600 = vsel %vm165, %v1596, 0.0
  %1601 = vadd.xlane.f32.xlu0 %v1600
  %v1602 = vpop.xlane.xlu0 %1601
  %v1603 = vrcp.pop %v1599
  %v1604 = vrcp.pop %v1602
  %v1605 = vmul.f32 %v1594, %v1603
  %v1606 = vmul.f32 %v1596, %v1604
  %1607 = vrot.lane.b32.xlu0 %v1098, 40
  %v1608 = vpop.permute.xlu0 %1607
  %v1611 = vsel %vm165, %v1605, 0
  %1613 = vmatpush.msra.mxu0 0.0
  %1614 = vmatpush.msra.mxu0 0.0
  %1615 = vmatpush.msra.mxu0 0.0
  %1616 = vmatpush.msra.mxu0 0.0
  %1617 = vmatpush.msra.mxu0 0.0
  %1618 = vmatpush.msra.mxu0 0.0
  %1619 = vmatpush.msra.mxu0 0.0
  %1620 = vmatpush.msra.mxu0 0.0
  %1621 = vmatpush.msra.mxu0 0.0
  %1622 = vmatpush.msra.mxu0 0.0
  %1623 = vmatpush.msra.mxu0 0.0
  %1624 = vmatpush.msra.mxu0 0.0
  %1625 = vmatpush.msra.mxu0 0.0
  %1626 = vmatpush.msra.mxu0 0.0
  %1627 = vmatpush.msra.mxu0 0.0
  %1628 = vmatpush.msra.mxu0 %v1608
  %1629 = vmatmul.f32.gmra.mxu0 %v1611
  %v1630 = vpop.f32.mrf.mxu0
  %v1631 = vadd.f32 0.0, %v1630
  %1632 = vdwg.mxu0
  %1633 = vrot.lane.b32.xlu0 %v1101, 40
  %v1634 = vpop.permute.xlu0 %1633
  %v1637 = vsel %vm165, %v1606, 0
  %1639 = vmatpush.msra.mxu0 0.0
  %1640 = vmatpush.msra.mxu0 0.0
  %1641 = vmatpush.msra.mxu0 0.0
  %1642 = vmatpush.msra.mxu0 0.0
  %1643 = vmatpush.msra.mxu0 0.0
  %1644 = vmatpush.msra.mxu0 0.0
  %1645 = vmatpush.msra.mxu0 0.0
  %1646 = vmatpush.msra.mxu0 0.0
  %1647 = vmatpush.msra.mxu0 0.0
  %1648 = vmatpush.msra.mxu0 0.0
  %1649 = vmatpush.msra.mxu0 0.0
  %1650 = vmatpush.msra.mxu0 0.0
  %1651 = vmatpush.msra.mxu0 0.0
  %1652 = vmatpush.msra.mxu0 0.0
  %1653 = vmatpush.msra.mxu0 0.0
  %1654 = vmatpush.msra.mxu0 %v1634
  %1655 = vmatmul.f32.gmra.mxu0 %v1637
  %v1656 = vpop.f32.mrf.mxu0
  %v1657 = vadd.f32 0.0, %v1656
  %1658 = vdwg.mxu0
  %1661 = vrot.lane.b32.xlu0 %v1631, 24
  %v1662 = vpop.permute.xlu0 %1661
  %1663 = vrot.lane.b32.xlu0 %v1657, 24
  %v1664 = vpop.permute.xlu0 %1663
  %1667 = vst.msk [vmem:[#allocation2] sm:$0xff] %vm733, %v1662
  %1668 = vst.msk [vmem:[#allocation2 + $0x8] sm:$0xff] %vm733, %v1664
  %v1669 = vld [vmem:[#allocation2] sm:$0xff]
  %v1670 = vld [vmem:[#allocation2 + $0x8] sm:$0xff]
  %1675 = vrot.lane.b32.xlu0 %v1041, 32
  %v1676 = vpop.permute.xlu0 %1675
  %1677 = vrot.lane.b32.xlu0 %v1042, 32
  %v1678 = vpop.permute.xlu0 %1677
  %1679 = vrot.lane.b32.xlu0 %v1043, 32
  %v1680 = vpop.permute.xlu0 %1679
  %1681 = vrot.lane.b32.xlu0 %v1044, 32
  %v1682 = vpop.permute.xlu0 %1681
  %1687 = vrot.lane.b32.xlu0 %v1072, 32
  %v1688 = vpop.permute.xlu0 %1687
  %v1691 = vsel %vm42, %v1669, 0
  %v1694 = vsel %vm42, %v1670, 0
  %1696 = vmatpush.msra.mxu0 0.0
  %1697 = vmatpush.msra.mxu0 0.0
  %1698 = vmatpush.msra.mxu0 0.0
  %1699 = vmatpush.msra.mxu0 0.0
  %1700 = vmatpush.msra.mxu0 0.0
  %1701 = vmatpush.msra.mxu0 0.0
  %1702 = vmatpush.msra.mxu0 0.0
  %1703 = vmatpush.msra.mxu0 0.0
  %1704 = vmatpush.msra.mxu0 0.0
  %1705 = vmatpush.msra.mxu0 0.0
  %1706 = vmatpush.msra.mxu0 0.0
  %1707 = vmatpush.msra.mxu0 0.0
  %1708 = vmatpush.msra.mxu0 %v1682
  %1709 = vmatpush.msra.mxu0 %v1680
  %1710 = vmatpush.msra.mxu0 %v1678
  %1711 = vmatpush.msra.mxu0 %v1676
  %1712 = vmatmul.f32.gmra.mxu0 %v1691
  %v1713 = vpop.f32.mrf.mxu0
  %v1714 = vadd.f32 %v1688, %v1713
  %1715 = vmatmul.f32.gmra.mxu0 %v1694
  %v1716 = vpop.f32.mrf.mxu0
  %v1717 = vadd.f32 %v1688, %v1716
  %1718 = vdwg.mxu0
  %v1719 = vadd.f32 %v1714, %v1038
  %v1720 = vadd.f32 %v1717, %v1039
  %v1721 = vld [vmem:[%s2 + $0x3] sm:$0x1]
  %v1722 = vld [vmem:[%s3 + $0x3] sm:$0x1]
  %v1723 = vsel %vm42, %v1719, 0.0
  %1724 = vadd.xlane.f32.xlu0 %v1723
  %v1725 = vpop.xlane.xlu0 %1724
  %v1726 = vsel %vm42, %v1720, 0.0
  %1727 = vadd.xlane.f32.xlu0 %v1726
  %v1728 = vpop.xlane.xlu0 %1727
  %v1729 = vmul.f32 %v1725, %v55
  %v1730 = vmul.f32 %v1728, %v55
  %v1731 = vsub.f32 %v1719, %v1729
  %v1732 = vsub.f32 %v1720, %v1730
  %v1733 = vmul.f32 %v1731, %v1731
  %v1734 = vmul.f32 %v1732, %v1732
  %v1735 = vsel %vm42, %v1733, 0.0
  %1736 = vadd.xlane.f32.xlu0 %v1735
  %v1737 = vpop.xlane.xlu0 %1736
  %v1738 = vsel %vm42, %v1734, 0.0
  %1739 = vadd.xlane.f32.xlu0 %v1738
  %v1740 = vpop.xlane.xlu0 %1739
  %v1741 = vmul.f32 %v1737, %v55
  %v1742 = vmul.f32 %v1740, %v55
  %v1743 = vadd.f32 %v1741, 1e-12
  %v1744 = vadd.f32 %v1742, 1e-12
  %v1745 = vrsqrt.pop %v1743
  %v1746 = vmul.f32 %v1745, %v1743
  %v1747 = vmul.f32 %v1746, %v1745
  %v1748 = vmul.f32 0.5, %v1747
  %v1749 = vsub.f32 1.5, %v1748
  %v1750 = vmul.f32 %v1745, %v1749
  %vm1751 = vweird.f32 %v1743
  %vm1752 = vweird.f32 %v1745
  %vm1753 = vmor %vm1751, %vm1752
  %v1754 = vsel %vm1753, %v1745, %v1750
  %v1755 = vrsqrt.pop %v1744
  %v1756 = vmul.f32 %v1755, %v1744
  %v1757 = vmul.f32 %v1756, %v1755
  %v1758 = vmul.f32 0.5, %v1757
  %v1759 = vsub.f32 1.5, %v1758
  %v1760 = vmul.f32 %v1755, %v1759
  %vm1761 = vweird.f32 %v1744
  %vm1762 = vweird.f32 %v1755
  %vm1763 = vmor %vm1761, %vm1762
  %v1764 = vsel %vm1763, %v1755, %v1760
  %v1765 = vmul.f32 %v1731, %v1754
  %v1766 = vmul.f32 %v1732, %v1764
  %v1767 = vperm.slane %v1721, 0
  %v1768 = vmul.f32 %v1765, %v1767
  %v1769 = vmul.f32 %v1766, %v1767
  %v1770 = vperm.slane %v1722, 0
  %v1771 = vadd.f32 %v1768, %v1770
  %v1772 = vadd.f32 %v1769, %v1770
  %v1774 = vperm.slane %v1051, 0
  %v1777 = vsel %vm42, %v1771, 0
  %v1780 = vsel %vm42, %v1772, 0
  %1782 = vmatpush.msra.mxu0 0.0
  %1783 = vmatpush.msra.mxu0 0.0
  %1784 = vmatpush.msra.mxu0 0.0
  %1785 = vmatpush.msra.mxu0 0.0
  %1786 = vmatpush.msra.mxu0 0.0
  %1787 = vmatpush.msra.mxu0 0.0
  %1788 = vmatpush.msra.mxu0 0.0
  %1789 = vmatpush.msra.mxu0 0.0
  %1790 = vmatpush.msra.mxu0 0.0
  %1791 = vmatpush.msra.mxu0 0.0
  %1792 = vmatpush.msra.mxu0 0.0
  %1793 = vmatpush.msra.mxu0 0.0
  %1794 = vmatpush.msra.mxu0 %v1048
  %1795 = vmatpush.msra.mxu0 %v1047
  %1796 = vmatpush.msra.mxu0 %v1046
  %1797 = vmatpush.msra.mxu0 %v1045
  %1798 = vmatmul.f32.gmra.mxu0 %v1777
  %v1799 = vpop.f32.mrf.mxu0
  %v1800 = vadd.f32 %v1774, %v1799
  %1801 = vmatmul.f32.gmra.mxu0 %v1780
  %v1802 = vpop.f32.mrf.mxu0
  %v1803 = vadd.f32 %v1774, %v1802
  %1804 = vdwg.mxu0
  %v1805 = vmul.f32 %v1800, 0.5
  %v1806 = vmul.f32 %v1803, 0.5
  %v1807 = vmul.f32 %v1800, 0.70710677
  %v1808 = vmul.f32 %v1803, 0.70710677
  %v1809 = vmul.f32 %v1807, %v1807
  %v1810 = vmin.f32 16.0, %v1809
  %v1811 = vmul.f32 %v1810, 2.1237322e-06
  %v1812 = vadd.f32 %v1811, 0.00028619796
  %v1813 = vmul.f32 %v1810, %v1812
  %v1814 = vadd.f32 %v1813, 0.0036580483
  %v1815 = vmul.f32 %v1810, %v1814
  %v1816 = vadd.f32 %v1815, 0.05243302
  %v1817 = vmul.f32 %v1810, %v1816
  %v1818 = vadd.f32 %v1817, 0.18741608
  %v1819 = vmul.f32 %v1810, %v1818
  %v1820 = vadd.f32 %v1819, 1.1283791
  %v1821 = vmul.f32 %v1807, %v1820
  %v1822 = vmul.f32 %v1810, 3.8918573e-05
  %v1823 = vadd.f32 %v1822, 0.001143296
  %v1824 = vmul.f32 %v1810, %v1823
  %v1825 = vadd.f32 %v1824, 0.014752088
  %v1826 = vmul.f32 %v1810, %v1825
  %v1827 = vadd.f32 %v1826, 0.112945676
  %v1828 = vmul.f32 %v1810, %v1827
  %v1829 = vadd.f32 %v1828, 0.4994258
  %v1830 = vmul.f32 %v1810, %v1829
  %v1831 = vadd.f32 %v1830, 1.0
  %v1832 = vrcp.pop %v1831
  %v1833 = vmul.f32 %v1831, %v1832
  %v1834 = vsub.f32 1.0, %v1833
  %v1835 = vmul.f32 %v1832, %v1834
  %v1836 = vadd.f32 %v1832, %v1835
  %vm1837 = vweird.f32 %v1831
  %vm1838 = vweird.f32 %v1832
  %vm1839 = vmor %vm1837, %vm1838
  %v1840 = vsel %vm1839, %v1832, %v1836
  %v1841 = vand.u32 2147483647, %v1831
  %vm1842 = vcmp.eq.f32.partialorder %v1841, 8.507059e+37
  %v1843 = vand.u32 %v1831, 2147483648
  %v1844 = vor.u32 1.1754944e-38, %v1843
  %v1845 = vsel %vm1842, %v1844, %v1840
  %v1846 = vmul.f32 %v1821, %v1845
  %v1847 = vmin.f32 %v1846, 1.0
  %v1848 = vmax.f32 %v1847, -1.0
  %v1849 = vmul.f32 %v1808, %v1808
  %v1850 = vmin.f32 16.0, %v1849
  %v1851 = vmul.f32 %v1850, 2.1237322e-06
  %v1852 = vadd.f32 %v1851, 0.00028619796
  %v1853 = vmul.f32 %v1850, %v1852
  %v1854 = vadd.f32 %v1853, 0.0036580483
  %v1855 = vmul.f32 %v1850, %v1854
  %v1856 = vadd.f32 %v1855, 0.05243302
  %v1857 = vmul.f32 %v1850, %v1856
  %v1858 = vadd.f32 %v1857, 0.18741608
  %v1859 = vmul.f32 %v1850, %v1858
  %v1860 = vadd.f32 %v1859, 1.1283791
  %v1861 = vmul.f32 %v1808, %v1860
  %v1862 = vmul.f32 %v1850, 3.8918573e-05
  %v1863 = vadd.f32 %v1862, 0.001143296
  %v1864 = vmul.f32 %v1850, %v1863
  %v1865 = vadd.f32 %v1864, 0.014752088
  %v1866 = vmul.f32 %v1850, %v1865
  %v1867 = vadd.f32 %v1866, 0.112945676
  %v1868 = vmul.f32 %v1850, %v1867
  %v1869 = vadd.f32 %v1868, 0.4994258
  %v1870 = vmul.f32 %v1850, %v1869
  %v1871 = vadd.f32 %v1870, 1.0
  %v1872 = vrcp.pop %v1871
  %v1873 = vmul.f32 %v1871, %v1872
  %v1874 = vsub.f32 1.0, %v1873
  %v1875 = vmul.f32 %v1872, %v1874
  %v1876 = vadd.f32 %v1872, %v1875
  %vm1877 = vweird.f32 %v1871
  %vm1878 = vweird.f32 %v1872
  %vm1879 = vmor %vm1877, %vm1878
  %v1880 = vsel %vm1879, %v1872, %v1876
  %v1881 = vand.u32 2147483647, %v1871
  %vm1882 = vcmp.eq.f32.partialorder %v1881, 8.507059e+37
  %v1883 = vand.u32 %v1871, 2147483648
  %v1884 = vor.u32 1.1754944e-38, %v1883
  %v1885 = vsel %vm1882, %v1884, %v1880
  %v1886 = vmul.f32 %v1861, %v1885
  %v1887 = vmin.f32 %v1886, 1.0
  %v1888 = vmax.f32 %v1887, -1.0
  %v1889 = vadd.f32 %v1848, 1.0
  %v1890 = vadd.f32 %v1888, 1.0
  %v1891 = vmul.f32 %v1805, %v1889
  %v1892 = vmul.f32 %v1806, %v1890
  %v1894 = vperm.slane %v1070, 0
  %1896 = vmatpush.msra.mxu0 %v1068
  %1897 = vmatpush.msra.mxu0 %v1067
  %1898 = vmatpush.msra.mxu0 %v1066
  %1899 = vmatpush.msra.mxu0 %v1065
  %1900 = vmatpush.msra.mxu0 %v1064
  %1901 = vmatpush.msra.mxu0 %v1063
  %1902 = vmatpush.msra.mxu0 %v1062
  %1903 = vmatpush.msra.mxu0 %v1061
  %1904 = vmatpush.msra.mxu0 %v1060
  %1905 = vmatpush.msra.mxu0 %v1059
  %1906 = vmatpush.msra.mxu0 %v1058
  %1907 = vmatpush.msra.mxu0 %v1057
  %1908 = vmatpush.msra.mxu0 %v1056
  %1909 = vmatpush.msra.mxu0 %v1055
  %1910 = vmatpush.msra.mxu0 %v1054
  %1911 = vmatpush.msra.mxu0 %v1053
  %1912 = vmatmul.f32.gmra.mxu0 %v1891
  %v1913 = vpop.f32.mrf.mxu0
  %v1914 = vadd.f32 %v1894, %v1913
  %1915 = vmatmul.f32.gmra.mxu0 %v1892
  %v1916 = vpop.f32.mrf.mxu0
  %v1917 = vadd.f32 %v1894, %v1916
  %1918 = vdwg.mxu0
  %v1919 = vadd.f32 %v1914, %v1771
  %v1920 = vadd.f32 %v1917, %v1772
  %v1921 = vld [vmem:[%s2 + $0x4] sm:$0x1]
  %v1922 = vld [vmem:[%s3 + $0x4] sm:$0x1]
  %v1923 = vsel %vm42, %v1919, 0.0
  %1924 = vadd.xlane.f32.xlu0 %v1923
  %v1925 = vpop.xlane.xlu0 %1924
  %v1926 = vsel %vm42, %v1920, 0.0
  %1927 = vadd.xlane.f32.xlu0 %v1926
  %v1928 = vpop.xlane.xlu0 %1927
  %v1929 = vmul.f32 %v1925, %v55
  %v1930 = vmul.f32 %v1928, %v55
  %v1931 = vsub.f32 %v1919, %v1929
  %v1932 = vsub.f32 %v1920, %v1930
  %v1933 = vmul.f32 %v1931, %v1931
  %v1934 = vmul.f32 %v1932, %v1932
  %v1935 = vsel %vm42, %v1933, 0.0
  %1936 = vadd.xlane.f32.xlu0 %v1935
  %v1937 = vpop.xlane.xlu0 %1936
  %v1938 = vsel %vm42, %v1934, 0.0
  %1939 = vadd.xlane.f32.xlu0 %v1938
  %v1940 = vpop.xlane.xlu0 %1939
  %v1941 = vmul.f32 %v1937, %v55
  %v1942 = vmul.f32 %v1940, %v55
  %v1943 = vadd.f32 %v1941, 1e-12
  %v1944 = vadd.f32 %v1942, 1e-12
  %v1945 = vrsqrt.pop %v1943
  %v1946 = vmul.f32 %v1945, %v1943
  %v1947 = vmul.f32 %v1946, %v1945
  %v1948 = vmul.f32 0.5, %v1947
  %v1949 = vsub.f32 1.5, %v1948
  %v1950 = vmul.f32 %v1945, %v1949
  %vm1951 = vweird.f32 %v1943
  %vm1952 = vweird.f32 %v1945
  %vm1953 = vmor %vm1951, %vm1952
  %v1954 = vsel %vm1953, %v1945, %v1950
  %v1955 = vrsqrt.pop %v1944
  %v1956 = vmul.f32 %v1955, %v1944
  %v1957 = vmul.f32 %v1956, %v1955
  %v1958 = vmul.f32 0.5, %v1957
  %v1959 = vsub.f32 1.5, %v1958
  %v1960 = vmul.f32 %v1955, %v1959
  %vm1961 = vweird.f32 %v1944
  %vm1962 = vweird.f32 %v1955
  %vm1963 = vmor %vm1961, %vm1962
  %v1964 = vsel %vm1963, %v1955, %v1960
  %v1965 = vmul.f32 %v1931, %v1954
  %v1966 = vmul.f32 %v1932, %v1964
  %v1967 = vperm.slane %v1921, 0
  %v1968 = vmul.f32 %v1965, %v1967
  %v1969 = vmul.f32 %v1966, %v1967
  %v1970 = vperm.slane %v1922, 0
  %v1971 = vadd.f32 %v1968, %v1970
  %v1972 = vadd.f32 %v1969, %v1970
  %v1973 = vld [vmem:[%s8] sm:$0xff]
  %v1974 = vld [vmem:[%s8 + $0x10] sm:$0xff]
  %v1975 = vld [vmem:[%s8 + $0x20] sm:$0xff]
  %v1976 = vld [vmem:[%s8 + $0x30] sm:$0xff]
  %v1977 = vld [vmem:[%s8 + $0x8] sm:$0xff]
  %v1978 = vld [vmem:[%s8 + $0x18] sm:$0xff]
  %v1979 = vld [vmem:[%s8 + $0x28] sm:$0xff]
  %v1980 = vld [vmem:[%s8 + $0x38] sm:$0xff]
  %v1981 = vld [vmem:[%s9] sm:$0x1]
  %v1982 = vld [vmem:[%s9 + $0x1] sm:$0x1]
  %v1984 = vrot.slane %v1972, 7
  %vm1986 = vcmask 1040384
  %v1987 = vsel %vm1986, %v1971, %v1984
  %v1989 = vperm.slane %v1982, 0
  %v1992 = vsel %vm42, %v1987, 0
  %1994 = vmatpush.msra.mxu0 0.0
  %1995 = vmatpush.msra.mxu0 0.0
  %1996 = vmatpush.msra.mxu0 0.0
  %1997 = vmatpush.msra.mxu0 0.0
  %1998 = vmatpush.msra.mxu0 0.0
  %1999 = vmatpush.msra.mxu0 0.0
  %2000 = vmatpush.msra.mxu0 0.0
  %2001 = vmatpush.msra.mxu0 0.0
  %2002 = vmatpush.msra.mxu0 0.0
  %2003 = vmatpush.msra.mxu0 0.0
  %2004 = vmatpush.msra.mxu0 0.0
  %2005 = vmatpush.msra.mxu0 0.0
  %2006 = vmatpush.msra.mxu0 %v1980
  %2007 = vmatpush.msra.mxu0 %v1979
  %2008 = vmatpush.msra.mxu0 %v1978
  %2009 = vmatpush.msra.mxu0 %v1977
  %2010 = vmatmul.f32.gmra.mxu0 %v1992
  %v2011 = vpop.f32.mrf.mxu0
  %v2012 = vadd.f32 %v1989, %v2011
  %2013 = vdwg.mxu0
  %v2014 = vtanh.pop %v2012
  %2019 = vrot.lane.b32.xlu0 %v1977, 64
  %v2020 = vpop.permute.xlu0 %2019
  %2021 = vrot.lane.b32.xlu0 %v1978, 64
  %v2022 = vpop.permute.xlu0 %2021
  %2023 = vrot.lane.b32.xlu0 %v1979, 64
  %v2024 = vpop.permute.xlu0 %2023
  %2025 = vrot.lane.b32.xlu0 %v1980, 64
  %v2026 = vpop.permute.xlu0 %2025
  %2031 = vrot.lane.b32.xlu0 %v1989, 64
  %v2032 = vpop.permute.xlu0 %2031
  %v2035 = vsel %vm42, %v2014, 0
  %2037 = vmatpush.msra.mxu0 0.0
  %2038 = vmatpush.msra.mxu0 0.0
  %2039 = vmatpush.msra.mxu0 0.0
  %2040 = vmatpush.msra.mxu0 0.0
  %2041 = vmatpush.msra.mxu0 0.0
  %2042 = vmatpush.msra.mxu0 0.0
  %2043 = vmatpush.msra.mxu0 0.0
  %2044 = vmatpush.msra.mxu0 0.0
  %2045 = vmatpush.msra.mxu0 0.0
  %2046 = vmatpush.msra.mxu0 0.0
  %2047 = vmatpush.msra.mxu0 0.0
  %2048 = vmatpush.msra.mxu0 0.0
  %2049 = vmatpush.msra.mxu0 %v2026
  %2050 = vmatpush.msra.mxu0 %v2024
  %2051 = vmatpush.msra.mxu0 %v2022
  %2052 = vmatpush.msra.mxu0 %v2020
  %2053 = vmatmul.f32.gmra.mxu0 %v2035
  %v2054 = vpop.f32.mrf.mxu0
  %v2055 = vadd.f32 %v2032, %v2054
  %2056 = vdwg.mxu0
  %v2057 = vld [vmem:[%s10 + $0x2] sm:$0x3]
  %vm2058 = vcmask 9216
  %v2059 = vsel %vm2058, %v2055, -inf
  %2060 = vmax.xlane.f32.xlu0 %v2059
  %v2061 = vpop.xlane.xlu0 %2060
  %v2062 = vsub.f32 %v2055, %v2061
  %v2063 = vmul.f32 %v2062, 1.442695
  %v2064 = vpow.pop %v2063
  %v2065 = vsel %vm2058, %v2064, 0.0
  %2066 = vadd.xlane.f32.xlu0 %v2065
  %v2067 = vpop.xlane.xlu0 %2066
  %v2068 = vlog2.pop %v2067
  %v2069 = vmul.f32 %v2068, 0.6931472
  %v2070 = vadd.f32 %v2069, %v2061
  %v2071 = vlaneseq
  %v2072 = vand.u32 %v2071, 127
  %2073 = vset.pattern.permute.xlu0 0
  %2074 = vperm.xlu0 %2073, %v2057
  %v2075 = vpop.permute.xlu0 %2074
  %v2077 = vunpack.c.l.s4 269488144
  %v2078 = vunpack.c.0.s8 %v2077
  %v2079 = vperm.slane %v2075, %v2078
  %vm2080 = vcmp.eq.s32.totalorder %v2072, %v2079
  %v2081 = vsel %vm2080, 1, 0
  %v2082 = vcvt.s32.f32 %v2081
  %v2083 = vmul.f32 %v2055, %v2082
  %v2084 = vsel %vm2058, %v2083, 0.0
  %2085 = vadd.xlane.f32.xlu0 %v2084
  %v2086 = vpop.xlane.xlu0 %2085
  %v2087 = vsub.f32 %v2070, %v2086
  %vm2088 = vcmask 1041408
  %v2089 = vsel %vm2088, %v2087, 0.0
  %v2090 = vrot.slane %v2089, 4
  %v2091 = vadd.f32 %v2089, %v2090
  %v2092 = vrot.slane %v2091, 2
  %v2093 = vadd.f32 %v2091, %v2092
  %v2094 = vrot.slane %v2093, 1
  %v2095 = vadd.f32 %v2093, %v2094
  %v2096 = vmul.f32 %v2095, 0.5
  %2097 = vrot.lane.b32.xlu0 %v1977, 96
  %v2098 = vpop.permute.xlu0 %2097
  %2099 = vrot.lane.b32.xlu0 %v1978, 96
  %v2100 = vpop.permute.xlu0 %2099
  %2101 = vrot.lane.b32.xlu0 %v1979, 96
  %v2102 = vpop.permute.xlu0 %2101
  %2103 = vrot.lane.b32.xlu0 %v1980, 96
  %v2104 = vpop.permute.xlu0 %2103
  %2109 = vrot.lane.b32.xlu0 %v1989, 96
  %v2110 = vpop.permute.xlu0 %2109
  %v2113 = vsel %vm42, %v1971, 0
  %v2115 = vsel %vm42, %v1972, 0
  %2117 = vmatpush.msra.mxu0 0.0
  %2118 = vmatpush.msra.mxu0 0.0
  %2119 = vmatpush.msra.mxu0 0.0
  %2120 = vmatpush.msra.mxu0 0.0
  %2121 = vmatpush.msra.mxu0 0.0
  %2122 = vmatpush.msra.mxu0 0.0
  %2123 = vmatpush.msra.mxu0 0.0
  %2124 = vmatpush.msra.mxu0 0.0
  %2125 = vmatpush.msra.mxu0 0.0
  %2126 = vmatpush.msra.mxu0 0.0
  %2127 = vmatpush.msra.mxu0 0.0
  %2128 = vmatpush.msra.mxu0 0.0
  %2129 = vmatpush.msra.mxu0 %v2104
  %2130 = vmatpush.msra.mxu0 %v2102
  %2131 = vmatpush.msra.mxu0 %v2100
  %2132 = vmatpush.msra.mxu0 %v2098
  %2133 = vmatmul.f32.gmra.mxu0 %v2113
  %v2134 = vpop.f32.mrf.mxu0
  %v2135 = vadd.f32 %v2110, %v2134
  %2136 = vmatmul.f32.gmra.mxu0 %v2115
  %v2137 = vpop.f32.mrf.mxu0
  %v2138 = vadd.f32 %v2110, %v2137
  %2139 = vdwg.mxu0
  %v2140 = vmul.f32 %v2135, 0.5
  %v2141 = vmul.f32 %v2138, 0.5
  %v2142 = vmul.f32 %v2135, 0.70710677
  %v2143 = vmul.f32 %v2138, 0.70710677
  %v2144 = vmul.f32 %v2142, %v2142
  %v2145 = vmin.f32 16.0, %v2144
  %v2146 = vmul.f32 %v2145, 2.1237322e-06
  %v2147 = vadd.f32 %v2146, 0.00028619796
  %v2148 = vmul.f32 %v2145, %v2147
  %v2149 = vadd.f32 %v2148, 0.0036580483
  %v2150 = vmul.f32 %v2145, %v2149
  %v2151 = vadd.f32 %v2150, 0.05243302
  %v2152 = vmul.f32 %v2145, %v2151
  %v2153 = vadd.f32 %v2152, 0.18741608
  %v2154 = vmul.f32 %v2145, %v2153
  %v2155 = vadd.f32 %v2154, 1.1283791
  %v2156 = vmul.f32 %v2142, %v2155
  %v2157 = vmul.f32 %v2145, 3.8918573e-05
  %v2158 = vadd.f32 %v2157, 0.001143296
  %v2159 = vmul.f32 %v2145, %v2158
  %v2160 = vadd.f32 %v2159, 0.014752088
  %v2161 = vmul.f32 %v2145, %v2160
  %v2162 = vadd.f32 %v2161, 0.112945676
  %v2163 = vmul.f32 %v2145, %v2162
  %v2164 = vadd.f32 %v2163, 0.4994258
  %v2165 = vmul.f32 %v2145, %v2164
  %v2166 = vadd.f32 %v2165, 1.0
  %v2167 = vrcp.pop %v2166
  %v2168 = vmul.f32 %v2166, %v2167
  %v2169 = vsub.f32 1.0, %v2168
  %v2170 = vmul.f32 %v2167, %v2169
  %v2171 = vadd.f32 %v2167, %v2170
  %vm2172 = vweird.f32 %v2166
  %vm2173 = vweird.f32 %v2167
  %vm2174 = vmor %vm2172, %vm2173
  %v2175 = vsel %vm2174, %v2167, %v2171
  %v2176 = vand.u32 2147483647, %v2166
  %vm2177 = vcmp.eq.f32.partialorder %v2176, 8.507059e+37
  %v2178 = vand.u32 %v2166, 2147483648
  %v2179 = vor.u32 1.1754944e-38, %v2178
  %v2180 = vsel %vm2177, %v2179, %v2175
  %v2181 = vmul.f32 %v2156, %v2180
  %v2182 = vmin.f32 %v2181, 1.0
  %v2183 = vmax.f32 %v2182, -1.0
  %v2184 = vmul.f32 %v2143, %v2143
  %v2185 = vmin.f32 16.0, %v2184
  %v2186 = vmul.f32 %v2185, 2.1237322e-06
  %v2187 = vadd.f32 %v2186, 0.00028619796
  %v2188 = vmul.f32 %v2185, %v2187
  %v2189 = vadd.f32 %v2188, 0.0036580483
  %v2190 = vmul.f32 %v2185, %v2189
  %v2191 = vadd.f32 %v2190, 0.05243302
  %v2192 = vmul.f32 %v2185, %v2191
  %v2193 = vadd.f32 %v2192, 0.18741608
  %v2194 = vmul.f32 %v2185, %v2193
  %v2195 = vadd.f32 %v2194, 1.1283791
  %v2196 = vmul.f32 %v2143, %v2195
  %v2197 = vmul.f32 %v2185, 3.8918573e-05
  %v2198 = vadd.f32 %v2197, 0.001143296
  %v2199 = vmul.f32 %v2185, %v2198
  %v2200 = vadd.f32 %v2199, 0.014752088
  %v2201 = vmul.f32 %v2185, %v2200
  %v2202 = vadd.f32 %v2201, 0.112945676
  %v2203 = vmul.f32 %v2185, %v2202
  %v2204 = vadd.f32 %v2203, 0.4994258
  %v2205 = vmul.f32 %v2185, %v2204
  %v2206 = vadd.f32 %v2205, 1.0
  %v2207 = vrcp.pop %v2206
  %v2208 = vmul.f32 %v2206, %v2207
  %v2209 = vsub.f32 1.0, %v2208
  %v2210 = vmul.f32 %v2207, %v2209
  %v2211 = vadd.f32 %v2207, %v2210
  %vm2212 = vweird.f32 %v2206
  %vm2213 = vweird.f32 %v2207
  %vm2214 = vmor %vm2212, %vm2213
  %v2215 = vsel %vm2214, %v2207, %v2211
  %v2216 = vand.u32 2147483647, %v2206
  %vm2217 = vcmp.eq.f32.partialorder %v2216, 8.507059e+37
  %v2218 = vand.u32 %v2206, 2147483648
  %v2219 = vor.u32 1.1754944e-38, %v2218
  %v2220 = vsel %vm2217, %v2219, %v2215
  %v2221 = vmul.f32 %v2196, %v2220
  %v2222 = vmin.f32 %v2221, 1.0
  %v2223 = vmax.f32 %v2222, -1.0
  %v2224 = vadd.f32 %v2183, 1.0
  %v2225 = vadd.f32 %v2223, 1.0
  %v2226 = vmul.f32 %v2140, %v2224
  %v2227 = vmul.f32 %v2141, %v2225
  %v2228 = vld [vmem:[%s2 + $0x5] sm:$0x1]
  %v2229 = vld [vmem:[%s3 + $0x5] sm:$0x1]
  %v2230 = vsel %vm42, %v2226, 0.0
  %2231 = vadd.xlane.f32.xlu0 %v2230
  %v2232 = vpop.xlane.xlu0 %2231
  %v2233 = vsel %vm42, %v2227, 0.0
  %2234 = vadd.xlane.f32.xlu0 %v2233
  %v2235 = vpop.xlane.xlu0 %2234
  %v2236 = vmul.f32 %v2232, %v55
  %v2237 = vmul.f32 %v2235, %v55
  %v2238 = vsub.f32 %v2226, %v2236
  %v2239 = vsub.f32 %v2227, %v2237
  %v2240 = vmul.f32 %v2238, %v2238
  %v2241 = vmul.f32 %v2239, %v2239
  %v2242 = vsel %vm42, %v2240, 0.0
  %2243 = vadd.xlane.f32.xlu0 %v2242
  %v2244 = vpop.xlane.xlu0 %2243
  %v2245 = vsel %vm42, %v2241, 0.0
  %2246 = vadd.xlane.f32.xlu0 %v2245
  %v2247 = vpop.xlane.xlu0 %2246
  %v2248 = vmul.f32 %v2244, %v55
  %v2249 = vmul.f32 %v2247, %v55
  %v2250 = vadd.f32 %v2248, 1e-12
  %v2251 = vadd.f32 %v2249, 1e-12
  %v2252 = vrsqrt.pop %v2250
  %v2253 = vmul.f32 %v2252, %v2250
  %v2254 = vmul.f32 %v2253, %v2252
  %v2255 = vmul.f32 0.5, %v2254
  %v2256 = vsub.f32 1.5, %v2255
  %v2257 = vmul.f32 %v2252, %v2256
  %vm2258 = vweird.f32 %v2250
  %vm2259 = vweird.f32 %v2252
  %vm2260 = vmor %vm2258, %vm2259
  %v2261 = vsel %vm2260, %v2252, %v2257
  %v2262 = vrsqrt.pop %v2251
  %v2263 = vmul.f32 %v2262, %v2251
  %v2264 = vmul.f32 %v2263, %v2262
  %v2265 = vmul.f32 0.5, %v2264
  %v2266 = vsub.f32 1.5, %v2265
  %v2267 = vmul.f32 %v2262, %v2266
  %vm2268 = vweird.f32 %v2251
  %vm2269 = vweird.f32 %v2262
  %vm2270 = vmor %vm2268, %vm2269
  %v2271 = vsel %vm2270, %v2262, %v2267
  %v2272 = vmul.f32 %v2238, %v2261
  %v2273 = vmul.f32 %v2239, %v2271
  %v2274 = vperm.slane %v2228, 0
  %v2275 = vmul.f32 %v2272, %v2274
  %v2276 = vmul.f32 %v2273, %v2274
  %v2277 = vperm.slane %v2229, 0
  %v2278 = vadd.f32 %v2275, %v2277
  %v2279 = vadd.f32 %v2276, %v2277
  %v2281 = vperm.slane %v1981, 0
  %v2284 = vsel %vm42, %v2278, 0
  %v2287 = vsel %vm42, %v2279, 0
  %2289 = vmatpush.msra.mxu0 0.0
  %2290 = vmatpush.msra.mxu0 0.0
  %2291 = vmatpush.msra.mxu0 0.0
  %2292 = vmatpush.msra.mxu0 0.0
  %2293 = vmatpush.msra.mxu0 0.0
  %2294 = vmatpush.msra.mxu0 0.0
  %2295 = vmatpush.msra.mxu0 0.0
  %2296 = vmatpush.msra.mxu0 0.0
  %2297 = vmatpush.msra.mxu0 0.0
  %2298 = vmatpush.msra.mxu0 0.0
  %2299 = vmatpush.msra.mxu0 0.0
  %2300 = vmatpush.msra.mxu0 0.0
  %2301 = vmatpush.msra.mxu0 %v1976
  %2302 = vmatpush.msra.mxu0 %v1975
  %2303 = vmatpush.msra.mxu0 %v1974
  %2304 = vmatpush.msra.mxu0 %v1973
  %2305 = vmatmul.f32.gmra.mxu0 %v2284
  %v2306 = vpop.f32.mrf.mxu0
  %v2307 = vadd.f32 %v2281, %v2306
  %2308 = vmatmul.f32.gmra.mxu0 %v2287
  %v2309 = vpop.f32.mrf.mxu0
  %v2310 = vadd.f32 %v2281, %v2309
  %2311 = vdwg.mxu0
  %v2312 = vld [vmem:[%s10] sm:$0x3]
  %v2313 = vrot.slane %v2307, 4
  %v2314 = vmax.f32 %v2307, %v2313
  %v2315 = vrot.slane %v2314, 2
  %v2316 = vmax.f32 %v2314, %v2315
  %v2317 = vrot.slane %v2316, 1
  %v2318 = vmax.f32 %v2316, %v2317
  %v2319 = vrot.slane %v2310, 4
  %v2320 = vmax.f32 %v2310, %v2319
  %v2321 = vrot.slane %v2320, 2
  %v2322 = vmax.f32 %v2320, %v2321
  %v2323 = vrot.slane %v2322, 1
  %v2324 = vmax.f32 %v2322, %v2323
  %v2325 = vsub.f32 %v2307, %v2318
  %v2326 = vsub.f32 %v2310, %v2324
  %v2327 = vmul.f32 %v2325, 1.442695
  %v2328 = vpow.pop %v2327
  %v2329 = vmul.f32 %v2326, 1.442695
  %v2330 = vpow.pop %v2329
  %v2331 = vrot.slane %v2328, 4
  %v2332 = vadd.f32 %v2328, %v2331
  %v2333 = vrot.slane %v2332, 2
  %v2334 = vadd.f32 %v2332, %v2333
  %v2335 = vrot.slane %v2334, 1
  %v2336 = vadd.f32 %v2334, %v2335
  %v2337 = vrot.slane %v2330, 4
  %v2338 = vadd.f32 %v2330, %v2337
  %v2339 = vrot.slane %v2338, 2
  %v2340 = vadd.f32 %v2338, %v2339
  %v2341 = vrot.slane %v2340, 1
  %v2342 = vadd.f32 %v2340, %v2341
  %v2343 = vlog2.pop %v2336
  %v2344 = vmul.f32 %v2343, 0.6931472
  %v2345 = vlog2.pop %v2342
  %v2346 = vmul.f32 %v2345, 0.6931472
  %v2347 = vadd.f32 %v2344, %v2318
  %v2348 = vadd.f32 %v2346, %v2324
  %v2349 = vlaneseq
  %v2350 = vshrl.u32 %v2349, 7
  %v2351 = vrot.slane %v2312, 1
  %v2352 = vrot.slane %v2312, 2
  %v2353 = vrot.slane %v2312, 3
  %v2354 = vsel %vm1986, %v2312, %v2351
  %vm2355 = vcmask 1042434
  %v2356 = vsel %vm2355, %v2352, %v2353
  %v2357 = vsel %vm2088, %v2354, %v2356
  %vm2358 = vcmask 1041409
  %v2359 = vsel %vm2358, %v2312, %v2351
  %vm2360 = vcmask 1043459
  %v2361 = vsel %vm2360, %v2352, %v2353
  %vm2362 = vcmask 1042433
  %v2363 = vsel %vm2362, %v2359, %v2361
  %v2364 = vrot.slane %v2363, 1
  %v2365 = vperm.slane %v2357, 0
  %v2366 = vperm.slane %v2364, 0
  %vm2367 = vcmp.eq.s32.totalorder %v2350, %v2365
  %vm2368 = vcmp.eq.s32.totalorder %v2350, %v2366
  %v2369 = vsel %vm2367, 1, 0
  %v2370 = vsel %vm2368, 1, 0
  %v2371 = vcvt.s32.f32 %v2369
  %v2372 = vcvt.s32.f32 %v2370
  %v2373 = vmul.f32 %v2307, %v2371
  %v2374 = vmul.f32 %v2310, %v2372
  %v2375 = vrot.slane %v2373, 4
  %v2376 = vadd.f32 %v2373, %v2375
  %v2377 = vrot.slane %v2376, 2
  %v2378 = vadd.f32 %v2376, %v2377
  %v2379 = vrot.slane %v2378, 1
  %v2380 = vadd.f32 %v2378, %v2379
  %v2381 = vrot.slane %v2374, 4
  %v2382 = vadd.f32 %v2374, %v2381
  %v2383 = vrot.slane %v2382, 2
  %v2384 = vadd.f32 %v2382, %v2383
  %v2385 = vrot.slane %v2384, 1
  %v2386 = vadd.f32 %v2384, %v2385
  %v2387 = vsub.f32 %v2347, %v2380
  %v2388 = vsub.f32 %v2348, %v2386
  %2389 = vadd.xlane.f32.xlu0 %v2387
  %v2390 = vpop.xlane.xlu0 %2389
  %2391 = vadd.xlane.f32.xlu0 %v2388
  %v2392 = vpop.xlane.xlu0 %2391
  %v2393 = vadd.f32 %v2390, %v2392
  %v2394 = vmul.f32 %v2393, 0.00390625
  %vm2395 = vcmask 7168
  %v2396 = vsel %vm2395, %v2096, %v2394
  %vm2397 = vcmask 8192
  %2398 = vst.msk [vmem:[%s11] sm:$0x1] %vm2397, %v2396
  // Predicated region
  $region46: #{forward.1} parent=0 // pred_check
    _
  $region47: #{forward.1} parent=0 // pred_check_branch
    %2400 = sbr.rel (0) target = $region49
  $region48: #{forward.1} parent=0 // pred_region
    _
  $region49: #{forward.1} parent=0 // pred_fallthru
    _
  // Predicated region
  $region50: #{forward.1} parent=0 // pred_check
    _
  $region51: #{forward.1} parent=0 // pred_check_branch
    %2402 = sbr.rel (0) target = $region53
  $region52: #{forward.1} parent=0 // pred_region
    _
  $region53: #{forward.1} parent=0 // pred_fallthru
    _

</llo_original>
